<compile_context>
chip_gen: v7x
topology: tpu7x:2x2x1
jax: 0.10.0
libtpu: 0.0.40
codegen_flags: <defaults>
</compile_context>

<pallas_src>
import jax
import jax.numpy as jnp
from jax.experimental import pallas as pl
from jax.experimental.pallas import tpu as pltpu

OC = 8                         # conv channels (8 * ni, ni = 1)
KH = KW = 3                    # conv2 kernel
H, W = 40, 4                   # spatial size implied by classifier in_features = 8*40*4
HW = H * W                     # 160 rows per sample
NB = 8                         # samples per grid step -> T = NB*HW = 1280 lanes (10 * 128)
T = NB * HW
CENTER = (KH // 2) * KW + (KW // 2)   # tap index 4 == un-shifted input (the residual)


def resnet_kernel(xpt_ref, mkt_ref, w1_ref, b1_ref, w2t_ref, b2_ref,
                  wct_ref, gsel_ref, bc_ref, out_ref):
    w1 = w1_ref[...]                                   # (8, 1)
    b1 = b1_ref[...]                                   # (8, 1)

    # conv1 (1x1) + ReLU evaluated per tap of the im2col patch matrix.  The
    # validity mask zeroes taps that fall in conv2's zero-padded border so
    # relu(b1) never leaks into the padding.  p rows are ordered j*8 + c.
    slabs = []
    x_center = None
    for j in range(KH * KW):
        xj = xpt_ref[j:j + 1, :]                       # (1, T) static ref slice
        if j == CENTER:
            x_center = xj                              # raw input, used for the residual
        a = jnp.maximum(xj * w1 + b1, 0.0)             # (8, T)
        slabs.append(a * mkt_ref[j:j + 1, :])
    p = jnp.concatenate(slabs, axis=0)                 # (72, T)

    # conv2 (3x3, pad=1) as a single lane-dense matmul + bias + ReLU.
    h = jnp.dot(w2t_ref[...], p, preferred_element_type=jnp.float32)   # (8, T)
    h = jnp.maximum(h + b2_ref[...], 0.0)

    # residual: add the single-channel input, broadcast over the 8 channels.
    h = h + x_center

    # classifier (Linear 1280 -> 1): elementwise product with the per-tile
    # classifier weights, per-sample segment reduction via a small (T, NB)
    # selector matmul, then a sublane (channel) sum.
    z = h * wct_ref[...]                                               # (8, T)
    y = jnp.dot(z, gsel_ref[...], preferred_element_type=jnp.float32)  # (8, NB)
    s = jnp.sum(y, axis=0, keepdims=True) + bc_ref[0, 0]               # (1, NB)
    out_ref[...] = s[None, :, :]                                       # (1, 1, NB)


def resnet_forward(x, params):
    """x: (N, 1, H, W) NCHW float.  Returns (N, 1) float32."""
    w1, b1, w2, b2, wc, bc = params
    N, Cin, h_, w_ = x.shape
    assert Cin == 1 and h_ == H and w_ == W

    npad = (-N) % NB
    npd = N + npad
    G = npd // NB
    Rpad = npd * HW

    xf = x.astype(jnp.float32)[:, 0]                       # (N, H, W)
    if npad:
        xf = jnp.concatenate([xf, jnp.zeros((npad, H, W), jnp.float32)], axis=0)

    # ---- glue: im2col of the raw single-channel input, lane-dense (9, Rpad) ----
    xpad = jnp.pad(xf, ((0, 0), (1, 1), (1, 1)))
    xpT = jnp.stack(
        [xpad[:, kh:kh + H, kw:kw + W].reshape(Rpad)
         for kh in range(KH) for kw in range(KW)], axis=0)  # (9, Rpad)

    # validity mask of one sample, tiled over the NB samples of a tile (resident)
    mpad = jnp.pad(jnp.ones((H, W), jnp.float32), ((1, 1), (1, 1)))
    mk1 = jnp.stack(
        [mpad[kh:kh + H, kw:kw + W].reshape(HW)
         for kh in range(KH) for kw in range(KW)], axis=0)  # (9, HW)
    mkT = jnp.tile(mk1, (1, NB))                            # (9, T)

    # ---- glue: parameter re-layout (tiny, all resident across grid steps) ----
    w1c = w1.reshape(OC, 1)                                           # (8, 1)
    b1c = b1.reshape(OC, 1)                                           # (8, 1)
    w2T = jnp.transpose(w2, (0, 2, 3, 1)).reshape(OC, KH * KW * OC)   # (8, 72)
    b2c = b2.reshape(OC, 1)                                           # (8, 1)
    wcT = jnp.tile(wc.reshape(OC, HW), (1, NB))                       # (8, T), NCHW flatten order
    gsel = jnp.repeat(jnp.eye(NB, dtype=jnp.float32), HW, axis=0)     # (T, NB) per-tile segment sums
    bc2 = bc.reshape(1, 1)                                            # scalar -> SMEM

    out3 = pl.pallas_call(
        resnet_kernel,
        out_shape=jax.ShapeDtypeStruct((G, 1, NB), jnp.float32),
        grid=(G,),
        in_specs=[
            pl.BlockSpec((KH * KW, T), lambda i: (0, i)),        # xpT: streamed row tiles
            pl.BlockSpec((KH * KW, T), lambda i: (0, 0)),        # mask: resident
            pl.BlockSpec((OC, 1), lambda i: (0, 0)),             # w1
            pl.BlockSpec((OC, 1), lambda i: (0, 0)),             # b1
            pl.BlockSpec((OC, KH * KW * OC), lambda i: (0, 0)),  # w2 (re-laid-out)
            pl.BlockSpec((OC, 1), lambda i: (0, 0)),             # b2
            pl.BlockSpec((OC, T), lambda i: (0, 0)),             # classifier weights: resident
            pl.BlockSpec((T, NB), lambda i: (0, 0)),             # per-tile segment selector: resident
            pl.BlockSpec(memory_space=pltpu.MemorySpace.SMEM),   # classifier bias scalar
        ],
        out_specs=pl.BlockSpec((1, 1, NB), lambda i: (i, 0, 0)),
        compiler_params=pltpu.CompilerParams(
            dimension_semantics=("parallel",)),                  # v7x: shard tiles over both TCs
    )(xpT, mkT, w1c, b1c, w2T, b2c, wcT, gsel, bc2)

    return out3.reshape(npd, 1)[:N]


def resnet_reference(x, params):
    """Pure-JAX reference mirroring the PyTorch forward exactly."""
    w1, b1, w2, b2, wc, bc = params
    xf = x.astype(jnp.float32)
    dn = ('NCHW', 'OIHW', 'NCHW')
    o = jax.lax.conv_general_dilated(xf, w1, (1, 1), 'VALID', dimension_numbers=dn)
    o = jax.nn.relu(o + b1[None, :, None, None])
    o = jax.lax.conv_general_dilated(o, w2, (1, 1), ((1, 1), (1, 1)), dimension_numbers=dn)
    o = jax.nn.relu(o + b2[None, :, None, None])
    o = o + xf                                   # broadcast over channels
    flat = o.reshape(x.shape[0], -1)
    return flat @ wc.T + bc


def init_params(key):
    ks = jax.random.split(key, 6)
    w1 = jax.random.normal(ks[0], (OC, 1, 1, 1), jnp.float32) * 0.5     # conv1.weight
    b1 = jax.random.normal(ks[1], (OC,), jnp.float32) * 0.1             # conv1.bias
    w2 = jax.random.normal(ks[2], (OC, OC, KH, KW), jnp.float32) * 0.1  # conv2.weight
    b2 = jax.random.normal(ks[3], (OC,), jnp.float32) * 0.1             # conv2.bias
    wc = jax.random.normal(ks[4], (1, OC * H * W), jnp.float32) * 0.05  # classifier.weight
    bc = jax.random.normal(ks[5], (1,), jnp.float32) * 0.1              # classifier.bias
    return (w1, b1, w2, b2, wc, bc)


if __name__ == "__main__":
    key = jax.random.PRNGKey(0)
    kx, kp = jax.random.split(key)
    x = jax.random.normal(kx, (2, 1, H, W), jnp.float32)   # batch=2, NCHW
    params = init_params(kp)

    y = jax.block_until_ready(jax.jit(resnet_forward)(x, params))
    y_ref = resnet_reference(x, params)

    assert y.shape == (2, 1)
    assert jnp.allclose(y, y_ref, atol=1e-4, rtol=1e-4), (y, y_ref)
    print("KERNEL_OK")
</pallas_src>

<mosaic_0001>
module attributes {stable_mosaic.version = 11 : i64} {
  func.func @resnet_kernel(%arg0: i32, %arg1: memref<9x1280xf32, #tpu.memory_space<vmem>>, %arg2: memref<9x1280xf32, #tpu.memory_space<vmem>>, %arg3: memref<8x1xf32, #tpu.memory_space<vmem>>, %arg4: memref<8x1xf32, #tpu.memory_space<vmem>>, %arg5: memref<8x72xf32, #tpu.memory_space<vmem>>, %arg6: memref<8x1xf32, #tpu.memory_space<vmem>>, %arg7: memref<8x1280xf32, #tpu.memory_space<vmem>>, %arg8: memref<1280x8xf32, #tpu.memory_space<vmem>>, %arg9: memref<1x1xf32, #tpu.memory_space<smem>>, %arg10: memref<1x1x8xf32, #tpu.memory_space<vmem>>) attributes {dimension_semantics = [#tpu.dimension_semantics<parallel>], iteration_bounds = array<i64: 1>, scalar_prefetch = 0 : i64, scratch_operands = 0 : i64, tpu.core_type = #tpu.core_type<tc>, window_params = [{transform_indices = @transform_0, window_bounds = array<i64: 9, 1280>}, {pipeline_mode = #tpu.pipeline_mode<synchronous>, transform_indices = @transform_1, window_bounds = array<i64: 9, 1280>}, {pipeline_mode = #tpu.pipeline_mode<synchronous>, transform_indices = @transform_2, window_bounds = array<i64: 8, 1>}, {pipeline_mode = #tpu.pipeline_mode<synchronous>, transform_indices = @transform_3, window_bounds = array<i64: 8, 1>}, {pipeline_mode = #tpu.pipeline_mode<synchronous>, transform_indices = @transform_4, window_bounds = array<i64: 8, 72>}, {pipeline_mode = #tpu.pipeline_mode<synchronous>, transform_indices = @transform_5, window_bounds = array<i64: 8, 1>}, {pipeline_mode = #tpu.pipeline_mode<synchronous>, transform_indices = @transform_6, window_bounds = array<i64: 8, 1280>}, {pipeline_mode = #tpu.pipeline_mode<synchronous>, transform_indices = @transform_7, window_bounds = array<i64: 1280, 8>}, {transform_indices = @transform_8, window_bounds = array<i64: 1, 1>}, {transform_indices = @transform_9, window_bounds = array<i64: 1, 1, 8>}]} {
    %c0 = arith.constant 0 : index
    %c0_0 = arith.constant 0 : index
    %0 = vector.load %arg3[%c0, %c0_0] : memref<8x1xf32, #tpu.memory_space<vmem>>, vector<8x1xf32>
    %c0_1 = arith.constant 0 : index
    %c0_2 = arith.constant 0 : index
    %1 = vector.load %arg4[%c0_1, %c0_2] : memref<8x1xf32, #tpu.memory_space<vmem>>, vector<8x1xf32>
    %c0_3 = arith.constant 0 : index
    %c0_4 = arith.constant 0 : index
    %2 = vector.load %arg1[%c0_3, %c0_4] : memref<9x1280xf32, #tpu.memory_space<vmem>>, vector<1x1280xf32>
    %3 = vector.broadcast %2 : vector<1x1280xf32> to vector<8x1280xf32>
    %4 = vector.broadcast %0 : vector<8x1xf32> to vector<8x1280xf32>
    %5 = arith.mulf %3, %4 : vector<8x1280xf32>
    %6 = vector.broadcast %1 : vector<8x1xf32> to vector<8x1280xf32>
    %7 = arith.addf %5, %6 : vector<8x1280xf32>
    %cst = arith.constant 0.000000e+00 : f32
    %8 = vector.broadcast %cst : f32 to vector<8x1280xf32>
    %9 = arith.maximumf %7, %8 : vector<8x1280xf32>
    %c0_5 = arith.constant 0 : index
    %c0_6 = arith.constant 0 : index
    %10 = vector.load %arg2[%c0_5, %c0_6] : memref<9x1280xf32, #tpu.memory_space<vmem>>, vector<1x1280xf32>
    %11 = vector.broadcast %10 : vector<1x1280xf32> to vector<8x1280xf32>
    %12 = arith.mulf %9, %11 : vector<8x1280xf32>
    %c1 = arith.constant 1 : index
    %c0_7 = arith.constant 0 : index
    %13 = vector.load %arg1[%c1, %c0_7] : memref<9x1280xf32, #tpu.memory_space<vmem>>, vector<1x1280xf32>
    %14 = vector.broadcast %13 : vector<1x1280xf32> to vector<8x1280xf32>
    %15 = vector.broadcast %0 : vector<8x1xf32> to vector<8x1280xf32>
    %16 = arith.mulf %14, %15 : vector<8x1280xf32>
    %17 = vector.broadcast %1 : vector<8x1xf32> to vector<8x1280xf32>
    %18 = arith.addf %16, %17 : vector<8x1280xf32>
    %cst_8 = arith.constant 0.000000e+00 : f32
    %19 = vector.broadcast %cst_8 : f32 to vector<8x1280xf32>
    %20 = arith.maximumf %18, %19 : vector<8x1280xf32>
    %c1_9 = arith.constant 1 : index
    %c0_10 = arith.constant 0 : index
    %21 = vector.load %arg2[%c1_9, %c0_10] : memref<9x1280xf32, #tpu.memory_space<vmem>>, vector<1x1280xf32>
    %22 = vector.broadcast %21 : vector<1x1280xf32> to vector<8x1280xf32>
    %23 = arith.mulf %20, %22 : vector<8x1280xf32>
    %c2 = arith.constant 2 : index
    %c0_11 = arith.constant 0 : index
    %24 = vector.load %arg1[%c2, %c0_11] : memref<9x1280xf32, #tpu.memory_space<vmem>>, vector<1x1280xf32>
    %25 = vector.broadcast %24 : vector<1x1280xf32> to vector<8x1280xf32>
    %26 = vector.broadcast %0 : vector<8x1xf32> to vector<8x1280xf32>
    %27 = arith.mulf %25, %26 : vector<8x1280xf32>
    %28 = vector.broadcast %1 : vector<8x1xf32> to vector<8x1280xf32>
    %29 = arith.addf %27, %28 : vector<8x1280xf32>
    %cst_12 = arith.constant 0.000000e+00 : f32
    %30 = vector.broadcast %cst_12 : f32 to vector<8x1280xf32>
    %31 = arith.maximumf %29, %30 : vector<8x1280xf32>
    %c2_13 = arith.constant 2 : index
    %c0_14 = arith.constant 0 : index
    %32 = vector.load %arg2[%c2_13, %c0_14] : memref<9x1280xf32, #tpu.memory_space<vmem>>, vector<1x1280xf32>
    %33 = vector.broadcast %32 : vector<1x1280xf32> to vector<8x1280xf32>
    %34 = arith.mulf %31, %33 : vector<8x1280xf32>
    %c3 = arith.constant 3 : index
    %c0_15 = arith.constant 0 : index
    %35 = vector.load %arg1[%c3, %c0_15] : memref<9x1280xf32, #tpu.memory_space<vmem>>, vector<1x1280xf32>
    %36 = vector.broadcast %35 : vector<1x1280xf32> to vector<8x1280xf32>
    %37 = vector.broadcast %0 : vector<8x1xf32> to vector<8x1280xf32>
    %38 = arith.mulf %36, %37 : vector<8x1280xf32>
    %39 = vector.broadcast %1 : vector<8x1xf32> to vector<8x1280xf32>
    %40 = arith.addf %38, %39 : vector<8x1280xf32>
    %cst_16 = arith.constant 0.000000e+00 : f32
    %41 = vector.broadcast %cst_16 : f32 to vector<8x1280xf32>
    %42 = arith.maximumf %40, %41 : vector<8x1280xf32>
    %c3_17 = arith.constant 3 : index
    %c0_18 = arith.constant 0 : index
    %43 = vector.load %arg2[%c3_17, %c0_18] : memref<9x1280xf32, #tpu.memory_space<vmem>>, vector<1x1280xf32>
    %44 = vector.broadcast %43 : vector<1x1280xf32> to vector<8x1280xf32>
    %45 = arith.mulf %42, %44 : vector<8x1280xf32>
    %c4 = arith.constant 4 : index
    %c0_19 = arith.constant 0 : index
    %46 = vector.load %arg1[%c4, %c0_19] : memref<9x1280xf32, #tpu.memory_space<vmem>>, vector<1x1280xf32>
    %47 = vector.broadcast %46 : vector<1x1280xf32> to vector<8x1280xf32>
    %48 = vector.broadcast %0 : vector<8x1xf32> to vector<8x1280xf32>
    %49 = arith.mulf %47, %48 : vector<8x1280xf32>
    %50 = vector.broadcast %1 : vector<8x1xf32> to vector<8x1280xf32>
    %51 = arith.addf %49, %50 : vector<8x1280xf32>
    %cst_20 = arith.constant 0.000000e+00 : f32
    %52 = vector.broadcast %cst_20 : f32 to vector<8x1280xf32>
    %53 = arith.maximumf %51, %52 : vector<8x1280xf32>
    %c4_21 = arith.constant 4 : index
    %c0_22 = arith.constant 0 : index
    %54 = vector.load %arg2[%c4_21, %c0_22] : memref<9x1280xf32, #tpu.memory_space<vmem>>, vector<1x1280xf32>
    %55 = vector.broadcast %54 : vector<1x1280xf32> to vector<8x1280xf32>
    %56 = arith.mulf %53, %55 : vector<8x1280xf32>
    %c5 = arith.constant 5 : index
    %c0_23 = arith.constant 0 : index
    %57 = vector.load %arg1[%c5, %c0_23] : memref<9x1280xf32, #tpu.memory_space<vmem>>, vector<1x1280xf32>
    %58 = vector.broadcast %57 : vector<1x1280xf32> to vector<8x1280xf32>
    %59 = vector.broadcast %0 : vector<8x1xf32> to vector<8x1280xf32>
    %60 = arith.mulf %58, %59 : vector<8x1280xf32>
    %61 = vector.broadcast %1 : vector<8x1xf32> to vector<8x1280xf32>
    %62 = arith.addf %60, %61 : vector<8x1280xf32>
    %cst_24 = arith.constant 0.000000e+00 : f32
    %63 = vector.broadcast %cst_24 : f32 to vector<8x1280xf32>
    %64 = arith.maximumf %62, %63 : vector<8x1280xf32>
    %c5_25 = arith.constant 5 : index
    %c0_26 = arith.constant 0 : index
    %65 = vector.load %arg2[%c5_25, %c0_26] : memref<9x1280xf32, #tpu.memory_space<vmem>>, vector<1x1280xf32>
    %66 = vector.broadcast %65 : vector<1x1280xf32> to vector<8x1280xf32>
    %67 = arith.mulf %64, %66 : vector<8x1280xf32>
    %c6 = arith.constant 6 : index
    %c0_27 = arith.constant 0 : index
    %68 = vector.load %arg1[%c6, %c0_27] : memref<9x1280xf32, #tpu.memory_space<vmem>>, vector<1x1280xf32>
    %69 = vector.broadcast %68 : vector<1x1280xf32> to vector<8x1280xf32>
    %70 = vector.broadcast %0 : vector<8x1xf32> to vector<8x1280xf32>
    %71 = arith.mulf %69, %70 : vector<8x1280xf32>
    %72 = vector.broadcast %1 : vector<8x1xf32> to vector<8x1280xf32>
    %73 = arith.addf %71, %72 : vector<8x1280xf32>
    %cst_28 = arith.constant 0.000000e+00 : f32
    %74 = vector.broadcast %cst_28 : f32 to vector<8x1280xf32>
    %75 = arith.maximumf %73, %74 : vector<8x1280xf32>
    %c6_29 = arith.constant 6 : index
    %c0_30 = arith.constant 0 : index
    %76 = vector.load %arg2[%c6_29, %c0_30] : memref<9x1280xf32, #tpu.memory_space<vmem>>, vector<1x1280xf32>
    %77 = vector.broadcast %76 : vector<1x1280xf32> to vector<8x1280xf32>
    %78 = arith.mulf %75, %77 : vector<8x1280xf32>
    %c7 = arith.constant 7 : index
    %c0_31 = arith.constant 0 : index
    %79 = vector.load %arg1[%c7, %c0_31] : memref<9x1280xf32, #tpu.memory_space<vmem>>, vector<1x1280xf32>
    %80 = vector.broadcast %79 : vector<1x1280xf32> to vector<8x1280xf32>
    %81 = vector.broadcast %0 : vector<8x1xf32> to vector<8x1280xf32>
    %82 = arith.mulf %80, %81 : vector<8x1280xf32>
    %83 = vector.broadcast %1 : vector<8x1xf32> to vector<8x1280xf32>
    %84 = arith.addf %82, %83 : vector<8x1280xf32>
    %cst_32 = arith.constant 0.000000e+00 : f32
    %85 = vector.broadcast %cst_32 : f32 to vector<8x1280xf32>
    %86 = arith.maximumf %84, %85 : vector<8x1280xf32>
    %c7_33 = arith.constant 7 : index
    %c0_34 = arith.constant 0 : index
    %87 = vector.load %arg2[%c7_33, %c0_34] : memref<9x1280xf32, #tpu.memory_space<vmem>>, vector<1x1280xf32>
    %88 = vector.broadcast %87 : vector<1x1280xf32> to vector<8x1280xf32>
    %89 = arith.mulf %86, %88 : vector<8x1280xf32>
    %c8 = arith.constant 8 : index
    %c0_35 = arith.constant 0 : index
    %90 = vector.load %arg1[%c8, %c0_35] : memref<9x1280xf32, #tpu.memory_space<vmem>>, vector<1x1280xf32>
    %91 = vector.broadcast %90 : vector<1x1280xf32> to vector<8x1280xf32>
    %92 = vector.broadcast %0 : vector<8x1xf32> to vector<8x1280xf32>
    %93 = arith.mulf %91, %92 : vector<8x1280xf32>
    %94 = vector.broadcast %1 : vector<8x1xf32> to vector<8x1280xf32>
    %95 = arith.addf %93, %94 : vector<8x1280xf32>
    %cst_36 = arith.constant 0.000000e+00 : f32
    %96 = vector.broadcast %cst_36 : f32 to vector<8x1280xf32>
    %97 = arith.maximumf %95, %96 : vector<8x1280xf32>
    %c8_37 = arith.constant 8 : index
    %c0_38 = arith.constant 0 : index
    %98 = vector.load %arg2[%c8_37, %c0_38] : memref<9x1280xf32, #tpu.memory_space<vmem>>, vector<1x1280xf32>
    %99 = vector.broadcast %98 : vector<1x1280xf32> to vector<8x1280xf32>
    %100 = arith.mulf %97, %99 : vector<8x1280xf32>
    %101 = tpu.concatenate %12, %23, %34, %45, %56, %67, %78, %89, %100 in 0 : vector<8x1280xf32>, vector<8x1280xf32>, vector<8x1280xf32>, vector<8x1280xf32>, vector<8x1280xf32>, vector<8x1280xf32>, vector<8x1280xf32>, vector<8x1280xf32>, vector<8x1280xf32> -> vector<72x1280xf32>
    %c0_39 = arith.constant 0 : index
    %c0_40 = arith.constant 0 : index
    %102 = vector.load %arg5[%c0_39, %c0_40] : memref<8x72xf32, #tpu.memory_space<vmem>>, vector<8x72xf32>
    %cst_41 = arith.constant dense<0.000000e+00> : vector<8x1280xf32>
    %103 = tpu.matmul %102, %101, %cst_41 {dimension_numbers = #tpu.dot_dimension_numbers<[1], [0], [0], [1], [0, 0, 1, 1], [], []>} : vector<8x72xf32>, vector<72x1280xf32>, vector<8x1280xf32> -> vector<8x1280xf32>
    %c0_42 = arith.constant 0 : index
    %c0_43 = arith.constant 0 : index
    %104 = vector.load %arg6[%c0_42, %c0_43] : memref<8x1xf32, #tpu.memory_space<vmem>>, vector<8x1xf32>
    %105 = vector.broadcast %104 : vector<8x1xf32> to vector<8x1280xf32>
    %106 = arith.addf %103, %105 : vector<8x1280xf32>
    %cst_44 = arith.constant 0.000000e+00 : f32
    %107 = vector.broadcast %cst_44 : f32 to vector<8x1280xf32>
    %108 = arith.maximumf %106, %107 : vector<8x1280xf32>
    %109 = vector.broadcast %46 : vector<1x1280xf32> to vector<8x1280xf32>
    %110 = arith.addf %108, %109 : vector<8x1280xf32>
    %c0_45 = arith.constant 0 : index
    %c0_46 = arith.constant 0 : index
    %111 = vector.load %arg7[%c0_45, %c0_46] : memref<8x1280xf32, #tpu.memory_space<vmem>>, vector<8x1280xf32>
    %112 = arith.mulf %110, %111 : vector<8x1280xf32>
    %c0_47 = arith.constant 0 : index
    %c0_48 = arith.constant 0 : index
    %113 = vector.load %arg8[%c0_47, %c0_48] : memref<1280x8xf32, #tpu.memory_space<vmem>>, vector<1280x8xf32>
    %cst_49 = arith.constant dense<0.000000e+00> : vector<8x8xf32>
    %114 = tpu.matmul %112, %113, %cst_49 {dimension_numbers = #tpu.dot_dimension_numbers<[1], [0], [0], [1], [0, 0, 1, 1], [], []>} : vector<8x1280xf32>, vector<1280x8xf32>, vector<8x8xf32> -> vector<8x8xf32>
    %cst_50 = arith.constant dense<0.000000e+00> : vector<8xf32>
    %115 = vector.multi_reduction <add>, %114, %cst_50 [0] : vector<8x8xf32> to vector<8xf32>
    %116 = vector.shape_cast %115 : vector<8xf32> to vector<1x8xf32>
    %c0_51 = arith.constant 0 : index
    %c0_52 = arith.constant 0 : index
    %117 = memref.load %arg9[%c0_51, %c0_52] : memref<1x1xf32, #tpu.memory_space<smem>>
    %118 = vector.broadcast %117 : f32 to vector<1x8xf32>
    %119 = arith.addf %116, %118 : vector<1x8xf32>
    %120 = vector.shape_cast %119 : vector<1x8xf32> to vector<1x1x8xf32>
    %c0_53 = arith.constant 0 : index
    %c0_54 = arith.constant 0 : index
    %c0_55 = arith.constant 0 : index
    %121 = vector.load %arg10[%c0_53, %c0_54, %c0_55] : memref<1x1x8xf32, #tpu.memory_space<vmem>>, vector<1x1x8xf32>
    tpu.vector_store %arg10[%c0_53, %c0_54, %c0_55], %120 {strides = array<i32>} : memref<1x1x8xf32, #tpu.memory_space<vmem>>, vector<1x1x8xf32>,
    return
  }
  func.func @transform_0(%arg0: i32) -> (i32, i32) {
    %c0_i32 = arith.constant 0 : i32
    %c0_i32_0 = arith.constant 0 : i32
    return %c0_i32, %arg0 : i32, i32
  }
  func.func @transform_1(%arg0: i32) -> (i32, i32) {
    %c0_i32 = arith.constant 0 : i32
    %c0_i32_0 = arith.constant 0 : i32
    %c0_i32_1 = arith.constant 0 : i32
    return %c0_i32, %c0_i32_0 : i32, i32
  }
  func.func @transform_2(%arg0: i32) -> (i32, i32) {
    %c0_i32 = arith.constant 0 : i32
    %c0_i32_0 = arith.constant 0 : i32
    %c0_i32_1 = arith.constant 0 : i32
    return %c0_i32, %c0_i32_0 : i32, i32
  }
  func.func @transform_3(%arg0: i32) -> (i32, i32) {
    %c0_i32 = arith.constant 0 : i32
    %c0_i32_0 = arith.constant 0 : i32
    %c0_i32_1 = arith.constant 0 : i32
    return %c0_i32, %c0_i32_0 : i32, i32
  }
  func.func @transform_4(%arg0: i32) -> (i32, i32) {
    %c0_i32 = arith.constant 0 : i32
    %c0_i32_0 = arith.constant 0 : i32
    %c0_i32_1 = arith.constant 0 : i32
    return %c0_i32, %c0_i32_0 : i32, i32
  }
  func.func @transform_5(%arg0: i32) -> (i32, i32) {
    %c0_i32 = arith.constant 0 : i32
    %c0_i32_0 = arith.constant 0 : i32
    %c0_i32_1 = arith.constant 0 : i32
    return %c0_i32, %c0_i32_0 : i32, i32
  }
  func.func @transform_6(%arg0: i32) -> (i32, i32) {
    %c0_i32 = arith.constant 0 : i32
    %c0_i32_0 = arith.constant 0 : i32
    %c0_i32_1 = arith.constant 0 : i32
    return %c0_i32, %c0_i32_0 : i32, i32
  }
  func.func @transform_7(%arg0: i32) -> (i32, i32) {
    %c0_i32 = arith.constant 0 : i32
    %c0_i32_0 = arith.constant 0 : i32
    %c0_i32_1 = arith.constant 0 : i32
    return %c0_i32, %c0_i32_0 : i32, i32
  }
  func.func @transform_8(%arg0: i32) -> (i32, i32) {
    %c0_i32 = arith.constant 0 : i32
    %c0_i32_0 = arith.constant 0 : i32
    %c0_i32_1 = arith.constant 0 : i32
    return %c0_i32, %c0_i32_0 : i32, i32
  }
  func.func @transform_9(%arg0: i32) -> (i32, i32, i32) {
    %c0_i32 = arith.constant 0 : i32
    %c0_i32_0 = arith.constant 0 : i32
    %c0_i32_1 = arith.constant 0 : i32
    return %arg0, %c0_i32, %c0_i32_0 : i32, i32, i32
  }
}

</mosaic_0001>

<llo_original>
// kernel: tile.13
$region0: #{tile.13}
  %s0 = inlined_call_operand.vmem [shape: f32[9,8,160], index: 0, kind: input, shape index: {}]
  %s1 = inlined_call_operand.vmem [shape: f32[9,1280], index: 1, kind: output, shape index: {}]
  %s2 = scalar_lea.vmem %s0, 8
  %s3 = smov 3
  %v4 = vld [vmem:[%s2] ss:$4 sm:%s3]
  %vm5 = vcmask 261120
  %s6 = scalar_lea.vmem %s1, 8
  %7 = vst.msk [vmem:[%s6] ss:$40 sm:$0x3] %vm5, %v4
  %s8 = scalar_lea.vmem %s0, 24
  %s9 = smov 3
  %v10 = vld [vmem:[%s8] ss:$4 sm:%s9]
  %vm11 = vcmask 261120
  %s12 = scalar_lea.vmem %s1, 9
  %13 = vst.msk [vmem:[%s12] ss:$40 sm:$0x3] %vm11, %v10
  %s14 = scalar_lea.vmem %s0, 40
  %s15 = smov 3
  %v16 = vld [vmem:[%s14] ss:$4 sm:%s15]
  %vm17 = vcmask 261120
  %s18 = scalar_lea.vmem %s1, 10
  %19 = vst.msk [vmem:[%s18] ss:$40 sm:$0x3] %vm17, %v16
  %s20 = scalar_lea.vmem %s0, 56
  %s21 = smov 3
  %v22 = vld [vmem:[%s20] ss:$4 sm:%s21]
  %vm23 = vcmask 261120
  %s24 = scalar_lea.vmem %s1, 11
  %25 = vst.msk [vmem:[%s24] ss:$40 sm:$0x3] %vm23, %v22
  %s26 = scalar_lea.vmem %s0, 72
  %s27 = smov 3
  %v28 = vld [vmem:[%s26] ss:$4 sm:%s27]
  %vm29 = vcmask 261120
  %s30 = scalar_lea.vmem %s1, 12
  %31 = vst.msk [vmem:[%s30] ss:$40 sm:$0x3] %vm29, %v28
  %s32 = scalar_lea.vmem %s0, 88
  %s33 = smov 3
  %v34 = vld [vmem:[%s32] ss:$4 sm:%s33]
  %vm35 = vcmask 261120
  %s36 = scalar_lea.vmem %s1, 13
  %37 = vst.msk [vmem:[%s36] ss:$40 sm:$0x3] %vm35, %v34
  %s38 = scalar_lea.vmem %s0, 104
  %s39 = smov 3
  %v40 = vld [vmem:[%s38] ss:$4 sm:%s39]
  %vm41 = vcmask 261120
  %s42 = scalar_lea.vmem %s1, 14
  %43 = vst.msk [vmem:[%s42] ss:$40 sm:$0x3] %vm41, %v40
  %s44 = scalar_lea.vmem %s0, 120
  %s45 = smov 3
  %v46 = vld [vmem:[%s44] ss:$4 sm:%s45]
  %vm47 = vcmask 261120
  %s48 = scalar_lea.vmem %s1, 15
  %49 = vst.msk [vmem:[%s48] ss:$40 sm:$0x3] %vm47, %v46
  %s50 = scalar_lea.vmem %s0, 136
  %s51 = smov 3
  %v52 = vld [vmem:[%s50] ss:$4 sm:%s51]
  %vm53 = vcmask 261120
  %s54 = scalar_lea.vmem %s1, 88
  %55 = vst.msk [vmem:[%s54] ss:$40 sm:$0x3] %vm53, %v52
  %s56 = smov 3
  %v57 = vld [vmem:[%s0] ss:$4 sm:%s56]
  %58 = vst [vmem:[%s1] ss:$40 sm:$0x3] %v57
  %s59 = scalar_lea.vmem %s0, 16
  %s60 = smov 3
  %v61 = vld [vmem:[%s59] ss:$4 sm:%s60]
  %s62 = scalar_lea.vmem %s1, 1
  %63 = vst [vmem:[%s62] ss:$40 sm:$0x3] %v61
  %s64 = scalar_lea.vmem %s0, 32
  %s65 = smov 3
  %v66 = vld [vmem:[%s64] ss:$4 sm:%s65]
  %s67 = scalar_lea.vmem %s1, 2
  %68 = vst [vmem:[%s67] ss:$40 sm:$0x3] %v66
  %s69 = scalar_lea.vmem %s0, 48
  %s70 = smov 3
  %v71 = vld [vmem:[%s69] ss:$4 sm:%s70]
  %s72 = scalar_lea.vmem %s1, 3
  %73 = vst [vmem:[%s72] ss:$40 sm:$0x3] %v71
  %s74 = scalar_lea.vmem %s0, 64
  %s75 = smov 3
  %v76 = vld [vmem:[%s74] ss:$4 sm:%s75]
  %s77 = scalar_lea.vmem %s1, 4
  %78 = vst [vmem:[%s77] ss:$40 sm:$0x3] %v76
  %s79 = scalar_lea.vmem %s0, 80
  %s80 = smov 3
  %v81 = vld [vmem:[%s79] ss:$4 sm:%s80]
  %s82 = scalar_lea.vmem %s1, 5
  %83 = vst [vmem:[%s82] ss:$40 sm:$0x3] %v81
  %s84 = scalar_lea.vmem %s0, 96
  %s85 = smov 3
  %v86 = vld [vmem:[%s84] ss:$4 sm:%s85]
  %s87 = scalar_lea.vmem %s1, 6
  %88 = vst [vmem:[%s87] ss:$40 sm:$0x3] %v86
  %s89 = scalar_lea.vmem %s0, 112
  %s90 = smov 3
  %v91 = vld [vmem:[%s89] ss:$4 sm:%s90]
  %s92 = scalar_lea.vmem %s1, 7
  %93 = vst [vmem:[%s92] ss:$40 sm:$0x3] %v91
  %s94 = scalar_lea.vmem %s0, 128
  %s95 = smov 3
  %v96 = vld [vmem:[%s94] ss:$4 sm:%s95]
  %s97 = scalar_lea.vmem %s1, 80
  %98 = vst [vmem:[%s97] ss:$40 sm:$0x3] %v96
  %s99 = scalar_lea.vmem %s0, 3
  %s100 = smov 3
  %v101 = vld [vmem:[%s99] ss:$16 sm:%s100]
  %s102 = scalar_lea.vmem %s0, 3
  %s103 = smov 12
  %v104 = vld [vmem:[%s102] ss:$16 sm:%s103]
  %vm105 = vcmask 1043458
  %v106 = vsel %vm105, %v104, %v101
  %s107 = scalar_lea.vmem %s0, 3
  %s108 = smov 48
  %v109 = vld [vmem:[%s107] ss:$16 sm:%s108]
  %vm110 = vcmask 1045508
  %v111 = vsel %vm110, %v109, %v106
  %s112 = scalar_lea.vmem %s0, 3
  %s113 = smov 192
  %v114 = vld [vmem:[%s112] ss:$16 sm:%s113]
  %vm115 = vcmask 1047558
  %v116 = vsel %vm115, %v114, %v111
  %s117 = scalar_lea.vmem %s0, 7
  %s118 = smov 3
  %v119 = vld [vmem:[%s117] ss:$16 sm:%s118]
  %s120 = scalar_lea.vmem %s0, 7
  %s121 = smov 12
  %v122 = vld [vmem:[%s120] ss:$16 sm:%s121]
  %vm123 = vcmask 1043458
  %v124 = vsel %vm123, %v122, %v119
  %s125 = scalar_lea.vmem %s0, 7
  %s126 = smov 48
  %v127 = vld [vmem:[%s125] ss:$16 sm:%s126]
  %vm128 = vcmask 1045508
  %v129 = vsel %vm128, %v127, %v124
  %s130 = scalar_lea.vmem %s0, 7
  %s131 = smov 192
  %v132 = vld [vmem:[%s130] ss:$16 sm:%s131]
  %vm133 = vcmask 1047558
  %v134 = vsel %vm133, %v132, %v129
  %vm135 = vcmask 261120
  %v136 = vsel %vm135, %v134, %v116
  %137 = vrot.lane.b32.xlu0 %v136, 96
  %v138 = vpop.permute.xlu0 %137
  %vm139 = vcmask 785408
  %s140 = scalar_lea.vmem %s1, 32
  %141 = vst.msk [vmem:[%s140] sm:$0xff] %vm139, %v138
  %vm142 = vcmask 1048320
  %s143 = scalar_lea.vmem %s1, 64
  %144 = vst.msk [vmem:[%s143] sm:$0xff] %vm142, %v138
  %s145 = scalar_lea.vmem %s0, 7
  %s146 = smov 3
  %v147 = vld [vmem:[%s145] ss:$16 sm:%s146]
  %s148 = scalar_lea.vmem %s0, 7
  %s149 = smov 12
  %v150 = vld [vmem:[%s148] ss:$16 sm:%s149]
  %vm151 = vcmask 1043458
  %v152 = vsel %vm151, %v150, %v147
  %s153 = scalar_lea.vmem %s0, 7
  %s154 = smov 48
  %v155 = vld [vmem:[%s153] ss:$16 sm:%s154]
  %vm156 = vcmask 1045508
  %v157 = vsel %vm156, %v155, %v152
  %s158 = scalar_lea.vmem %s0, 7
  %s159 = smov 192
  %v160 = vld [vmem:[%s158] ss:$16 sm:%s159]
  %vm161 = vcmask 1047558
  %v162 = vsel %vm161, %v160, %v157
  %s163 = scalar_lea.vmem %s0, 11
  %s164 = smov 3
  %v165 = vld [vmem:[%s163] ss:$16 sm:%s164]
  %s166 = scalar_lea.vmem %s0, 11
  %s167 = smov 12
  %v168 = vld [vmem:[%s166] ss:$16 sm:%s167]
  %vm169 = vcmask 1043458
  %v170 = vsel %vm169, %v168, %v165
  %s171 = scalar_lea.vmem %s0, 11
  %s172 = smov 48
  %v173 = vld [vmem:[%s171] ss:$16 sm:%s172]
  %vm174 = vcmask 1045508
  %v175 = vsel %vm174, %v173, %v170
  %s176 = scalar_lea.vmem %s0, 11
  %s177 = smov 192
  %v178 = vld [vmem:[%s176] ss:$16 sm:%s177]
  %vm179 = vcmask 1047558
  %v180 = vsel %vm179, %v178, %v175
  %vm181 = vcmask 261120
  %v182 = vsel %vm181, %v180, %v162
  %183 = vrot.lane.b32.xlu0 %v182, 96
  %v184 = vpop.permute.xlu0 %183
  %vm185 = vcmask 785408
  %s186 = scalar_lea.vmem %s1, 72
  %187 = vst.msk [vmem:[%s186] sm:$0xff] %vm185, %v184
  %vm188 = vcmask 1048320
  %s189 = scalar_lea.vmem %s1, 32
  %190 = vst.msk [vmem:[%s189] sm:$0xff] %vm188, %v184
  %s191 = scalar_lea.vmem %s0, 131
  %s192 = smov 3
  %v193 = vld [vmem:[%s191] ss:$4 sm:%s192]
  %s194 = scalar_lea.vmem %s0, 15
  %s195 = smov 3
  %v196 = vld [vmem:[%s194] ss:$16 sm:%s195]
  %s197 = scalar_lea.vmem %s0, 15
  %s198 = smov 12
  %v199 = vld [vmem:[%s197] ss:$16 sm:%s198]
  %vm200 = vcmask 1043458
  %v201 = vsel %vm200, %v199, %v196
  %s202 = scalar_lea.vmem %s0, 15
  %s203 = smov 48
  %v204 = vld [vmem:[%s202] ss:$16 sm:%s203]
  %vm205 = vcmask 1045508
  %v206 = vsel %vm205, %v204, %v201
  %s207 = scalar_lea.vmem %s0, 15
  %s208 = smov 192
  %v209 = vld [vmem:[%s207] ss:$16 sm:%s208]
  %vm210 = vcmask 1047558
  %v211 = vsel %vm210, %v209, %v206
  %vm212 = vcmask 261120
  %v213 = vsel %vm212, %v211, %v193
  %214 = vrot.lane.b32.xlu0 %v213, 96
  %v215 = vpop.permute.xlu0 %214
  %vm216 = vcmask 785408
  %s217 = scalar_lea.vmem %s1, 112
  %218 = vst.msk [vmem:[%s217] ss:$40 sm:$0x3] %vm216, %v215
  %vm219 = vcmask 1048320
  %s220 = scalar_lea.vmem %s1, 72
  %221 = vst.msk [vmem:[%s220] sm:$0xff] %vm219, %v215
  %s222 = scalar_lea.vmem %s0, 131
  %s223 = smov 3
  %v224 = vld [vmem:[%s222] ss:$4 sm:%s223]
  %s225 = scalar_lea.vmem %s0, 4294967267
  %s226 = smov 12
  %v227 = vld [vmem:[%s225] ss:$16 sm:%s226]
  %vm228 = vcmask 1043458
  %v229 = vsel %vm228, %v227, %v224
  %s230 = scalar_lea.vmem %s0, 4294967267
  %s231 = smov 48
  %v232 = vld [vmem:[%s230] ss:$16 sm:%s231]
  %vm233 = vcmask 1045508
  %v234 = vsel %vm233, %v232, %v229
  %s235 = scalar_lea.vmem %s0, 4294967267
  %s236 = smov 192
  %v237 = vld [vmem:[%s235] ss:$16 sm:%s236]
  %vm238 = vcmask 1047558
  %v239 = vsel %vm238, %v237, %v234
  %240 = vrot.lane.b32.xlu0 %v239, 96
  %v241 = vpop.permute.xlu0 %240
  %vm242 = vcmask 1048320
  %s243 = scalar_lea.vmem %s1, 104
  %244 = vst.msk [vmem:[%s243] ss:$40 sm:$0x3] %vm242, %v241
  %s245 = scalar_lea.vmem %s1, 22
  %246 = vst.msk [vmem:[%s245] sm:$0xfc] %vm242, %v241
  %s247 = scalar_lea.vmem %s0, 139
  %s248 = smov 3
  %v249 = vld [vmem:[%s247] ss:$4 sm:%s248]
  %s250 = scalar_lea.vmem %s0, 67
  %s251 = smov 12
  %v252 = vld [vmem:[%s250] ss:$16 sm:%s251]
  %vm253 = vcmask 1043458
  %v254 = vsel %vm253, %v252, %v249
  %255 = vrot.lane.b32.xlu0 %v254, 96
  %v256 = vpop.permute.xlu0 %255
  %vm257 = vcmask 1048320
  %s258 = scalar_lea.vmem %s1, 112
  %259 = vst.msk [vmem:[%s258] ss:$40 sm:$0x3] %vm257, %v256
  %s260 = scalar_lea.vmem %s1, 28
  %261 = vst.msk [vmem:[%s260] sm:$0xc] %vm257, %v256
  %s262 = scalar_lea.vmem %s0, 6
  %s263 = smov 3
  %v264 = vld [vmem:[%s262] ss:$16 sm:%s263]
  %s265 = scalar_lea.vmem %s0, 6
  %s266 = smov 12
  %v267 = vld [vmem:[%s265] ss:$16 sm:%s266]
  %vm268 = vcmask 1043458
  %v269 = vsel %vm268, %v267, %v264
  %s270 = scalar_lea.vmem %s0, 6
  %s271 = smov 48
  %v272 = vld [vmem:[%s270] ss:$16 sm:%s271]
  %vm273 = vcmask 1045508
  %v274 = vsel %vm273, %v272, %v269
  %s275 = scalar_lea.vmem %s0, 6
  %s276 = smov 192
  %v277 = vld [vmem:[%s275] ss:$16 sm:%s276]
  %vm278 = vcmask 1047558
  %v279 = vsel %vm278, %v277, %v274
  %s280 = scalar_lea.vmem %s0, 14
  %s281 = smov 3
  %v282 = vld [vmem:[%s280] ss:$16 sm:%s281]
  %s283 = scalar_lea.vmem %s0, 14
  %s284 = smov 12
  %v285 = vld [vmem:[%s283] ss:$16 sm:%s284]
  %vm286 = vcmask 1043458
  %v287 = vsel %vm286, %v285, %v282
  %s288 = scalar_lea.vmem %s0, 14
  %s289 = smov 48
  %v290 = vld [vmem:[%s288] ss:$16 sm:%s289]
  %vm291 = vcmask 1045508
  %v292 = vsel %vm291, %v290, %v287
  %s293 = scalar_lea.vmem %s0, 14
  %s294 = smov 192
  %v295 = vld [vmem:[%s293] ss:$16 sm:%s294]
  %vm296 = vcmask 1047558
  %v297 = vsel %vm296, %v295, %v292
  %vm298 = vcmask 523264
  %v299 = vsel %vm298, %v297, %v279
  %300 = vrot.lane.b32.xlu0 %v299, 64
  %v301 = vpop.permute.xlu0 %300
  %vm302 = vcmask 523264
  %s303 = scalar_lea.vmem %s1, 64
  %304 = vst.msk [vmem:[%s303] sm:$0xff] %vm302, %v301
  %vm305 = vcmask 785920
  %s306 = scalar_lea.vmem %s1, 64
  %307 = vst.msk [vmem:[%s306] sm:$0xff] %vm305, %v301
  %s308 = scalar_lea.vmem %s0, 130
  %s309 = smov 3
  %v310 = vld [vmem:[%s308] ss:$4 sm:%s309]
  %s311 = scalar_lea.vmem %s0, 4294967266
  %s312 = smov 12
  %v313 = vld [vmem:[%s311] ss:$16 sm:%s312]
  %vm314 = vcmask 1043458
  %v315 = vsel %vm314, %v313, %v310
  %s316 = scalar_lea.vmem %s0, 4294967266
  %s317 = smov 48
  %v318 = vld [vmem:[%s316] ss:$16 sm:%s317]
  %vm319 = vcmask 1045508
  %v320 = vsel %vm319, %v318, %v315
  %s321 = scalar_lea.vmem %s0, 4294967266
  %s322 = smov 192
  %v323 = vld [vmem:[%s321] ss:$16 sm:%s322]
  %vm324 = vcmask 1047558
  %v325 = vsel %vm324, %v323, %v320
  %s326 = scalar_lea.vmem %s0, 138
  %s327 = smov 3
  %v328 = vld [vmem:[%s326] ss:$4 sm:%s327]
  %s329 = scalar_lea.vmem %s0, 4294967274
  %s330 = smov 12
  %v331 = vld [vmem:[%s329] ss:$16 sm:%s330]
  %vm332 = vcmask 1043458
  %v333 = vsel %vm332, %v331, %v328
  %s334 = scalar_lea.vmem %s0, 4294967274
  %s335 = smov 48
  %v336 = vld [vmem:[%s334] ss:$16 sm:%s335]
  %vm337 = vcmask 1045508
  %v338 = vsel %vm337, %v336, %v333
  %s339 = scalar_lea.vmem %s0, 4294967274
  %s340 = smov 192
  %v341 = vld [vmem:[%s339] ss:$16 sm:%s340]
  %vm342 = vcmask 1047558
  %v343 = vsel %vm342, %v341, %v338
  %vm344 = vcmask 523264
  %v345 = vsel %vm344, %v343, %v325
  %346 = vrot.lane.b32.xlu0 %v345, 64
  %v347 = vpop.permute.xlu0 %346
  %vm348 = vcmask 523264
  %s349 = scalar_lea.vmem %s1, 104
  %350 = vst.msk [vmem:[%s349] ss:$40 sm:$0x3] %vm348, %v347
  %s351 = scalar_lea.vmem %s1, 22
  %352 = vst.msk [vmem:[%s351] sm:$0xfc] %vm348, %v347
  %vm353 = vcmask 785920
  %s354 = scalar_lea.vmem %s1, 104
  %355 = vst.msk [vmem:[%s354] ss:$40 sm:$0x3] %vm353, %v347
  %s356 = scalar_lea.vmem %s1, 22
  %357 = vst.msk [vmem:[%s356] sm:$0xfc] %vm353, %v347
  %s358 = scalar_lea.vmem %s0, 98
  %s359 = smov 3
  %v360 = vld [vmem:[%s358] ss:$16 sm:%s359]
  %s361 = scalar_lea.vmem %s0, 106
  %s362 = smov 3
  %v363 = vld [vmem:[%s361] ss:$16 sm:%s362]
  %vm364 = vcmask 523264
  %v365 = vsel %vm364, %v363, %v360
  %366 = vrot.lane.b32.xlu0 %v365, 64
  %v367 = vpop.permute.xlu0 %366
  %vm368 = vcmask 523264
  %s369 = scalar_lea.vmem %s1, 30
  %370 = vst.msk [vmem:[%s369] sm:$0x3] %vm368, %v367
  %vm371 = vcmask 785920
  %s372 = scalar_lea.vmem %s1, 30
  %373 = vst.msk [vmem:[%s372] sm:$0x3] %vm371, %v367
  %s374 = scalar_lea.vmem %s0, 130
  %s375 = smov 3
  %v376 = vld [vmem:[%s374] ss:$4 sm:%s375]
  %s377 = scalar_lea.vmem %s0, 4294967266
  %s378 = smov 12
  %v379 = vld [vmem:[%s377] ss:$16 sm:%s378]
  %vm380 = vcmask 1043458
  %v381 = vsel %vm380, %v379, %v376
  %s382 = scalar_lea.vmem %s0, 4294967266
  %s383 = smov 48
  %v384 = vld [vmem:[%s382] ss:$16 sm:%s383]
  %vm385 = vcmask 1045508
  %v386 = vsel %vm385, %v384, %v381
  %s387 = scalar_lea.vmem %s0, 4294967266
  %s388 = smov 192
  %v389 = vld [vmem:[%s387] ss:$16 sm:%s388]
  %vm390 = vcmask 1047558
  %v391 = vsel %vm390, %v389, %v386
  %392 = vrot.lane.b32.xlu0 %v391, 64
  %v393 = vpop.permute.xlu0 %392
  %vm394 = vcmask 1048064
  %s395 = scalar_lea.vmem %s1, 96
  %396 = vst.msk [vmem:[%s395] ss:$40 sm:$0x3] %vm394, %v393
  %s397 = scalar_lea.vmem %s1, 14
  %398 = vst.msk [vmem:[%s397] sm:$0xfc] %vm394, %v393
  %s399 = scalar_lea.vmem %s0, 98
  %s400 = smov 3
  %v401 = vld [vmem:[%s399] ss:$16 sm:%s400]
  %s402 = scalar_lea.vmem %s0, 4294967270
  %s403 = smov 12
  %v404 = vld [vmem:[%s402] ss:$16 sm:%s403]
  %vm405 = vcmask 1043458
  %v406 = vsel %vm405, %v404, %v401
  %s407 = scalar_lea.vmem %s0, 4294967270
  %s408 = smov 48
  %v409 = vld [vmem:[%s407] ss:$16 sm:%s408]
  %vm410 = vcmask 1045508
  %v411 = vsel %vm410, %v409, %v406
  %s412 = scalar_lea.vmem %s0, 4294967270
  %s413 = smov 192
  %v414 = vld [vmem:[%s412] ss:$16 sm:%s413]
  %vm415 = vcmask 1047558
  %v416 = vsel %vm415, %v414, %v411
  %417 = vrot.lane.b32.xlu0 %v416, 64
  %v418 = vpop.permute.xlu0 %417
  %vm419 = vcmask 1048064
  %s420 = scalar_lea.vmem %s1, 22
  %421 = vst.msk [vmem:[%s420] sm:$0x3] %vm419, %v418
  %s422 = scalar_lea.vmem %s1, 54
  %423 = vst.msk [vmem:[%s422] sm:$0xfc] %vm419, %v418
  %s424 = scalar_lea.vmem %s0, 102
  %s425 = smov 3
  %v426 = vld [vmem:[%s424] ss:$16 sm:%s425]
  %427 = vrot.lane.b32.xlu0 %v426, 64
  %v428 = vpop.permute.xlu0 %427
  %vm429 = vcmask 1048064
  %s430 = scalar_lea.vmem %s1, 62
  %431 = vst.msk [vmem:[%s430] sm:$0x3] %vm429, %v428
  %s432 = scalar_lea.vmem %s0, 129
  %s433 = smov 3
  %v434 = vld [vmem:[%s432] ss:$4 sm:%s433]
  %s435 = scalar_lea.vmem %s0, 4294967265
  %s436 = smov 12
  %v437 = vld [vmem:[%s435] ss:$16 sm:%s436]
  %vm438 = vcmask 1043458
  %v439 = vsel %vm438, %v437, %v434
  %s440 = scalar_lea.vmem %s0, 4294967265
  %s441 = smov 48
  %v442 = vld [vmem:[%s440] ss:$16 sm:%s441]
  %vm443 = vcmask 1045508
  %v444 = vsel %vm443, %v442, %v439
  %s445 = scalar_lea.vmem %s0, 4294967265
  %s446 = smov 192
  %v447 = vld [vmem:[%s445] ss:$16 sm:%s446]
  %vm448 = vcmask 1047558
  %v449 = vsel %vm448, %v447, %v444
  %s450 = scalar_lea.vmem %s0, 137
  %s451 = smov 3
  %v452 = vld [vmem:[%s450] ss:$4 sm:%s451]
  %s453 = scalar_lea.vmem %s0, 4294967273
  %s454 = smov 12
  %v455 = vld [vmem:[%s453] ss:$16 sm:%s454]
  %vm456 = vcmask 1043458
  %v457 = vsel %vm456, %v455, %v452
  %s458 = scalar_lea.vmem %s0, 4294967273
  %s459 = smov 48
  %v460 = vld [vmem:[%s458] ss:$16 sm:%s459]
  %vm461 = vcmask 1045508
  %v462 = vsel %vm461, %v460, %v457
  %s463 = scalar_lea.vmem %s0, 4294967273
  %s464 = smov 192
  %v465 = vld [vmem:[%s463] ss:$16 sm:%s464]
  %vm466 = vcmask 1047558
  %v467 = vsel %vm466, %v465, %v462
  %vm468 = vcmask 785408
  %v469 = vsel %vm468, %v467, %v449
  %470 = vrot.lane.b32.xlu0 %v469, 32
  %v471 = vpop.permute.xlu0 %470
  %vm472 = vcmask 261120
  %s473 = scalar_lea.vmem %s1, 96
  %474 = vst.msk [vmem:[%s473] ss:$40 sm:$0x3] %vm472, %v471
  %s475 = scalar_lea.vmem %s1, 14
  %476 = vst.msk [vmem:[%s475] sm:$0xfc] %vm472, %v471
  %vm477 = vcmask 523520
  %s478 = scalar_lea.vmem %s1, 96
  %479 = vst.msk [vmem:[%s478] ss:$40 sm:$0x3] %vm477, %v471
  %s480 = scalar_lea.vmem %s1, 14
  %481 = vst.msk [vmem:[%s480] sm:$0xfc] %vm477, %v471
  %s482 = scalar_lea.vmem %s0, 97
  %s483 = smov 3
  %v484 = vld [vmem:[%s482] ss:$16 sm:%s483]
  %s485 = scalar_lea.vmem %s0, 4294967269
  %s486 = smov 12
  %v487 = vld [vmem:[%s485] ss:$16 sm:%s486]
  %vm488 = vcmask 1043458
  %v489 = vsel %vm488, %v487, %v484
  %s490 = scalar_lea.vmem %s0, 4294967269
  %s491 = smov 48
  %v492 = vld [vmem:[%s490] ss:$16 sm:%s491]
  %vm493 = vcmask 1045508
  %v494 = vsel %vm493, %v492, %v489
  %s495 = scalar_lea.vmem %s0, 4294967269
  %s496 = smov 192
  %v497 = vld [vmem:[%s495] ss:$16 sm:%s496]
  %vm498 = vcmask 1047558
  %v499 = vsel %vm498, %v497, %v494
  %s500 = scalar_lea.vmem %s0, 105
  %s501 = smov 3
  %v502 = vld [vmem:[%s500] ss:$16 sm:%s501]
  %s503 = scalar_lea.vmem %s0, 4294967277
  %s504 = smov 12
  %v505 = vld [vmem:[%s503] ss:$16 sm:%s504]
  %vm506 = vcmask 1043458
  %v507 = vsel %vm506, %v505, %v502
  %s508 = scalar_lea.vmem %s0, 4294967277
  %s509 = smov 48
  %v510 = vld [vmem:[%s508] ss:$16 sm:%s509]
  %vm511 = vcmask 1045508
  %v512 = vsel %vm511, %v510, %v507
  %s513 = scalar_lea.vmem %s0, 4294967277
  %s514 = smov 192
  %v515 = vld [vmem:[%s513] ss:$16 sm:%s514]
  %vm516 = vcmask 1047558
  %v517 = vsel %vm516, %v515, %v512
  %vm518 = vcmask 785408
  %v519 = vsel %vm518, %v517, %v499
  %520 = vrot.lane.b32.xlu0 %v519, 32
  %v521 = vpop.permute.xlu0 %520
  %vm522 = vcmask 261120
  %s523 = scalar_lea.vmem %s1, 22
  %524 = vst.msk [vmem:[%s523] sm:$0x3] %vm522, %v521
  %s525 = scalar_lea.vmem %s1, 54
  %526 = vst.msk [vmem:[%s525] sm:$0xfc] %vm522, %v521
  %vm527 = vcmask 523520
  %s528 = scalar_lea.vmem %s1, 22
  %529 = vst.msk [vmem:[%s528] sm:$0x3] %vm527, %v521
  %s530 = scalar_lea.vmem %s1, 54
  %531 = vst.msk [vmem:[%s530] sm:$0xfc] %vm527, %v521
  %s532 = scalar_lea.vmem %s0, 101
  %s533 = smov 3
  %v534 = vld [vmem:[%s532] ss:$16 sm:%s533]
  %s535 = scalar_lea.vmem %s0, 109
  %s536 = smov 3
  %v537 = vld [vmem:[%s535] ss:$16 sm:%s536]
  %vm538 = vcmask 785408
  %v539 = vsel %vm538, %v537, %v534
  %540 = vrot.lane.b32.xlu0 %v539, 32
  %v541 = vpop.permute.xlu0 %540
  %vm542 = vcmask 261120
  %s543 = scalar_lea.vmem %s1, 62
  %544 = vst.msk [vmem:[%s543] sm:$0x3] %vm542, %v541
  %vm545 = vcmask 523520
  %s546 = scalar_lea.vmem %s1, 62
  %547 = vst.msk [vmem:[%s546] sm:$0x3] %vm545, %v541
  %s548 = scalar_lea.vmem %s0, 133
  %s549 = smov 3
  %v550 = vld [vmem:[%s548] ss:$-132 sm:%s549]
  %s551 = scalar_lea.vmem %s0, 4294967281
  %s552 = smov 12
  %v553 = vld [vmem:[%s551] ss:$16 sm:%s552]
  %vm554 = vcmask 1043458
  %v555 = vsel %vm554, %v553, %v550
  %s556 = scalar_lea.vmem %s0, 4294967281
  %s557 = smov 48
  %v558 = vld [vmem:[%s556] ss:$16 sm:%s557]
  %vm559 = vcmask 1045508
  %v560 = vsel %vm559, %v558, %v555
  %s561 = scalar_lea.vmem %s0, 4294967281
  %s562 = smov 192
  %v563 = vld [vmem:[%s561] ss:$16 sm:%s562]
  %vm564 = vcmask 1047558
  %v565 = vsel %vm564, %v563, %v560
  %566 = vrot.lane.b32.xlu0 %v565, 32
  %v567 = vpop.permute.xlu0 %566
  %vm568 = vcmask 1047808
  %s569 = scalar_lea.vmem %s1, 128
  %570 = vst.msk [vmem:[%s569] ss:$-120 sm:$0x3] %vm568, %v567
  %s571 = scalar_lea.vmem %s1, 7
  %572 = vst.msk [vmem:[%s571] sm:$0xfc] %vm568, %v567
  %s573 = scalar_lea.vmem %s0, 113
  %s574 = smov 3
  %v575 = vld [vmem:[%s573] ss:$-108 sm:%s574]
  %s576 = scalar_lea.vmem %s0, 4294967285
  %s577 = smov 12
  %v578 = vld [vmem:[%s576] ss:$16 sm:%s577]
  %vm579 = vcmask 1043458
  %v580 = vsel %vm579, %v578, %v575
  %s581 = scalar_lea.vmem %s0, 4294967285
  %s582 = smov 48
  %v583 = vld [vmem:[%s581] ss:$16 sm:%s582]
  %vm584 = vcmask 1045508
  %v585 = vsel %vm584, %v583, %v580
  %s586 = scalar_lea.vmem %s0, 4294967285
  %s587 = smov 192
  %v588 = vld [vmem:[%s586] ss:$16 sm:%s587]
  %vm589 = vcmask 1047558
  %v590 = vsel %vm589, %v588, %v585
  %591 = vrot.lane.b32.xlu0 %v590, 32
  %v592 = vpop.permute.xlu0 %591
  %vm593 = vcmask 1047808
  %s594 = scalar_lea.vmem %s1, 15
  %595 = vst.msk [vmem:[%s594] ss:$33 sm:$0x3] %vm593, %v592
  %s596 = scalar_lea.vmem %s1, 47
  %597 = vst.msk [vmem:[%s596] sm:$0xfc] %vm593, %v592
  %s598 = scalar_lea.vmem %s0, 117
  %s599 = smov 3
  %v600 = vld [vmem:[%s598] ss:$12 sm:%s599]
  %601 = vrot.lane.b32.xlu0 %v600, 32
  %v602 = vpop.permute.xlu0 %601
  %vm603 = vcmask 1047808
  %s604 = scalar_lea.vmem %s1, 55
  %605 = vst.msk [vmem:[%s604] ss:$33 sm:$0x3] %vm603, %v602

// kernel: tile.17
$region0: #{tile.17}
  %s0 = inlined_call_operand.vmem [shape: f32[8,8,160], index: 0, kind: input, shape index: {}]
  %s1 = inlined_call_operand.vmem [shape: f32[8,1280], index: 1, kind: output, shape index: {}]
  %s2 = scalar_lea.vmem %s0, 8
  %s3 = smov 3
  %v4 = vld [vmem:[%s2] ss:$4 sm:%s3]
  %vm5 = vcmask 261120
  %s6 = scalar_lea.vmem %s1, 8
  %7 = vst.msk [vmem:[%s6] ss:$40 sm:$0x3] %vm5, %v4
  %s8 = scalar_lea.vmem %s0, 24
  %s9 = smov 3
  %v10 = vld [vmem:[%s8] ss:$4 sm:%s9]
  %vm11 = vcmask 261120
  %s12 = scalar_lea.vmem %s1, 9
  %13 = vst.msk [vmem:[%s12] ss:$40 sm:$0x3] %vm11, %v10
  %s14 = scalar_lea.vmem %s0, 40
  %s15 = smov 3
  %v16 = vld [vmem:[%s14] ss:$4 sm:%s15]
  %vm17 = vcmask 261120
  %s18 = scalar_lea.vmem %s1, 10
  %19 = vst.msk [vmem:[%s18] ss:$40 sm:$0x3] %vm17, %v16
  %s20 = scalar_lea.vmem %s0, 56
  %s21 = smov 3
  %v22 = vld [vmem:[%s20] ss:$4 sm:%s21]
  %vm23 = vcmask 261120
  %s24 = scalar_lea.vmem %s1, 11
  %25 = vst.msk [vmem:[%s24] ss:$40 sm:$0x3] %vm23, %v22
  %s26 = scalar_lea.vmem %s0, 72
  %s27 = smov 3
  %v28 = vld [vmem:[%s26] ss:$4 sm:%s27]
  %vm29 = vcmask 261120
  %s30 = scalar_lea.vmem %s1, 12
  %31 = vst.msk [vmem:[%s30] ss:$40 sm:$0x3] %vm29, %v28
  %s32 = scalar_lea.vmem %s0, 88
  %s33 = smov 3
  %v34 = vld [vmem:[%s32] ss:$4 sm:%s33]
  %vm35 = vcmask 261120
  %s36 = scalar_lea.vmem %s1, 13
  %37 = vst.msk [vmem:[%s36] ss:$40 sm:$0x3] %vm35, %v34
  %s38 = scalar_lea.vmem %s0, 104
  %s39 = smov 3
  %v40 = vld [vmem:[%s38] ss:$4 sm:%s39]
  %vm41 = vcmask 261120
  %s42 = scalar_lea.vmem %s1, 14
  %43 = vst.msk [vmem:[%s42] ss:$40 sm:$0x3] %vm41, %v40
  %s44 = scalar_lea.vmem %s0, 120
  %s45 = smov 3
  %v46 = vld [vmem:[%s44] ss:$4 sm:%s45]
  %vm47 = vcmask 261120
  %s48 = scalar_lea.vmem %s1, 15
  %49 = vst.msk [vmem:[%s48] ss:$40 sm:$0x3] %vm47, %v46
  %s50 = smov 3
  %v51 = vld [vmem:[%s0] ss:$4 sm:%s50]
  %52 = vst [vmem:[%s1] ss:$40 sm:$0x3] %v51
  %s53 = scalar_lea.vmem %s0, 16
  %s54 = smov 3
  %v55 = vld [vmem:[%s53] ss:$4 sm:%s54]
  %s56 = scalar_lea.vmem %s1, 1
  %57 = vst [vmem:[%s56] ss:$40 sm:$0x3] %v55
  %s58 = scalar_lea.vmem %s0, 32
  %s59 = smov 3
  %v60 = vld [vmem:[%s58] ss:$4 sm:%s59]
  %s61 = scalar_lea.vmem %s1, 2
  %62 = vst [vmem:[%s61] ss:$40 sm:$0x3] %v60
  %s63 = scalar_lea.vmem %s0, 48
  %s64 = smov 3
  %v65 = vld [vmem:[%s63] ss:$4 sm:%s64]
  %s66 = scalar_lea.vmem %s1, 3
  %67 = vst [vmem:[%s66] ss:$40 sm:$0x3] %v65
  %s68 = scalar_lea.vmem %s0, 64
  %s69 = smov 3
  %v70 = vld [vmem:[%s68] ss:$4 sm:%s69]
  %s71 = scalar_lea.vmem %s1, 4
  %72 = vst [vmem:[%s71] ss:$40 sm:$0x3] %v70
  %s73 = scalar_lea.vmem %s0, 80
  %s74 = smov 3
  %v75 = vld [vmem:[%s73] ss:$4 sm:%s74]
  %s76 = scalar_lea.vmem %s1, 5
  %77 = vst [vmem:[%s76] ss:$40 sm:$0x3] %v75
  %s78 = scalar_lea.vmem %s0, 96
  %s79 = smov 3
  %v80 = vld [vmem:[%s78] ss:$4 sm:%s79]
  %s81 = scalar_lea.vmem %s1, 6
  %82 = vst [vmem:[%s81] ss:$40 sm:$0x3] %v80
  %s83 = scalar_lea.vmem %s0, 112
  %s84 = smov 3
  %v85 = vld [vmem:[%s83] ss:$4 sm:%s84]
  %s86 = scalar_lea.vmem %s1, 7
  %87 = vst [vmem:[%s86] ss:$40 sm:$0x3] %v85
  %s88 = scalar_lea.vmem %s0, 3
  %s89 = smov 3
  %v90 = vld [vmem:[%s88] ss:$16 sm:%s89]
  %s91 = scalar_lea.vmem %s0, 3
  %s92 = smov 12
  %v93 = vld [vmem:[%s91] ss:$16 sm:%s92]
  %vm94 = vcmask 1043458
  %v95 = vsel %vm94, %v93, %v90
  %s96 = scalar_lea.vmem %s0, 3
  %s97 = smov 48
  %v98 = vld [vmem:[%s96] ss:$16 sm:%s97]
  %vm99 = vcmask 1045508
  %v100 = vsel %vm99, %v98, %v95
  %s101 = scalar_lea.vmem %s0, 3
  %s102 = smov 192
  %v103 = vld [vmem:[%s101] ss:$16 sm:%s102]
  %vm104 = vcmask 1047558
  %v105 = vsel %vm104, %v103, %v100
  %s106 = scalar_lea.vmem %s0, 7
  %s107 = smov 3
  %v108 = vld [vmem:[%s106] ss:$16 sm:%s107]
  %s109 = scalar_lea.vmem %s0, 7
  %s110 = smov 12
  %v111 = vld [vmem:[%s109] ss:$16 sm:%s110]
  %vm112 = vcmask 1043458
  %v113 = vsel %vm112, %v111, %v108
  %s114 = scalar_lea.vmem %s0, 7
  %s115 = smov 48
  %v116 = vld [vmem:[%s114] ss:$16 sm:%s115]
  %vm117 = vcmask 1045508
  %v118 = vsel %vm117, %v116, %v113
  %s119 = scalar_lea.vmem %s0, 7
  %s120 = smov 192
  %v121 = vld [vmem:[%s119] ss:$16 sm:%s120]
  %vm122 = vcmask 1047558
  %v123 = vsel %vm122, %v121, %v118
  %vm124 = vcmask 261120
  %v125 = vsel %vm124, %v123, %v105
  %126 = vrot.lane.b32.xlu0 %v125, 96
  %v127 = vpop.permute.xlu0 %126
  %vm128 = vcmask 785408
  %s129 = scalar_lea.vmem %s1, 32
  %130 = vst.msk [vmem:[%s129] sm:$0xff] %vm128, %v127
  %vm131 = vcmask 1048320
  %s132 = scalar_lea.vmem %s1, 64
  %133 = vst.msk [vmem:[%s132] sm:$0xff] %vm131, %v127
  %s134 = scalar_lea.vmem %s0, 7
  %s135 = smov 3
  %v136 = vld [vmem:[%s134] ss:$16 sm:%s135]
  %s137 = scalar_lea.vmem %s0, 7
  %s138 = smov 12
  %v139 = vld [vmem:[%s137] ss:$16 sm:%s138]
  %vm140 = vcmask 1043458
  %v141 = vsel %vm140, %v139, %v136
  %s142 = scalar_lea.vmem %s0, 7
  %s143 = smov 48
  %v144 = vld [vmem:[%s142] ss:$16 sm:%s143]
  %vm145 = vcmask 1045508
  %v146 = vsel %vm145, %v144, %v141
  %s147 = scalar_lea.vmem %s0, 7
  %s148 = smov 192
  %v149 = vld [vmem:[%s147] ss:$16 sm:%s148]
  %vm150 = vcmask 1047558
  %v151 = vsel %vm150, %v149, %v146
  %s152 = scalar_lea.vmem %s0, 11
  %s153 = smov 3
  %v154 = vld [vmem:[%s152] ss:$16 sm:%s153]
  %s155 = scalar_lea.vmem %s0, 11
  %s156 = smov 12
  %v157 = vld [vmem:[%s155] ss:$16 sm:%s156]
  %vm158 = vcmask 1043458
  %v159 = vsel %vm158, %v157, %v154
  %s160 = scalar_lea.vmem %s0, 11
  %s161 = smov 48
  %v162 = vld [vmem:[%s160] ss:$16 sm:%s161]
  %vm163 = vcmask 1045508
  %v164 = vsel %vm163, %v162, %v159
  %s165 = scalar_lea.vmem %s0, 11
  %s166 = smov 192
  %v167 = vld [vmem:[%s165] ss:$16 sm:%s166]
  %vm168 = vcmask 1047558
  %v169 = vsel %vm168, %v167, %v164
  %vm170 = vcmask 261120
  %v171 = vsel %vm170, %v169, %v151
  %172 = vrot.lane.b32.xlu0 %v171, 96
  %v173 = vpop.permute.xlu0 %172
  %vm174 = vcmask 785408
  %s175 = scalar_lea.vmem %s1, 72
  %176 = vst.msk [vmem:[%s175] sm:$0xff] %vm174, %v173
  %vm177 = vcmask 1048320
  %s178 = scalar_lea.vmem %s1, 32
  %179 = vst.msk [vmem:[%s178] sm:$0xff] %vm177, %v173
  %s180 = scalar_lea.vmem %s0, 15
  %s181 = smov 3
  %v182 = vld [vmem:[%s180] ss:$16 sm:%s181]
  %s183 = scalar_lea.vmem %s0, 15
  %s184 = smov 12
  %v185 = vld [vmem:[%s183] ss:$16 sm:%s184]
  %vm186 = vcmask 1043458
  %v187 = vsel %vm186, %v185, %v182
  %s188 = scalar_lea.vmem %s0, 15
  %s189 = smov 48
  %v190 = vld [vmem:[%s188] ss:$16 sm:%s189]
  %vm191 = vcmask 1045508
  %v192 = vsel %vm191, %v190, %v187
  %s193 = scalar_lea.vmem %s0, 15
  %s194 = smov 192
  %v195 = vld [vmem:[%s193] ss:$16 sm:%s194]
  %vm196 = vcmask 1047558
  %v197 = vsel %vm196, %v195, %v192
  %198 = vrot.lane.b32.xlu0 %v197, 96
  %v199 = vpop.permute.xlu0 %198
  %vm200 = vcmask 1048320
  %s201 = scalar_lea.vmem %s1, 72
  %202 = vst.msk [vmem:[%s201] sm:$0xff] %vm200, %v199
  %s203 = scalar_lea.vmem %s0, 3
  %s204 = smov 3
  %v205 = vld [vmem:[%s203] ss:$16 sm:%s204]
  %s206 = scalar_lea.vmem %s0, 3
  %s207 = smov 12
  %v208 = vld [vmem:[%s206] ss:$16 sm:%s207]
  %vm209 = vcmask 1043458
  %v210 = vsel %vm209, %v208, %v205
  %s211 = scalar_lea.vmem %s0, 3
  %s212 = smov 48
  %v213 = vld [vmem:[%s211] ss:$16 sm:%s212]
  %vm214 = vcmask 1045508
  %v215 = vsel %vm214, %v213, %v210
  %s216 = scalar_lea.vmem %s0, 3
  %s217 = smov 192
  %v218 = vld [vmem:[%s216] ss:$16 sm:%s217]
  %vm219 = vcmask 1047558
  %v220 = vsel %vm219, %v218, %v215
  %221 = vrot.lane.b32.xlu0 %v220, 96
  %v222 = vpop.permute.xlu0 %221
  %vm223 = vcmask 1048320
  %s224 = scalar_lea.vmem %s1, 24
  %225 = vst.msk [vmem:[%s224] sm:$0xff] %vm223, %v222
  %s226 = scalar_lea.vmem %s0, 6
  %s227 = smov 3
  %v228 = vld [vmem:[%s226] ss:$16 sm:%s227]
  %s229 = scalar_lea.vmem %s0, 6
  %s230 = smov 12
  %v231 = vld [vmem:[%s229] ss:$16 sm:%s230]
  %vm232 = vcmask 1043458
  %v233 = vsel %vm232, %v231, %v228
  %s234 = scalar_lea.vmem %s0, 6
  %s235 = smov 48
  %v236 = vld [vmem:[%s234] ss:$16 sm:%s235]
  %vm237 = vcmask 1045508
  %v238 = vsel %vm237, %v236, %v233
  %s239 = scalar_lea.vmem %s0, 6
  %s240 = smov 192
  %v241 = vld [vmem:[%s239] ss:$16 sm:%s240]
  %vm242 = vcmask 1047558
  %v243 = vsel %vm242, %v241, %v238
  %s244 = scalar_lea.vmem %s0, 14
  %s245 = smov 3
  %v246 = vld [vmem:[%s244] ss:$16 sm:%s245]
  %s247 = scalar_lea.vmem %s0, 14
  %s248 = smov 12
  %v249 = vld [vmem:[%s247] ss:$16 sm:%s248]
  %vm250 = vcmask 1043458
  %v251 = vsel %vm250, %v249, %v246
  %s252 = scalar_lea.vmem %s0, 14
  %s253 = smov 48
  %v254 = vld [vmem:[%s252] ss:$16 sm:%s253]
  %vm255 = vcmask 1045508
  %v256 = vsel %vm255, %v254, %v251
  %s257 = scalar_lea.vmem %s0, 14
  %s258 = smov 192
  %v259 = vld [vmem:[%s257] ss:$16 sm:%s258]
  %vm260 = vcmask 1047558
  %v261 = vsel %vm260, %v259, %v256
  %vm262 = vcmask 523264
  %v263 = vsel %vm262, %v261, %v243
  %264 = vrot.lane.b32.xlu0 %v263, 64
  %v265 = vpop.permute.xlu0 %264
  %vm266 = vcmask 523264
  %s267 = scalar_lea.vmem %s1, 64
  %268 = vst.msk [vmem:[%s267] sm:$0xff] %vm266, %v265
  %vm269 = vcmask 785920
  %s270 = scalar_lea.vmem %s1, 64
  %271 = vst.msk [vmem:[%s270] sm:$0xff] %vm269, %v265
  %s272 = scalar_lea.vmem %s0, 2
  %s273 = smov 3
  %v274 = vld [vmem:[%s272] ss:$16 sm:%s273]
  %s275 = scalar_lea.vmem %s0, 2
  %s276 = smov 12
  %v277 = vld [vmem:[%s275] ss:$16 sm:%s276]
  %vm278 = vcmask 1043458
  %v279 = vsel %vm278, %v277, %v274
  %s280 = scalar_lea.vmem %s0, 2
  %s281 = smov 48
  %v282 = vld [vmem:[%s280] ss:$16 sm:%s281]
  %vm283 = vcmask 1045508
  %v284 = vsel %vm283, %v282, %v279
  %s285 = scalar_lea.vmem %s0, 2
  %s286 = smov 192
  %v287 = vld [vmem:[%s285] ss:$16 sm:%s286]
  %vm288 = vcmask 1047558
  %v289 = vsel %vm288, %v287, %v284
  %s290 = scalar_lea.vmem %s0, 10
  %s291 = smov 3
  %v292 = vld [vmem:[%s290] ss:$16 sm:%s291]
  %s293 = scalar_lea.vmem %s0, 10
  %s294 = smov 12
  %v295 = vld [vmem:[%s293] ss:$16 sm:%s294]
  %vm296 = vcmask 1043458
  %v297 = vsel %vm296, %v295, %v292
  %s298 = scalar_lea.vmem %s0, 10
  %s299 = smov 48
  %v300 = vld [vmem:[%s298] ss:$16 sm:%s299]
  %vm301 = vcmask 1045508
  %v302 = vsel %vm301, %v300, %v297
  %s303 = scalar_lea.vmem %s0, 10
  %s304 = smov 192
  %v305 = vld [vmem:[%s303] ss:$16 sm:%s304]
  %vm306 = vcmask 1047558
  %v307 = vsel %vm306, %v305, %v302
  %vm308 = vcmask 523264
  %v309 = vsel %vm308, %v307, %v289
  %310 = vrot.lane.b32.xlu0 %v309, 64
  %v311 = vpop.permute.xlu0 %310
  %vm312 = vcmask 523264
  %s313 = scalar_lea.vmem %s1, 24
  %314 = vst.msk [vmem:[%s313] sm:$0xff] %vm312, %v311
  %vm315 = vcmask 785920
  %s316 = scalar_lea.vmem %s1, 24
  %317 = vst.msk [vmem:[%s316] sm:$0xff] %vm315, %v311
  %s318 = scalar_lea.vmem %s0, 2
  %s319 = smov 3
  %v320 = vld [vmem:[%s318] ss:$16 sm:%s319]
  %s321 = scalar_lea.vmem %s0, 2
  %s322 = smov 12
  %v323 = vld [vmem:[%s321] ss:$16 sm:%s322]
  %vm324 = vcmask 1043458
  %v325 = vsel %vm324, %v323, %v320
  %s326 = scalar_lea.vmem %s0, 2
  %s327 = smov 48
  %v328 = vld [vmem:[%s326] ss:$16 sm:%s327]
  %vm329 = vcmask 1045508
  %v330 = vsel %vm329, %v328, %v325
  %s331 = scalar_lea.vmem %s0, 2
  %s332 = smov 192
  %v333 = vld [vmem:[%s331] ss:$16 sm:%s332]
  %vm334 = vcmask 1047558
  %v335 = vsel %vm334, %v333, %v330
  %336 = vrot.lane.b32.xlu0 %v335, 64
  %v337 = vpop.permute.xlu0 %336
  %vm338 = vcmask 1048064
  %s339 = scalar_lea.vmem %s1, 16
  %340 = vst.msk [vmem:[%s339] sm:$0xff] %vm338, %v337
  %s341 = scalar_lea.vmem %s0, 6
  %s342 = smov 3
  %v343 = vld [vmem:[%s341] ss:$16 sm:%s342]
  %s344 = scalar_lea.vmem %s0, 6
  %s345 = smov 12
  %v346 = vld [vmem:[%s344] ss:$16 sm:%s345]
  %vm347 = vcmask 1043458
  %v348 = vsel %vm347, %v346, %v343
  %s349 = scalar_lea.vmem %s0, 6
  %s350 = smov 48
  %v351 = vld [vmem:[%s349] ss:$16 sm:%s350]
  %vm352 = vcmask 1045508
  %v353 = vsel %vm352, %v351, %v348
  %s354 = scalar_lea.vmem %s0, 6
  %s355 = smov 192
  %v356 = vld [vmem:[%s354] ss:$16 sm:%s355]
  %vm357 = vcmask 1047558
  %v358 = vsel %vm357, %v356, %v353
  %359 = vrot.lane.b32.xlu0 %v358, 64
  %v360 = vpop.permute.xlu0 %359
  %vm361 = vcmask 1048064
  %s362 = scalar_lea.vmem %s1, 56
  %363 = vst.msk [vmem:[%s362] sm:$0xff] %vm361, %v360
  %s364 = scalar_lea.vmem %s0, 1
  %s365 = smov 3
  %v366 = vld [vmem:[%s364] ss:$16 sm:%s365]
  %s367 = scalar_lea.vmem %s0, 1
  %s368 = smov 12
  %v369 = vld [vmem:[%s367] ss:$16 sm:%s368]
  %vm370 = vcmask 1043458
  %v371 = vsel %vm370, %v369, %v366
  %s372 = scalar_lea.vmem %s0, 1
  %s373 = smov 48
  %v374 = vld [vmem:[%s372] ss:$16 sm:%s373]
  %vm375 = vcmask 1045508
  %v376 = vsel %vm375, %v374, %v371
  %s377 = scalar_lea.vmem %s0, 1
  %s378 = smov 192
  %v379 = vld [vmem:[%s377] ss:$16 sm:%s378]
  %vm380 = vcmask 1047558
  %v381 = vsel %vm380, %v379, %v376
  %s382 = scalar_lea.vmem %s0, 9
  %s383 = smov 3
  %v384 = vld [vmem:[%s382] ss:$16 sm:%s383]
  %s385 = scalar_lea.vmem %s0, 9
  %s386 = smov 12
  %v387 = vld [vmem:[%s385] ss:$16 sm:%s386]
  %vm388 = vcmask 1043458
  %v389 = vsel %vm388, %v387, %v384
  %s390 = scalar_lea.vmem %s0, 9
  %s391 = smov 48
  %v392 = vld [vmem:[%s390] ss:$16 sm:%s391]
  %vm393 = vcmask 1045508
  %v394 = vsel %vm393, %v392, %v389
  %s395 = scalar_lea.vmem %s0, 9
  %s396 = smov 192
  %v397 = vld [vmem:[%s395] ss:$16 sm:%s396]
  %vm398 = vcmask 1047558
  %v399 = vsel %vm398, %v397, %v394
  %vm400 = vcmask 785408
  %v401 = vsel %vm400, %v399, %v381
  %402 = vrot.lane.b32.xlu0 %v401, 32
  %v403 = vpop.permute.xlu0 %402
  %vm404 = vcmask 261120
  %s405 = scalar_lea.vmem %s1, 16
  %406 = vst.msk [vmem:[%s405] sm:$0xff] %vm404, %v403
  %vm407 = vcmask 523520
  %s408 = scalar_lea.vmem %s1, 16
  %409 = vst.msk [vmem:[%s408] sm:$0xff] %vm407, %v403
  %s410 = scalar_lea.vmem %s0, 5
  %s411 = smov 3
  %v412 = vld [vmem:[%s410] ss:$16 sm:%s411]
  %s413 = scalar_lea.vmem %s0, 5
  %s414 = smov 12
  %v415 = vld [vmem:[%s413] ss:$16 sm:%s414]
  %vm416 = vcmask 1043458
  %v417 = vsel %vm416, %v415, %v412
  %s418 = scalar_lea.vmem %s0, 5
  %s419 = smov 48
  %v420 = vld [vmem:[%s418] ss:$16 sm:%s419]
  %vm421 = vcmask 1045508
  %v422 = vsel %vm421, %v420, %v417
  %s423 = scalar_lea.vmem %s0, 5
  %s424 = smov 192
  %v425 = vld [vmem:[%s423] ss:$16 sm:%s424]
  %vm426 = vcmask 1047558
  %v427 = vsel %vm426, %v425, %v422
  %s428 = scalar_lea.vmem %s0, 13
  %s429 = smov 3
  %v430 = vld [vmem:[%s428] ss:$16 sm:%s429]
  %s431 = scalar_lea.vmem %s0, 13
  %s432 = smov 12
  %v433 = vld [vmem:[%s431] ss:$16 sm:%s432]
  %vm434 = vcmask 1043458
  %v435 = vsel %vm434, %v433, %v430
  %s436 = scalar_lea.vmem %s0, 13
  %s437 = smov 48
  %v438 = vld [vmem:[%s436] ss:$16 sm:%s437]
  %vm439 = vcmask 1045508
  %v440 = vsel %vm439, %v438, %v435
  %s441 = scalar_lea.vmem %s0, 13
  %s442 = smov 192
  %v443 = vld [vmem:[%s441] ss:$16 sm:%s442]
  %vm444 = vcmask 1047558
  %v445 = vsel %vm444, %v443, %v440
  %vm446 = vcmask 785408
  %v447 = vsel %vm446, %v445, %v427
  %448 = vrot.lane.b32.xlu0 %v447, 32
  %v449 = vpop.permute.xlu0 %448
  %vm450 = vcmask 261120
  %s451 = scalar_lea.vmem %s1, 56
  %452 = vst.msk [vmem:[%s451] sm:$0xff] %vm450, %v449
  %vm453 = vcmask 523520
  %s454 = scalar_lea.vmem %s1, 56
  %455 = vst.msk [vmem:[%s454] sm:$0xff] %vm453, %v449
  %s456 = scalar_lea.vmem %s0, 1
  %s457 = smov 3
  %v458 = vld [vmem:[%s456] ss:$16 sm:%s457]
  %s459 = scalar_lea.vmem %s0, 1
  %s460 = smov 12
  %v461 = vld [vmem:[%s459] ss:$16 sm:%s460]
  %vm462 = vcmask 1043458
  %v463 = vsel %vm462, %v461, %v458
  %s464 = scalar_lea.vmem %s0, 1
  %s465 = smov 48
  %v466 = vld [vmem:[%s464] ss:$16 sm:%s465]
  %vm467 = vcmask 1045508
  %v468 = vsel %vm467, %v466, %v463
  %s469 = scalar_lea.vmem %s0, 1
  %s470 = smov 192
  %v471 = vld [vmem:[%s469] ss:$16 sm:%s470]
  %vm472 = vcmask 1047558
  %v473 = vsel %vm472, %v471, %v468
  %474 = vrot.lane.b32.xlu0 %v473, 32
  %v475 = vpop.permute.xlu0 %474
  %vm476 = vcmask 1047808
  %s477 = scalar_lea.vmem %s1, 8
  %478 = vst.msk [vmem:[%s477] sm:$0xff] %vm476, %v475
  %s479 = scalar_lea.vmem %s0, 5
  %s480 = smov 3
  %v481 = vld [vmem:[%s479] ss:$16 sm:%s480]
  %s482 = scalar_lea.vmem %s0, 5
  %s483 = smov 12
  %v484 = vld [vmem:[%s482] ss:$16 sm:%s483]
  %vm485 = vcmask 1043458
  %v486 = vsel %vm485, %v484, %v481
  %s487 = scalar_lea.vmem %s0, 5
  %s488 = smov 48
  %v489 = vld [vmem:[%s487] ss:$16 sm:%s488]
  %vm490 = vcmask 1045508
  %v491 = vsel %vm490, %v489, %v486
  %s492 = scalar_lea.vmem %s0, 5
  %s493 = smov 192
  %v494 = vld [vmem:[%s492] ss:$16 sm:%s493]
  %vm495 = vcmask 1047558
  %v496 = vsel %vm495, %v494, %v491
  %497 = vrot.lane.b32.xlu0 %v496, 32
  %v498 = vpop.permute.xlu0 %497
  %vm499 = vcmask 1047808
  %s500 = scalar_lea.vmem %s1, 48
  %501 = vst.msk [vmem:[%s500] sm:$0xff] %vm499, %v498

// kernel: resnet_forward.1
$region0: #{resnet_forward.1}
  #allocation0 [shape = 'u32[]', space=smem, size = 0x4, offset = 0x4, fixed_abs, tag = 'smem constant byte address 0x4 - core index']
  #allocation1 [shape = 'u32[144,128]{1,0:T(1,128)}', space=vmem, size = 0x12000, scoped, tag = 'internal scratch']
  #allocation2 [shape = 'f32[1,1]{1,0:T(1,128)S(6)}', space=smem, size = 0x200, scoped, tag = 'scoped memory for resnet_forward.1']
  %s0 = inlined_call_operand.vmem [shape: f32[9,1280], index: 0, kind: input, shape index: {}]
  %s1 = inlined_call_operand.vmem [shape: f32[9,1280], index: 1, kind: input, shape index: {}]
  %s2 = inlined_call_operand.vmem [shape: f32[8,1], index: 2, kind: input, shape index: {}]
  %s3 = inlined_call_operand.vmem [shape: f32[8,1], index: 3, kind: input, shape index: {}]
  %s4 = inlined_call_operand.vmem [shape: f32[8,72], index: 4, kind: input, shape index: {}]
  %s5 = inlined_call_operand.vmem [shape: f32[8,1], index: 5, kind: input, shape index: {}]
  %s6 = inlined_call_operand.vmem [shape: f32[8,1280], index: 6, kind: input, shape index: {}]
  %s7 = inlined_call_operand.vmem [shape: f32[1280,8], index: 7, kind: input, shape index: {}]
  %s8 = inlined_call_operand.<no memory space> [shape: f32[1,1], index: 8, kind: input, shape index: {}]
  %s9 = inlined_call_operand.vmem [shape: f32[1,1,8], index: 9, kind: output, shape index: {}]
  %s10 = sld [smem:[#allocation0]]
  $region46: #{resnet_forward.1} parent=0
    _
  %s12 = ssub.s32 1, %s10
  %s13 = scalar_select 0, %s12, %s10
  %14 = sst [smem:[#allocation2]] %s8
  // Predicated region
  $region2: #{resnet_forward.1} parent=0 // pred_check
    _
  $region3: #{resnet_forward.1} parent=0 // pred_check_branch
    %16 = sbr.rel (0) target = $region5
  $region4: #{resnet_forward.1} parent=0 // pred_region
    _
  $region5: #{resnet_forward.1} parent=0 // pred_fallthru
    _
  // Predicated region
  $region6: #{resnet_forward.1} parent=0 // pred_check
    _
  $region7: #{resnet_forward.1} parent=0 // pred_check_branch
    %18 = sbr.rel (0) target = $region9
  $region8: #{resnet_forward.1} parent=0 // pred_region
    _
  $region9: #{resnet_forward.1} parent=0 // pred_fallthru
    _
  // Predicated region
  $region10: #{resnet_forward.1} parent=0 // pred_check
    _
  $region11: #{resnet_forward.1} parent=0 // pred_check_branch
    %20 = sbr.rel (0) target = $region13
  $region12: #{resnet_forward.1} parent=0 // pred_region
    _
  $region13: #{resnet_forward.1} parent=0 // pred_fallthru
    _
  // Predicated region
  $region14: #{resnet_forward.1} parent=0 // pred_check
    _
  $region15: #{resnet_forward.1} parent=0 // pred_check_branch
    %22 = sbr.rel (0) target = $region17
  $region16: #{resnet_forward.1} parent=0 // pred_region
    _
  $region17: #{resnet_forward.1} parent=0 // pred_fallthru
    _
  // Predicated region
  $region18: #{resnet_forward.1} parent=0 // pred_check
    _
  $region19: #{resnet_forward.1} parent=0 // pred_check_branch
    %24 = sbr.rel (0) target = $region21
  $region20: #{resnet_forward.1} parent=0 // pred_region
    _
  $region21: #{resnet_forward.1} parent=0 // pred_fallthru
    _
  // Predicated region
  $region22: #{resnet_forward.1} parent=0 // pred_check
    _
  $region23: #{resnet_forward.1} parent=0 // pred_check_branch
    %26 = sbr.rel (0) target = $region25
  $region24: #{resnet_forward.1} parent=0 // pred_region
    _
  $region25: #{resnet_forward.1} parent=0 // pred_fallthru
    _
  // Predicated region
  $region26: #{resnet_forward.1} parent=0 // pred_check
    _
  $region27: #{resnet_forward.1} parent=0 // pred_check_branch
    %28 = sbr.rel (0) target = $region29
  $region28: #{resnet_forward.1} parent=0 // pred_region
    _
  $region29: #{resnet_forward.1} parent=0 // pred_fallthru
    _
  // Predicated region
  $region30: #{resnet_forward.1} parent=0 // pred_check
    _
  $region31: #{resnet_forward.1} parent=0 // pred_check_branch
    %30 = sbr.rel (0) target = $region33
  $region32: #{resnet_forward.1} parent=0 // pred_region
    _
  $region33: #{resnet_forward.1} parent=0 // pred_fallthru
    _
  // Predicated region
  $region34: #{resnet_forward.1} parent=0 // pred_check
    _
  $region35: #{resnet_forward.1} parent=0 // pred_check_branch
    %32 = sbr.rel (0) target = $region37
  $region36: #{resnet_forward.1} parent=0 // pred_region
    _
  $region37: #{resnet_forward.1} parent=0 // pred_fallthru
    _
  %v33 = vld [vmem:[%s2] sm:$0xff]
  %v34 = vld [vmem:[%s3] sm:$0xff]
  %v35 = vld [vmem:[%s0] ss:$8 sm:$0xf]
  %v36 = vld [vmem:[%s0] ss:$8 sm:$0xf0]
  %v37 = vor.u32 %v35, %v36
  %s38 = scalar_lea.vmem %s0, 64
  %v39 = vld [vmem:[%s38] ss:$8 sm:$0x3]
  %v42 = vlaneseq
  %v43 = vshrl.u32 %v42, 7
  %v44 = vsub.s32 0, %v43
  %v45 = vrot.slane %v37, %v44
  %v46 = vlaneseq
  %v47 = vshrl.u32 %v46, 7
  %v48 = vsub.s32 1, %v47
  %v49 = vrot.slane %v37, %v48
  %v50 = vlaneseq
  %v51 = vshrl.u32 %v50, 7
  %v52 = vsub.s32 2, %v51
  %v53 = vrot.slane %v37, %v52
  %v54 = vlaneseq
  %v55 = vshrl.u32 %v54, 7
  %v56 = vsub.s32 3, %v55
  %v57 = vrot.slane %v37, %v56
  %v58 = vlaneseq
  %v59 = vshrl.u32 %v58, 7
  %v60 = vsub.s32 4, %v59
  %v61 = vrot.slane %v37, %v60
  %v62 = vlaneseq
  %v63 = vshrl.u32 %v62, 7
  %v64 = vsub.s32 5, %v63
  %v65 = vrot.slane %v37, %v64
  %v66 = vlaneseq
  %v67 = vshrl.u32 %v66, 7
  %v68 = vsub.s32 6, %v67
  %v69 = vrot.slane %v37, %v68
  %v70 = vlaneseq
  %v71 = vshrl.u32 %v70, 7
  %v72 = vsub.s32 7, %v71
  %v73 = vrot.slane %v37, %v72
  %v74 = vlaneseq
  %v75 = vshrl.u32 %v74, 7
  %v76 = vsub.s32 0, %v75
  %v77 = vrot.slane %v39, %v76
  %v78 = vlaneseq
  %v79 = vshrl.u32 %v78, 7
  %v80 = vsub.s32 1, %v79
  %v81 = vrot.slane %v39, %v80
  %93 = vset.pattern.permute.xlu0 0
  %94 = vperm.xlu0 %93, %v33
  %v95 = vpop.permute.xlu0 %94
  %v97 = vmul.f32 %v45, %v95
  %v98 = vmul.f32 %v49, %v95
  %v99 = vmul.f32 %v53, %v95
  %v100 = vmul.f32 %v57, %v95
  %v101 = vmul.f32 %v61, %v95
  %v102 = vmul.f32 %v65, %v95
  %v103 = vmul.f32 %v69, %v95
  %v104 = vmul.f32 %v73, %v95
  %v105 = vmul.f32 %v77, %v95
  %v106 = vmul.f32 %v81, %v95
  %108 = vset.pattern.permute.xlu0 0
  %109 = vperm.xlu0 %108, %v34
  %v110 = vpop.permute.xlu0 %109
  %v112 = vadd.f32 %v97, %v110
  %v113 = vadd.f32 %v98, %v110
  %v114 = vadd.f32 %v99, %v110
  %v115 = vadd.f32 %v100, %v110
  %v116 = vadd.f32 %v101, %v110
  %v117 = vadd.f32 %v102, %v110
  %v118 = vadd.f32 %v103, %v110
  %v119 = vadd.f32 %v104, %v110
  %v120 = vadd.f32 %v105, %v110
  %v121 = vadd.f32 %v106, %v110
  %v122 = vmax.f32 %v112, 0.0
  %v123 = vmax.f32 %v113, 0.0
  %v124 = vmax.f32 %v114, 0.0
  %v125 = vmax.f32 %v115, 0.0
  %v126 = vmax.f32 %v116, 0.0
  %v127 = vmax.f32 %v117, 0.0
  %v128 = vmax.f32 %v118, 0.0
  %v129 = vmax.f32 %v119, 0.0
  %v130 = vmax.f32 %v120, 0.0
  %v131 = vmax.f32 %v121, 0.0
  %v132 = vld [vmem:[%s1] ss:$8 sm:$0xf]
  %v133 = vld [vmem:[%s1] ss:$8 sm:$0xf0]
  %v134 = vor.u32 %v132, %v133
  %s135 = scalar_lea.vmem %s1, 64
  %v136 = vld [vmem:[%s135] ss:$8 sm:$0x3]
  %v139 = vlaneseq
  %v140 = vshrl.u32 %v139, 7
  %v141 = vsub.s32 0, %v140
  %v142 = vrot.slane %v134, %v141
  %v143 = vlaneseq
  %v144 = vshrl.u32 %v143, 7
  %v145 = vsub.s32 1, %v144
  %v146 = vrot.slane %v134, %v145
  %v147 = vlaneseq
  %v148 = vshrl.u32 %v147, 7
  %v149 = vsub.s32 2, %v148
  %v150 = vrot.slane %v134, %v149
  %v151 = vlaneseq
  %v152 = vshrl.u32 %v151, 7
  %v153 = vsub.s32 3, %v152
  %v154 = vrot.slane %v134, %v153
  %v155 = vlaneseq
  %v156 = vshrl.u32 %v155, 7
  %v157 = vsub.s32 4, %v156
  %v158 = vrot.slane %v134, %v157
  %v159 = vlaneseq
  %v160 = vshrl.u32 %v159, 7
  %v161 = vsub.s32 5, %v160
  %v162 = vrot.slane %v134, %v161
  %v163 = vlaneseq
  %v164 = vshrl.u32 %v163, 7
  %v165 = vsub.s32 6, %v164
  %v166 = vrot.slane %v134, %v165
  %v167 = vlaneseq
  %v168 = vshrl.u32 %v167, 7
  %v169 = vsub.s32 7, %v168
  %v170 = vrot.slane %v134, %v169
  %v171 = vlaneseq
  %v172 = vshrl.u32 %v171, 7
  %v173 = vsub.s32 0, %v172
  %v174 = vrot.slane %v136, %v173
  %v175 = vlaneseq
  %v176 = vshrl.u32 %v175, 7
  %v177 = vsub.s32 1, %v176
  %v178 = vrot.slane %v136, %v177
  %v189 = vmul.f32 %v122, %v142
  %v190 = vmul.f32 %v123, %v146
  %v191 = vmul.f32 %v124, %v150
  %v192 = vmul.f32 %v125, %v154
  %v193 = vmul.f32 %v126, %v158
  %v194 = vmul.f32 %v127, %v162
  %v195 = vmul.f32 %v128, %v166
  %v196 = vmul.f32 %v129, %v170
  %v197 = vmul.f32 %v130, %v174
  %v198 = vmul.f32 %v131, %v178
  %s199 = scalar_lea.vmem %s0, 1
  %v200 = vld [vmem:[%s199] ss:$8 sm:$0xf]
  %v201 = vld [vmem:[%s199] ss:$8 sm:$0xf0]
  %v202 = vor.u32 %v200, %v201
  %s203 = scalar_lea.vmem %s0, 65
  %v204 = vld [vmem:[%s203] ss:$8 sm:$0x3]
  %v207 = vlaneseq
  %v208 = vshrl.u32 %v207, 7
  %v209 = vsub.s32 0, %v208
  %v210 = vrot.slane %v202, %v209
  %v211 = vlaneseq
  %v212 = vshrl.u32 %v211, 7
  %v213 = vsub.s32 1, %v212
  %v214 = vrot.slane %v202, %v213
  %v215 = vlaneseq
  %v216 = vshrl.u32 %v215, 7
  %v217 = vsub.s32 2, %v216
  %v218 = vrot.slane %v202, %v217
  %v219 = vlaneseq
  %v220 = vshrl.u32 %v219, 7
  %v221 = vsub.s32 3, %v220
  %v222 = vrot.slane %v202, %v221
  %v223 = vlaneseq
  %v224 = vshrl.u32 %v223, 7
  %v225 = vsub.s32 4, %v224
  %v226 = vrot.slane %v202, %v225
  %v227 = vlaneseq
  %v228 = vshrl.u32 %v227, 7
  %v229 = vsub.s32 5, %v228
  %v230 = vrot.slane %v202, %v229
  %v231 = vlaneseq
  %v232 = vshrl.u32 %v231, 7
  %v233 = vsub.s32 6, %v232
  %v234 = vrot.slane %v202, %v233
  %v235 = vlaneseq
  %v236 = vshrl.u32 %v235, 7
  %v237 = vsub.s32 7, %v236
  %v238 = vrot.slane %v202, %v237
  %v239 = vlaneseq
  %v240 = vshrl.u32 %v239, 7
  %v241 = vsub.s32 0, %v240
  %v242 = vrot.slane %v204, %v241
  %v243 = vlaneseq
  %v244 = vshrl.u32 %v243, 7
  %v245 = vsub.s32 1, %v244
  %v246 = vrot.slane %v204, %v245
  %v257 = vmul.f32 %v210, %v95
  %v258 = vmul.f32 %v214, %v95
  %v259 = vmul.f32 %v218, %v95
  %v260 = vmul.f32 %v222, %v95
  %v261 = vmul.f32 %v226, %v95
  %v262 = vmul.f32 %v230, %v95
  %v263 = vmul.f32 %v234, %v95
  %v264 = vmul.f32 %v238, %v95
  %v265 = vmul.f32 %v242, %v95
  %v266 = vmul.f32 %v246, %v95
  %v267 = vadd.f32 %v257, %v110
  %v268 = vadd.f32 %v258, %v110
  %v269 = vadd.f32 %v259, %v110
  %v270 = vadd.f32 %v260, %v110
  %v271 = vadd.f32 %v261, %v110
  %v272 = vadd.f32 %v262, %v110
  %v273 = vadd.f32 %v263, %v110
  %v274 = vadd.f32 %v264, %v110
  %v275 = vadd.f32 %v265, %v110
  %v276 = vadd.f32 %v266, %v110
  %v277 = vmax.f32 %v267, 0.0
  %v278 = vmax.f32 %v268, 0.0
  %v279 = vmax.f32 %v269, 0.0
  %v280 = vmax.f32 %v270, 0.0
  %v281 = vmax.f32 %v271, 0.0
  %v282 = vmax.f32 %v272, 0.0
  %v283 = vmax.f32 %v273, 0.0
  %v284 = vmax.f32 %v274, 0.0
  %v285 = vmax.f32 %v275, 0.0
  %v286 = vmax.f32 %v276, 0.0
  %s287 = scalar_lea.vmem %s1, 1
  %v288 = vld [vmem:[%s287] ss:$8 sm:$0xf]
  %v289 = vld [vmem:[%s287] ss:$8 sm:$0xf0]
  %v290 = vor.u32 %v288, %v289
  %s291 = scalar_lea.vmem %s1, 65
  %v292 = vld [vmem:[%s291] ss:$8 sm:$0x3]
  %v295 = vlaneseq
  %v296 = vshrl.u32 %v295, 7
  %v297 = vsub.s32 0, %v296
  %v298 = vrot.slane %v290, %v297
  %v299 = vlaneseq
  %v300 = vshrl.u32 %v299, 7
  %v301 = vsub.s32 1, %v300
  %v302 = vrot.slane %v290, %v301
  %v303 = vlaneseq
  %v304 = vshrl.u32 %v303, 7
  %v305 = vsub.s32 2, %v304
  %v306 = vrot.slane %v290, %v305
  %v307 = vlaneseq
  %v308 = vshrl.u32 %v307, 7
  %v309 = vsub.s32 3, %v308
  %v310 = vrot.slane %v290, %v309
  %v311 = vlaneseq
  %v312 = vshrl.u32 %v311, 7
  %v313 = vsub.s32 4, %v312
  %v314 = vrot.slane %v290, %v313
  %v315 = vlaneseq
  %v316 = vshrl.u32 %v315, 7
  %v317 = vsub.s32 5, %v316
  %v318 = vrot.slane %v290, %v317
  %v319 = vlaneseq
  %v320 = vshrl.u32 %v319, 7
  %v321 = vsub.s32 6, %v320
  %v322 = vrot.slane %v290, %v321
  %v323 = vlaneseq
  %v324 = vshrl.u32 %v323, 7
  %v325 = vsub.s32 7, %v324
  %v326 = vrot.slane %v290, %v325
  %v327 = vlaneseq
  %v328 = vshrl.u32 %v327, 7
  %v329 = vsub.s32 0, %v328
  %v330 = vrot.slane %v292, %v329
  %v331 = vlaneseq
  %v332 = vshrl.u32 %v331, 7
  %v333 = vsub.s32 1, %v332
  %v334 = vrot.slane %v292, %v333
  %v345 = vmul.f32 %v277, %v298
  %v346 = vmul.f32 %v278, %v302
  %v347 = vmul.f32 %v279, %v306
  %v348 = vmul.f32 %v280, %v310
  %v349 = vmul.f32 %v281, %v314
  %v350 = vmul.f32 %v282, %v318
  %v351 = vmul.f32 %v283, %v322
  %v352 = vmul.f32 %v284, %v326
  %v353 = vmul.f32 %v285, %v330
  %v354 = vmul.f32 %v286, %v334
  %s355 = scalar_lea.vmem %s0, 2
  %v356 = vld [vmem:[%s355] ss:$8 sm:$0xf]
  %v357 = vld [vmem:[%s355] ss:$8 sm:$0xf0]
  %v358 = vor.u32 %v356, %v357
  %s359 = scalar_lea.vmem %s0, 66
  %v360 = vld [vmem:[%s359] ss:$8 sm:$0x3]
  %v363 = vlaneseq
  %v364 = vshrl.u32 %v363, 7
  %v365 = vsub.s32 0, %v364
  %v366 = vrot.slane %v358, %v365
  %v367 = vlaneseq
  %v368 = vshrl.u32 %v367, 7
  %v369 = vsub.s32 1, %v368
  %v370 = vrot.slane %v358, %v369
  %v371 = vlaneseq
  %v372 = vshrl.u32 %v371, 7
  %v373 = vsub.s32 2, %v372
  %v374 = vrot.slane %v358, %v373
  %v375 = vlaneseq
  %v376 = vshrl.u32 %v375, 7
  %v377 = vsub.s32 3, %v376
  %v378 = vrot.slane %v358, %v377
  %v379 = vlaneseq
  %v380 = vshrl.u32 %v379, 7
  %v381 = vsub.s32 4, %v380
  %v382 = vrot.slane %v358, %v381
  %v383 = vlaneseq
  %v384 = vshrl.u32 %v383, 7
  %v385 = vsub.s32 5, %v384
  %v386 = vrot.slane %v358, %v385
  %v387 = vlaneseq
  %v388 = vshrl.u32 %v387, 7
  %v389 = vsub.s32 6, %v388
  %v390 = vrot.slane %v358, %v389
  %v391 = vlaneseq
  %v392 = vshrl.u32 %v391, 7
  %v393 = vsub.s32 7, %v392
  %v394 = vrot.slane %v358, %v393
  %v395 = vlaneseq
  %v396 = vshrl.u32 %v395, 7
  %v397 = vsub.s32 0, %v396
  %v398 = vrot.slane %v360, %v397
  %v399 = vlaneseq
  %v400 = vshrl.u32 %v399, 7
  %v401 = vsub.s32 1, %v400
  %v402 = vrot.slane %v360, %v401
  %v413 = vmul.f32 %v366, %v95
  %v414 = vmul.f32 %v370, %v95
  %v415 = vmul.f32 %v374, %v95
  %v416 = vmul.f32 %v378, %v95
  %v417 = vmul.f32 %v382, %v95
  %v418 = vmul.f32 %v386, %v95
  %v419 = vmul.f32 %v390, %v95
  %v420 = vmul.f32 %v394, %v95
  %v421 = vmul.f32 %v398, %v95
  %v422 = vmul.f32 %v402, %v95
  %v423 = vadd.f32 %v413, %v110
  %v424 = vadd.f32 %v414, %v110
  %v425 = vadd.f32 %v415, %v110
  %v426 = vadd.f32 %v416, %v110
  %v427 = vadd.f32 %v417, %v110
  %v428 = vadd.f32 %v418, %v110
  %v429 = vadd.f32 %v419, %v110
  %v430 = vadd.f32 %v420, %v110
  %v431 = vadd.f32 %v421, %v110
  %v432 = vadd.f32 %v422, %v110
  %v433 = vmax.f32 %v423, 0.0
  %v434 = vmax.f32 %v424, 0.0
  %v435 = vmax.f32 %v425, 0.0
  %v436 = vmax.f32 %v426, 0.0
  %v437 = vmax.f32 %v427, 0.0
  %v438 = vmax.f32 %v428, 0.0
  %v439 = vmax.f32 %v429, 0.0
  %v440 = vmax.f32 %v430, 0.0
  %v441 = vmax.f32 %v431, 0.0
  %v442 = vmax.f32 %v432, 0.0
  %s443 = scalar_lea.vmem %s1, 2
  %v444 = vld [vmem:[%s443] ss:$8 sm:$0xf]
  %v445 = vld [vmem:[%s443] ss:$8 sm:$0xf0]
  %v446 = vor.u32 %v444, %v445
  %s447 = scalar_lea.vmem %s1, 66
  %v448 = vld [vmem:[%s447] ss:$8 sm:$0x3]
  %v451 = vlaneseq
  %v452 = vshrl.u32 %v451, 7
  %v453 = vsub.s32 0, %v452
  %v454 = vrot.slane %v446, %v453
  %v455 = vlaneseq
  %v456 = vshrl.u32 %v455, 7
  %v457 = vsub.s32 1, %v456
  %v458 = vrot.slane %v446, %v457
  %v459 = vlaneseq
  %v460 = vshrl.u32 %v459, 7
  %v461 = vsub.s32 2, %v460
  %v462 = vrot.slane %v446, %v461
  %v463 = vlaneseq
  %v464 = vshrl.u32 %v463, 7
  %v465 = vsub.s32 3, %v464
  %v466 = vrot.slane %v446, %v465
  %v467 = vlaneseq
  %v468 = vshrl.u32 %v467, 7
  %v469 = vsub.s32 4, %v468
  %v470 = vrot.slane %v446, %v469
  %v471 = vlaneseq
  %v472 = vshrl.u32 %v471, 7
  %v473 = vsub.s32 5, %v472
  %v474 = vrot.slane %v446, %v473
  %v475 = vlaneseq
  %v476 = vshrl.u32 %v475, 7
  %v477 = vsub.s32 6, %v476
  %v478 = vrot.slane %v446, %v477
  %v479 = vlaneseq
  %v480 = vshrl.u32 %v479, 7
  %v481 = vsub.s32 7, %v480
  %v482 = vrot.slane %v446, %v481
  %v483 = vlaneseq
  %v484 = vshrl.u32 %v483, 7
  %v485 = vsub.s32 0, %v484
  %v486 = vrot.slane %v448, %v485
  %v487 = vlaneseq
  %v488 = vshrl.u32 %v487, 7
  %v489 = vsub.s32 1, %v488
  %v490 = vrot.slane %v448, %v489
  %v501 = vmul.f32 %v433, %v454
  %v502 = vmul.f32 %v434, %v458
  %v503 = vmul.f32 %v435, %v462
  %v504 = vmul.f32 %v436, %v466
  %v505 = vmul.f32 %v437, %v470
  %v506 = vmul.f32 %v438, %v474
  %v507 = vmul.f32 %v439, %v478
  %v508 = vmul.f32 %v440, %v482
  %v509 = vmul.f32 %v441, %v486
  %v510 = vmul.f32 %v442, %v490
  %s511 = scalar_lea.vmem %s0, 3
  %v512 = vld [vmem:[%s511] ss:$8 sm:$0xf]
  %v513 = vld [vmem:[%s511] ss:$8 sm:$0xf0]
  %v514 = vor.u32 %v512, %v513
  %s515 = scalar_lea.vmem %s0, 67
  %v516 = vld [vmem:[%s515] ss:$8 sm:$0x3]
  %v519 = vlaneseq
  %v520 = vshrl.u32 %v519, 7
  %v521 = vsub.s32 0, %v520
  %v522 = vrot.slane %v514, %v521
  %v523 = vlaneseq
  %v524 = vshrl.u32 %v523, 7
  %v525 = vsub.s32 1, %v524
  %v526 = vrot.slane %v514, %v525
  %v527 = vlaneseq
  %v528 = vshrl.u32 %v527, 7
  %v529 = vsub.s32 2, %v528
  %v530 = vrot.slane %v514, %v529
  %v531 = vlaneseq
  %v532 = vshrl.u32 %v531, 7
  %v533 = vsub.s32 3, %v532
  %v534 = vrot.slane %v514, %v533
  %v535 = vlaneseq
  %v536 = vshrl.u32 %v535, 7
  %v537 = vsub.s32 4, %v536
  %v538 = vrot.slane %v514, %v537
  %v539 = vlaneseq
  %v540 = vshrl.u32 %v539, 7
  %v541 = vsub.s32 5, %v540
  %v542 = vrot.slane %v514, %v541
  %v543 = vlaneseq
  %v544 = vshrl.u32 %v543, 7
  %v545 = vsub.s32 6, %v544
  %v546 = vrot.slane %v514, %v545
  %v547 = vlaneseq
  %v548 = vshrl.u32 %v547, 7
  %v549 = vsub.s32 7, %v548
  %v550 = vrot.slane %v514, %v549
  %v551 = vlaneseq
  %v552 = vshrl.u32 %v551, 7
  %v553 = vsub.s32 0, %v552
  %v554 = vrot.slane %v516, %v553
  %v555 = vlaneseq
  %v556 = vshrl.u32 %v555, 7
  %v557 = vsub.s32 1, %v556
  %v558 = vrot.slane %v516, %v557
  %v569 = vmul.f32 %v522, %v95
  %v570 = vmul.f32 %v526, %v95
  %v571 = vmul.f32 %v530, %v95
  %v572 = vmul.f32 %v534, %v95
  %v573 = vmul.f32 %v538, %v95
  %v574 = vmul.f32 %v542, %v95
  %v575 = vmul.f32 %v546, %v95
  %v576 = vmul.f32 %v550, %v95
  %v577 = vmul.f32 %v554, %v95
  %v578 = vmul.f32 %v558, %v95
  %v579 = vadd.f32 %v569, %v110
  %v580 = vadd.f32 %v570, %v110
  %v581 = vadd.f32 %v571, %v110
  %v582 = vadd.f32 %v572, %v110
  %v583 = vadd.f32 %v573, %v110
  %v584 = vadd.f32 %v574, %v110
  %v585 = vadd.f32 %v575, %v110
  %v586 = vadd.f32 %v576, %v110
  %v587 = vadd.f32 %v577, %v110
  %v588 = vadd.f32 %v578, %v110
  %v589 = vmax.f32 %v579, 0.0
  %v590 = vmax.f32 %v580, 0.0
  %v591 = vmax.f32 %v581, 0.0
  %v592 = vmax.f32 %v582, 0.0
  %v593 = vmax.f32 %v583, 0.0
  %v594 = vmax.f32 %v584, 0.0
  %v595 = vmax.f32 %v585, 0.0
  %v596 = vmax.f32 %v586, 0.0
  %v597 = vmax.f32 %v587, 0.0
  %v598 = vmax.f32 %v588, 0.0
  %s599 = scalar_lea.vmem %s1, 3
  %v600 = vld [vmem:[%s599] ss:$8 sm:$0xf]
  %v601 = vld [vmem:[%s599] ss:$8 sm:$0xf0]
  %v602 = vor.u32 %v600, %v601
  %s603 = scalar_lea.vmem %s1, 67
  %v604 = vld [vmem:[%s603] ss:$8 sm:$0x3]
  %v607 = vlaneseq
  %v608 = vshrl.u32 %v607, 7
  %v609 = vsub.s32 0, %v608
  %v610 = vrot.slane %v602, %v609
  %v611 = vlaneseq
  %v612 = vshrl.u32 %v611, 7
  %v613 = vsub.s32 1, %v612
  %v614 = vrot.slane %v602, %v613
  %v615 = vlaneseq
  %v616 = vshrl.u32 %v615, 7
  %v617 = vsub.s32 2, %v616
  %v618 = vrot.slane %v602, %v617
  %v619 = vlaneseq
  %v620 = vshrl.u32 %v619, 7
  %v621 = vsub.s32 3, %v620
  %v622 = vrot.slane %v602, %v621
  %v623 = vlaneseq
  %v624 = vshrl.u32 %v623, 7
  %v625 = vsub.s32 4, %v624
  %v626 = vrot.slane %v602, %v625
  %v627 = vlaneseq
  %v628 = vshrl.u32 %v627, 7
  %v629 = vsub.s32 5, %v628
  %v630 = vrot.slane %v602, %v629
  %v631 = vlaneseq
  %v632 = vshrl.u32 %v631, 7
  %v633 = vsub.s32 6, %v632
  %v634 = vrot.slane %v602, %v633
  %v635 = vlaneseq
  %v636 = vshrl.u32 %v635, 7
  %v637 = vsub.s32 7, %v636
  %v638 = vrot.slane %v602, %v637
  %v639 = vlaneseq
  %v640 = vshrl.u32 %v639, 7
  %v641 = vsub.s32 0, %v640
  %v642 = vrot.slane %v604, %v641
  %v643 = vlaneseq
  %v644 = vshrl.u32 %v643, 7
  %v645 = vsub.s32 1, %v644
  %v646 = vrot.slane %v604, %v645
  %v657 = vmul.f32 %v589, %v610
  %v658 = vmul.f32 %v590, %v614
  %v659 = vmul.f32 %v591, %v618
  %v660 = vmul.f32 %v592, %v622
  %v661 = vmul.f32 %v593, %v626
  %v662 = vmul.f32 %v594, %v630
  %v663 = vmul.f32 %v595, %v634
  %v664 = vmul.f32 %v596, %v638
  %v665 = vmul.f32 %v597, %v642
  %v666 = vmul.f32 %v598, %v646
  %s667 = scalar_lea.vmem %s0, 4
  %v668 = vld [vmem:[%s667] ss:$8 sm:$0xf]
  %v669 = vld [vmem:[%s667] ss:$8 sm:$0xf0]
  %v670 = vor.u32 %v668, %v669
  %s671 = scalar_lea.vmem %s0, 68
  %v672 = vld [vmem:[%s671] ss:$8 sm:$0x3]
  %v675 = vlaneseq
  %v676 = vshrl.u32 %v675, 7
  %v677 = vsub.s32 0, %v676
  %v678 = vrot.slane %v670, %v677
  %v679 = vlaneseq
  %v680 = vshrl.u32 %v679, 7
  %v681 = vsub.s32 1, %v680
  %v682 = vrot.slane %v670, %v681
  %v683 = vlaneseq
  %v684 = vshrl.u32 %v683, 7
  %v685 = vsub.s32 2, %v684
  %v686 = vrot.slane %v670, %v685
  %v687 = vlaneseq
  %v688 = vshrl.u32 %v687, 7
  %v689 = vsub.s32 3, %v688
  %v690 = vrot.slane %v670, %v689
  %v691 = vlaneseq
  %v692 = vshrl.u32 %v691, 7
  %v693 = vsub.s32 4, %v692
  %v694 = vrot.slane %v670, %v693
  %v695 = vlaneseq
  %v696 = vshrl.u32 %v695, 7
  %v697 = vsub.s32 5, %v696
  %v698 = vrot.slane %v670, %v697
  %v699 = vlaneseq
  %v700 = vshrl.u32 %v699, 7
  %v701 = vsub.s32 6, %v700
  %v702 = vrot.slane %v670, %v701
  %v703 = vlaneseq
  %v704 = vshrl.u32 %v703, 7
  %v705 = vsub.s32 7, %v704
  %v706 = vrot.slane %v670, %v705
  %v707 = vlaneseq
  %v708 = vshrl.u32 %v707, 7
  %v709 = vsub.s32 0, %v708
  %v710 = vrot.slane %v672, %v709
  %v711 = vlaneseq
  %v712 = vshrl.u32 %v711, 7
  %v713 = vsub.s32 1, %v712
  %v714 = vrot.slane %v672, %v713
  %v725 = vmul.f32 %v678, %v95
  %v726 = vmul.f32 %v682, %v95
  %v727 = vmul.f32 %v686, %v95
  %v728 = vmul.f32 %v690, %v95
  %v729 = vmul.f32 %v694, %v95
  %v730 = vmul.f32 %v698, %v95
  %v731 = vmul.f32 %v702, %v95
  %v732 = vmul.f32 %v706, %v95
  %v733 = vmul.f32 %v710, %v95
  %v734 = vmul.f32 %v714, %v95
  %v735 = vadd.f32 %v725, %v110
  %v736 = vadd.f32 %v726, %v110
  %v737 = vadd.f32 %v727, %v110
  %v738 = vadd.f32 %v728, %v110
  %v739 = vadd.f32 %v729, %v110
  %v740 = vadd.f32 %v730, %v110
  %v741 = vadd.f32 %v731, %v110
  %v742 = vadd.f32 %v732, %v110
  %v743 = vadd.f32 %v733, %v110
  %v744 = vadd.f32 %v734, %v110
  %v745 = vmax.f32 %v735, 0.0
  %v746 = vmax.f32 %v736, 0.0
  %v747 = vmax.f32 %v737, 0.0
  %v748 = vmax.f32 %v738, 0.0
  %v749 = vmax.f32 %v739, 0.0
  %v750 = vmax.f32 %v740, 0.0
  %v751 = vmax.f32 %v741, 0.0
  %v752 = vmax.f32 %v742, 0.0
  %v753 = vmax.f32 %v743, 0.0
  %v754 = vmax.f32 %v744, 0.0
  %s755 = scalar_lea.vmem %s1, 4
  %v756 = vld [vmem:[%s755] ss:$8 sm:$0xf]
  %v757 = vld [vmem:[%s755] ss:$8 sm:$0xf0]
  %v758 = vor.u32 %v756, %v757
  %s759 = scalar_lea.vmem %s1, 68
  %v760 = vld [vmem:[%s759] ss:$8 sm:$0x3]
  %v763 = vlaneseq
  %v764 = vshrl.u32 %v763, 7
  %v765 = vsub.s32 0, %v764
  %v766 = vrot.slane %v758, %v765
  %v767 = vlaneseq
  %v768 = vshrl.u32 %v767, 7
  %v769 = vsub.s32 1, %v768
  %v770 = vrot.slane %v758, %v769
  %v771 = vlaneseq
  %v772 = vshrl.u32 %v771, 7
  %v773 = vsub.s32 2, %v772
  %v774 = vrot.slane %v758, %v773
  %v775 = vlaneseq
  %v776 = vshrl.u32 %v775, 7
  %v777 = vsub.s32 3, %v776
  %v778 = vrot.slane %v758, %v777
  %v779 = vlaneseq
  %v780 = vshrl.u32 %v779, 7
  %v781 = vsub.s32 4, %v780
  %v782 = vrot.slane %v758, %v781
  %v783 = vlaneseq
  %v784 = vshrl.u32 %v783, 7
  %v785 = vsub.s32 5, %v784
  %v786 = vrot.slane %v758, %v785
  %v787 = vlaneseq
  %v788 = vshrl.u32 %v787, 7
  %v789 = vsub.s32 6, %v788
  %v790 = vrot.slane %v758, %v789
  %v791 = vlaneseq
  %v792 = vshrl.u32 %v791, 7
  %v793 = vsub.s32 7, %v792
  %v794 = vrot.slane %v758, %v793
  %v795 = vlaneseq
  %v796 = vshrl.u32 %v795, 7
  %v797 = vsub.s32 0, %v796
  %v798 = vrot.slane %v760, %v797
  %v799 = vlaneseq
  %v800 = vshrl.u32 %v799, 7
  %v801 = vsub.s32 1, %v800
  %v802 = vrot.slane %v760, %v801
  %v813 = vmul.f32 %v745, %v766
  %v814 = vmul.f32 %v746, %v770
  %v815 = vmul.f32 %v747, %v774
  %v816 = vmul.f32 %v748, %v778
  %v817 = vmul.f32 %v749, %v782
  %v818 = vmul.f32 %v750, %v786
  %v819 = vmul.f32 %v751, %v790
  %v820 = vmul.f32 %v752, %v794
  %v821 = vmul.f32 %v753, %v798
  %v822 = vmul.f32 %v754, %v802
  %s823 = scalar_lea.vmem %s0, 5
  %v824 = vld [vmem:[%s823] ss:$8 sm:$0xf]
  %v825 = vld [vmem:[%s823] ss:$8 sm:$0xf0]
  %v826 = vor.u32 %v824, %v825
  %s827 = scalar_lea.vmem %s0, 69
  %v828 = vld [vmem:[%s827] ss:$8 sm:$0x3]
  %v831 = vlaneseq
  %v832 = vshrl.u32 %v831, 7
  %v833 = vsub.s32 0, %v832
  %v834 = vrot.slane %v826, %v833
  %v835 = vlaneseq
  %v836 = vshrl.u32 %v835, 7
  %v837 = vsub.s32 1, %v836
  %v838 = vrot.slane %v826, %v837
  %v839 = vlaneseq
  %v840 = vshrl.u32 %v839, 7
  %v841 = vsub.s32 2, %v840
  %v842 = vrot.slane %v826, %v841
  %v843 = vlaneseq
  %v844 = vshrl.u32 %v843, 7
  %v845 = vsub.s32 3, %v844
  %v846 = vrot.slane %v826, %v845
  %v847 = vlaneseq
  %v848 = vshrl.u32 %v847, 7
  %v849 = vsub.s32 4, %v848
  %v850 = vrot.slane %v826, %v849
  %v851 = vlaneseq
  %v852 = vshrl.u32 %v851, 7
  %v853 = vsub.s32 5, %v852
  %v854 = vrot.slane %v826, %v853
  %v855 = vlaneseq
  %v856 = vshrl.u32 %v855, 7
  %v857 = vsub.s32 6, %v856
  %v858 = vrot.slane %v826, %v857
  %v859 = vlaneseq
  %v860 = vshrl.u32 %v859, 7
  %v861 = vsub.s32 7, %v860
  %v862 = vrot.slane %v826, %v861
  %v863 = vlaneseq
  %v864 = vshrl.u32 %v863, 7
  %v865 = vsub.s32 0, %v864
  %v866 = vrot.slane %v828, %v865
  %v867 = vlaneseq
  %v868 = vshrl.u32 %v867, 7
  %v869 = vsub.s32 1, %v868
  %v870 = vrot.slane %v828, %v869
  %v881 = vmul.f32 %v834, %v95
  %v882 = vmul.f32 %v838, %v95
  %v883 = vmul.f32 %v842, %v95
  %v884 = vmul.f32 %v846, %v95
  %v885 = vmul.f32 %v850, %v95
  %v886 = vmul.f32 %v854, %v95
  %v887 = vmul.f32 %v858, %v95
  %v888 = vmul.f32 %v862, %v95
  %v889 = vmul.f32 %v866, %v95
  %v890 = vmul.f32 %v870, %v95
  %v891 = vadd.f32 %v881, %v110
  %v892 = vadd.f32 %v882, %v110
  %v893 = vadd.f32 %v883, %v110
  %v894 = vadd.f32 %v884, %v110
  %v895 = vadd.f32 %v885, %v110
  %v896 = vadd.f32 %v886, %v110
  %v897 = vadd.f32 %v887, %v110
  %v898 = vadd.f32 %v888, %v110
  %v899 = vadd.f32 %v889, %v110
  %v900 = vadd.f32 %v890, %v110
  %v901 = vmax.f32 %v891, 0.0
  %v902 = vmax.f32 %v892, 0.0
  %v903 = vmax.f32 %v893, 0.0
  %v904 = vmax.f32 %v894, 0.0
  %v905 = vmax.f32 %v895, 0.0
  %v906 = vmax.f32 %v896, 0.0
  %v907 = vmax.f32 %v897, 0.0
  %v908 = vmax.f32 %v898, 0.0
  %v909 = vmax.f32 %v899, 0.0
  %v910 = vmax.f32 %v900, 0.0
  %s911 = scalar_lea.vmem %s1, 5
  %v912 = vld [vmem:[%s911] ss:$8 sm:$0xf]
  %v913 = vld [vmem:[%s911] ss:$8 sm:$0xf0]
  %v914 = vor.u32 %v912, %v913
  %s915 = scalar_lea.vmem %s1, 69
  %v916 = vld [vmem:[%s915] ss:$8 sm:$0x3]
  %v919 = vlaneseq
  %v920 = vshrl.u32 %v919, 7
  %v921 = vsub.s32 0, %v920
  %v922 = vrot.slane %v914, %v921
  %v923 = vlaneseq
  %v924 = vshrl.u32 %v923, 7
  %v925 = vsub.s32 1, %v924
  %v926 = vrot.slane %v914, %v925
  %v927 = vlaneseq
  %v928 = vshrl.u32 %v927, 7
  %v929 = vsub.s32 2, %v928
  %v930 = vrot.slane %v914, %v929
  %v931 = vlaneseq
  %v932 = vshrl.u32 %v931, 7
  %v933 = vsub.s32 3, %v932
  %v934 = vrot.slane %v914, %v933
  %v935 = vlaneseq
  %v936 = vshrl.u32 %v935, 7
  %v937 = vsub.s32 4, %v936
  %v938 = vrot.slane %v914, %v937
  %v939 = vlaneseq
  %v940 = vshrl.u32 %v939, 7
  %v941 = vsub.s32 5, %v940
  %v942 = vrot.slane %v914, %v941
  %v943 = vlaneseq
  %v944 = vshrl.u32 %v943, 7
  %v945 = vsub.s32 6, %v944
  %v946 = vrot.slane %v914, %v945
  %v947 = vlaneseq
  %v948 = vshrl.u32 %v947, 7
  %v949 = vsub.s32 7, %v948
  %v950 = vrot.slane %v914, %v949
  %v951 = vlaneseq
  %v952 = vshrl.u32 %v951, 7
  %v953 = vsub.s32 0, %v952
  %v954 = vrot.slane %v916, %v953
  %v955 = vlaneseq
  %v956 = vshrl.u32 %v955, 7
  %v957 = vsub.s32 1, %v956
  %v958 = vrot.slane %v916, %v957
  %v969 = vmul.f32 %v901, %v922
  %v970 = vmul.f32 %v902, %v926
  %v971 = vmul.f32 %v903, %v930
  %v972 = vmul.f32 %v904, %v934
  %v973 = vmul.f32 %v905, %v938
  %v974 = vmul.f32 %v906, %v942
  %v975 = vmul.f32 %v907, %v946
  %v976 = vmul.f32 %v908, %v950
  %v977 = vmul.f32 %v909, %v954
  %v978 = vmul.f32 %v910, %v958
  %s979 = scalar_lea.vmem %s0, 6
  %v980 = vld [vmem:[%s979] ss:$8 sm:$0xf]
  %v981 = vld [vmem:[%s979] ss:$8 sm:$0xf0]
  %v982 = vor.u32 %v980, %v981
  %s983 = scalar_lea.vmem %s0, 70
  %v984 = vld [vmem:[%s983] ss:$8 sm:$0x3]
  %v987 = vlaneseq
  %v988 = vshrl.u32 %v987, 7
  %v989 = vsub.s32 0, %v988
  %v990 = vrot.slane %v982, %v989
  %v991 = vlaneseq
  %v992 = vshrl.u32 %v991, 7
  %v993 = vsub.s32 1, %v992
  %v994 = vrot.slane %v982, %v993
  %v995 = vlaneseq
  %v996 = vshrl.u32 %v995, 7
  %v997 = vsub.s32 2, %v996
  %v998 = vrot.slane %v982, %v997
  %v999 = vlaneseq
  %v1000 = vshrl.u32 %v999, 7
  %v1001 = vsub.s32 3, %v1000
  %v1002 = vrot.slane %v982, %v1001
  %v1003 = vlaneseq
  %v1004 = vshrl.u32 %v1003, 7
  %v1005 = vsub.s32 4, %v1004
  %v1006 = vrot.slane %v982, %v1005
  %v1007 = vlaneseq
  %v1008 = vshrl.u32 %v1007, 7
  %v1009 = vsub.s32 5, %v1008
  %v1010 = vrot.slane %v982, %v1009
  %v1011 = vlaneseq
  %v1012 = vshrl.u32 %v1011, 7
  %v1013 = vsub.s32 6, %v1012
  %v1014 = vrot.slane %v982, %v1013
  %v1015 = vlaneseq
  %v1016 = vshrl.u32 %v1015, 7
  %v1017 = vsub.s32 7, %v1016
  %v1018 = vrot.slane %v982, %v1017
  %v1019 = vlaneseq
  %v1020 = vshrl.u32 %v1019, 7
  %v1021 = vsub.s32 0, %v1020
  %v1022 = vrot.slane %v984, %v1021
  %v1023 = vlaneseq
  %v1024 = vshrl.u32 %v1023, 7
  %v1025 = vsub.s32 1, %v1024
  %v1026 = vrot.slane %v984, %v1025
  %v1037 = vmul.f32 %v990, %v95
  %v1038 = vmul.f32 %v994, %v95
  %v1039 = vmul.f32 %v998, %v95
  %v1040 = vmul.f32 %v1002, %v95
  %v1041 = vmul.f32 %v1006, %v95
  %v1042 = vmul.f32 %v1010, %v95
  %v1043 = vmul.f32 %v1014, %v95
  %v1044 = vmul.f32 %v1018, %v95
  %v1045 = vmul.f32 %v1022, %v95
  %v1046 = vmul.f32 %v1026, %v95
  %v1047 = vadd.f32 %v1037, %v110
  %v1048 = vadd.f32 %v1038, %v110
  %v1049 = vadd.f32 %v1039, %v110
  %v1050 = vadd.f32 %v1040, %v110
  %v1051 = vadd.f32 %v1041, %v110
  %v1052 = vadd.f32 %v1042, %v110
  %v1053 = vadd.f32 %v1043, %v110
  %v1054 = vadd.f32 %v1044, %v110
  %v1055 = vadd.f32 %v1045, %v110
  %v1056 = vadd.f32 %v1046, %v110
  %v1057 = vmax.f32 %v1047, 0.0
  %v1058 = vmax.f32 %v1048, 0.0
  %v1059 = vmax.f32 %v1049, 0.0
  %v1060 = vmax.f32 %v1050, 0.0
  %v1061 = vmax.f32 %v1051, 0.0
  %v1062 = vmax.f32 %v1052, 0.0
  %v1063 = vmax.f32 %v1053, 0.0
  %v1064 = vmax.f32 %v1054, 0.0
  %v1065 = vmax.f32 %v1055, 0.0
  %v1066 = vmax.f32 %v1056, 0.0
  %s1067 = scalar_lea.vmem %s1, 6
  %v1068 = vld [vmem:[%s1067] ss:$8 sm:$0xf]
  %v1069 = vld [vmem:[%s1067] ss:$8 sm:$0xf0]
  %v1070 = vor.u32 %v1068, %v1069
  %s1071 = scalar_lea.vmem %s1, 70
  %v1072 = vld [vmem:[%s1071] ss:$8 sm:$0x3]
  %v1075 = vlaneseq
  %v1076 = vshrl.u32 %v1075, 7
  %v1077 = vsub.s32 0, %v1076
  %v1078 = vrot.slane %v1070, %v1077
  %v1079 = vlaneseq
  %v1080 = vshrl.u32 %v1079, 7
  %v1081 = vsub.s32 1, %v1080
  %v1082 = vrot.slane %v1070, %v1081
  %v1083 = vlaneseq
  %v1084 = vshrl.u32 %v1083, 7
  %v1085 = vsub.s32 2, %v1084
  %v1086 = vrot.slane %v1070, %v1085
  %v1087 = vlaneseq
  %v1088 = vshrl.u32 %v1087, 7
  %v1089 = vsub.s32 3, %v1088
  %v1090 = vrot.slane %v1070, %v1089
  %v1091 = vlaneseq
  %v1092 = vshrl.u32 %v1091, 7
  %v1093 = vsub.s32 4, %v1092
  %v1094 = vrot.slane %v1070, %v1093
  %v1095 = vlaneseq
  %v1096 = vshrl.u32 %v1095, 7
  %v1097 = vsub.s32 5, %v1096
  %v1098 = vrot.slane %v1070, %v1097
  %v1099 = vlaneseq
  %v1100 = vshrl.u32 %v1099, 7
  %v1101 = vsub.s32 6, %v1100
  %v1102 = vrot.slane %v1070, %v1101
  %v1103 = vlaneseq
  %v1104 = vshrl.u32 %v1103, 7
  %v1105 = vsub.s32 7, %v1104
  %v1106 = vrot.slane %v1070, %v1105
  %v1107 = vlaneseq
  %v1108 = vshrl.u32 %v1107, 7
  %v1109 = vsub.s32 0, %v1108
  %v1110 = vrot.slane %v1072, %v1109
  %v1111 = vlaneseq
  %v1112 = vshrl.u32 %v1111, 7
  %v1113 = vsub.s32 1, %v1112
  %v1114 = vrot.slane %v1072, %v1113
  %v1125 = vmul.f32 %v1057, %v1078
  %v1126 = vmul.f32 %v1058, %v1082
  %v1127 = vmul.f32 %v1059, %v1086
  %v1128 = vmul.f32 %v1060, %v1090
  %v1129 = vmul.f32 %v1061, %v1094
  %v1130 = vmul.f32 %v1062, %v1098
  %v1131 = vmul.f32 %v1063, %v1102
  %v1132 = vmul.f32 %v1064, %v1106
  %v1133 = vmul.f32 %v1065, %v1110
  %v1134 = vmul.f32 %v1066, %v1114
  %s1135 = scalar_lea.vmem %s0, 7
  %v1136 = vld [vmem:[%s1135] ss:$8 sm:$0xf]
  %v1137 = vld [vmem:[%s1135] ss:$8 sm:$0xf0]
  %v1138 = vor.u32 %v1136, %v1137
  %s1139 = scalar_lea.vmem %s0, 71
  %v1140 = vld [vmem:[%s1139] ss:$8 sm:$0x3]
  %v1143 = vlaneseq
  %v1144 = vshrl.u32 %v1143, 7
  %v1145 = vsub.s32 0, %v1144
  %v1146 = vrot.slane %v1138, %v1145
  %v1147 = vlaneseq
  %v1148 = vshrl.u32 %v1147, 7
  %v1149 = vsub.s32 1, %v1148
  %v1150 = vrot.slane %v1138, %v1149
  %v1151 = vlaneseq
  %v1152 = vshrl.u32 %v1151, 7
  %v1153 = vsub.s32 2, %v1152
  %v1154 = vrot.slane %v1138, %v1153
  %v1155 = vlaneseq
  %v1156 = vshrl.u32 %v1155, 7
  %v1157 = vsub.s32 3, %v1156
  %v1158 = vrot.slane %v1138, %v1157
  %v1159 = vlaneseq
  %v1160 = vshrl.u32 %v1159, 7
  %v1161 = vsub.s32 4, %v1160
  %v1162 = vrot.slane %v1138, %v1161
  %v1163 = vlaneseq
  %v1164 = vshrl.u32 %v1163, 7
  %v1165 = vsub.s32 5, %v1164
  %v1166 = vrot.slane %v1138, %v1165
  %v1167 = vlaneseq
  %v1168 = vshrl.u32 %v1167, 7
  %v1169 = vsub.s32 6, %v1168
  %v1170 = vrot.slane %v1138, %v1169
  %v1171 = vlaneseq
  %v1172 = vshrl.u32 %v1171, 7
  %v1173 = vsub.s32 7, %v1172
  %v1174 = vrot.slane %v1138, %v1173
  %v1175 = vlaneseq
  %v1176 = vshrl.u32 %v1175, 7
  %v1177 = vsub.s32 0, %v1176
  %v1178 = vrot.slane %v1140, %v1177
  %v1179 = vlaneseq
  %v1180 = vshrl.u32 %v1179, 7
  %v1181 = vsub.s32 1, %v1180
  %v1182 = vrot.slane %v1140, %v1181
  %v1193 = vmul.f32 %v1146, %v95
  %v1194 = vmul.f32 %v1150, %v95
  %v1195 = vmul.f32 %v1154, %v95
  %v1196 = vmul.f32 %v1158, %v95
  %v1197 = vmul.f32 %v1162, %v95
  %v1198 = vmul.f32 %v1166, %v95
  %v1199 = vmul.f32 %v1170, %v95
  %v1200 = vmul.f32 %v1174, %v95
  %v1201 = vmul.f32 %v1178, %v95
  %v1202 = vmul.f32 %v1182, %v95
  %v1203 = vadd.f32 %v1193, %v110
  %v1204 = vadd.f32 %v1194, %v110
  %v1205 = vadd.f32 %v1195, %v110
  %v1206 = vadd.f32 %v1196, %v110
  %v1207 = vadd.f32 %v1197, %v110
  %v1208 = vadd.f32 %v1198, %v110
  %v1209 = vadd.f32 %v1199, %v110
  %v1210 = vadd.f32 %v1200, %v110
  %v1211 = vadd.f32 %v1201, %v110
  %v1212 = vadd.f32 %v1202, %v110
  %v1213 = vmax.f32 %v1203, 0.0
  %v1214 = vmax.f32 %v1204, 0.0
  %v1215 = vmax.f32 %v1205, 0.0
  %v1216 = vmax.f32 %v1206, 0.0
  %v1217 = vmax.f32 %v1207, 0.0
  %v1218 = vmax.f32 %v1208, 0.0
  %v1219 = vmax.f32 %v1209, 0.0
  %v1220 = vmax.f32 %v1210, 0.0
  %v1221 = vmax.f32 %v1211, 0.0
  %v1222 = vmax.f32 %v1212, 0.0
  %s1223 = scalar_lea.vmem %s1, 7
  %v1224 = vld [vmem:[%s1223] ss:$8 sm:$0xf]
  %v1225 = vld [vmem:[%s1223] ss:$8 sm:$0xf0]
  %v1226 = vor.u32 %v1224, %v1225
  %s1227 = scalar_lea.vmem %s1, 71
  %v1228 = vld [vmem:[%s1227] ss:$8 sm:$0x3]
  %v1231 = vlaneseq
  %v1232 = vshrl.u32 %v1231, 7
  %v1233 = vsub.s32 0, %v1232
  %v1234 = vrot.slane %v1226, %v1233
  %v1235 = vlaneseq
  %v1236 = vshrl.u32 %v1235, 7
  %v1237 = vsub.s32 1, %v1236
  %v1238 = vrot.slane %v1226, %v1237
  %v1239 = vlaneseq
  %v1240 = vshrl.u32 %v1239, 7
  %v1241 = vsub.s32 2, %v1240
  %v1242 = vrot.slane %v1226, %v1241
  %v1243 = vlaneseq
  %v1244 = vshrl.u32 %v1243, 7
  %v1245 = vsub.s32 3, %v1244
  %v1246 = vrot.slane %v1226, %v1245
  %v1247 = vlaneseq
  %v1248 = vshrl.u32 %v1247, 7
  %v1249 = vsub.s32 4, %v1248
  %v1250 = vrot.slane %v1226, %v1249
  %v1251 = vlaneseq
  %v1252 = vshrl.u32 %v1251, 7
  %v1253 = vsub.s32 5, %v1252
  %v1254 = vrot.slane %v1226, %v1253
  %v1255 = vlaneseq
  %v1256 = vshrl.u32 %v1255, 7
  %v1257 = vsub.s32 6, %v1256
  %v1258 = vrot.slane %v1226, %v1257
  %v1259 = vlaneseq
  %v1260 = vshrl.u32 %v1259, 7
  %v1261 = vsub.s32 7, %v1260
  %v1262 = vrot.slane %v1226, %v1261
  %v1263 = vlaneseq
  %v1264 = vshrl.u32 %v1263, 7
  %v1265 = vsub.s32 0, %v1264
  %v1266 = vrot.slane %v1228, %v1265
  %v1267 = vlaneseq
  %v1268 = vshrl.u32 %v1267, 7
  %v1269 = vsub.s32 1, %v1268
  %v1270 = vrot.slane %v1228, %v1269
  %v1281 = vmul.f32 %v1213, %v1234
  %v1282 = vmul.f32 %v1214, %v1238
  %v1283 = vmul.f32 %v1215, %v1242
  %v1284 = vmul.f32 %v1216, %v1246
  %v1285 = vmul.f32 %v1217, %v1250
  %v1286 = vmul.f32 %v1218, %v1254
  %v1287 = vmul.f32 %v1219, %v1258
  %v1288 = vmul.f32 %v1220, %v1262
  %v1289 = vmul.f32 %v1221, %v1266
  %v1290 = vmul.f32 %v1222, %v1270
  %s1291 = scalar_lea.vmem %s0, 80
  %v1292 = vld [vmem:[%s1291] ss:$8 sm:$0xf]
  %v1293 = vld [vmem:[%s1291] ss:$8 sm:$0xf0]
  %v1294 = vor.u32 %v1292, %v1293
  %s1295 = scalar_lea.vmem %s0, 144
  %v1296 = vld [vmem:[%s1295] ss:$8 sm:$0x3]
  %v1299 = vlaneseq
  %v1300 = vshrl.u32 %v1299, 7
  %v1301 = vsub.s32 0, %v1300
  %v1302 = vrot.slane %v1294, %v1301
  %v1303 = vlaneseq
  %v1304 = vshrl.u32 %v1303, 7
  %v1305 = vsub.s32 1, %v1304
  %v1306 = vrot.slane %v1294, %v1305
  %v1307 = vlaneseq
  %v1308 = vshrl.u32 %v1307, 7
  %v1309 = vsub.s32 2, %v1308
  %v1310 = vrot.slane %v1294, %v1309
  %v1311 = vlaneseq
  %v1312 = vshrl.u32 %v1311, 7
  %v1313 = vsub.s32 3, %v1312
  %v1314 = vrot.slane %v1294, %v1313
  %v1315 = vlaneseq
  %v1316 = vshrl.u32 %v1315, 7
  %v1317 = vsub.s32 4, %v1316
  %v1318 = vrot.slane %v1294, %v1317
  %v1319 = vlaneseq
  %v1320 = vshrl.u32 %v1319, 7
  %v1321 = vsub.s32 5, %v1320
  %v1322 = vrot.slane %v1294, %v1321
  %v1323 = vlaneseq
  %v1324 = vshrl.u32 %v1323, 7
  %v1325 = vsub.s32 6, %v1324
  %v1326 = vrot.slane %v1294, %v1325
  %v1327 = vlaneseq
  %v1328 = vshrl.u32 %v1327, 7
  %v1329 = vsub.s32 7, %v1328
  %v1330 = vrot.slane %v1294, %v1329
  %v1331 = vlaneseq
  %v1332 = vshrl.u32 %v1331, 7
  %v1333 = vsub.s32 0, %v1332
  %v1334 = vrot.slane %v1296, %v1333
  %v1335 = vlaneseq
  %v1336 = vshrl.u32 %v1335, 7
  %v1337 = vsub.s32 1, %v1336
  %v1338 = vrot.slane %v1296, %v1337
  %v1349 = vmul.f32 %v1302, %v95
  %v1350 = vmul.f32 %v1306, %v95
  %v1351 = vmul.f32 %v1310, %v95
  %v1352 = vmul.f32 %v1314, %v95
  %v1353 = vmul.f32 %v1318, %v95
  %v1354 = vmul.f32 %v1322, %v95
  %v1355 = vmul.f32 %v1326, %v95
  %v1356 = vmul.f32 %v1330, %v95
  %v1357 = vmul.f32 %v1334, %v95
  %v1358 = vmul.f32 %v1338, %v95
  %v1359 = vadd.f32 %v1349, %v110
  %v1360 = vadd.f32 %v1350, %v110
  %v1361 = vadd.f32 %v1351, %v110
  %v1362 = vadd.f32 %v1352, %v110
  %v1363 = vadd.f32 %v1353, %v110
  %v1364 = vadd.f32 %v1354, %v110
  %v1365 = vadd.f32 %v1355, %v110
  %v1366 = vadd.f32 %v1356, %v110
  %v1367 = vadd.f32 %v1357, %v110
  %v1368 = vadd.f32 %v1358, %v110
  %v1369 = vmax.f32 %v1359, 0.0
  %v1370 = vmax.f32 %v1360, 0.0
  %v1371 = vmax.f32 %v1361, 0.0
  %v1372 = vmax.f32 %v1362, 0.0
  %v1373 = vmax.f32 %v1363, 0.0
  %v1374 = vmax.f32 %v1364, 0.0
  %v1375 = vmax.f32 %v1365, 0.0
  %v1376 = vmax.f32 %v1366, 0.0
  %v1377 = vmax.f32 %v1367, 0.0
  %v1378 = vmax.f32 %v1368, 0.0
  %s1379 = scalar_lea.vmem %s1, 80
  %v1380 = vld [vmem:[%s1379] ss:$8 sm:$0xf]
  %v1381 = vld [vmem:[%s1379] ss:$8 sm:$0xf0]
  %v1382 = vor.u32 %v1380, %v1381
  %s1383 = scalar_lea.vmem %s1, 144
  %v1384 = vld [vmem:[%s1383] ss:$8 sm:$0x3]
  %v1387 = vlaneseq
  %v1388 = vshrl.u32 %v1387, 7
  %v1389 = vsub.s32 0, %v1388
  %v1390 = vrot.slane %v1382, %v1389
  %v1391 = vlaneseq
  %v1392 = vshrl.u32 %v1391, 7
  %v1393 = vsub.s32 1, %v1392
  %v1394 = vrot.slane %v1382, %v1393
  %v1395 = vlaneseq
  %v1396 = vshrl.u32 %v1395, 7
  %v1397 = vsub.s32 2, %v1396
  %v1398 = vrot.slane %v1382, %v1397
  %v1399 = vlaneseq
  %v1400 = vshrl.u32 %v1399, 7
  %v1401 = vsub.s32 3, %v1400
  %v1402 = vrot.slane %v1382, %v1401
  %v1403 = vlaneseq
  %v1404 = vshrl.u32 %v1403, 7
  %v1405 = vsub.s32 4, %v1404
  %v1406 = vrot.slane %v1382, %v1405
  %v1407 = vlaneseq
  %v1408 = vshrl.u32 %v1407, 7
  %v1409 = vsub.s32 5, %v1408
  %v1410 = vrot.slane %v1382, %v1409
  %v1411 = vlaneseq
  %v1412 = vshrl.u32 %v1411, 7
  %v1413 = vsub.s32 6, %v1412
  %v1414 = vrot.slane %v1382, %v1413
  %v1415 = vlaneseq
  %v1416 = vshrl.u32 %v1415, 7
  %v1417 = vsub.s32 7, %v1416
  %v1418 = vrot.slane %v1382, %v1417
  %v1419 = vlaneseq
  %v1420 = vshrl.u32 %v1419, 7
  %v1421 = vsub.s32 0, %v1420
  %v1422 = vrot.slane %v1384, %v1421
  %v1423 = vlaneseq
  %v1424 = vshrl.u32 %v1423, 7
  %v1425 = vsub.s32 1, %v1424
  %v1426 = vrot.slane %v1384, %v1425
  %v1437 = vmul.f32 %v1369, %v1390
  %v1438 = vmul.f32 %v1370, %v1394
  %v1439 = vmul.f32 %v1371, %v1398
  %v1440 = vmul.f32 %v1372, %v1402
  %v1441 = vmul.f32 %v1373, %v1406
  %v1442 = vmul.f32 %v1374, %v1410
  %v1443 = vmul.f32 %v1375, %v1414
  %v1444 = vmul.f32 %v1376, %v1418
  %v1445 = vmul.f32 %v1377, %v1422
  %v1446 = vmul.f32 %v1378, %v1426
  %v1447 = vld [vmem:[%s4] sm:$0xff]
  %v1448 = vld [vmem:[%s5] sm:$0xff]
  %1450 = vset.pattern.permute.xlu0 0
  %1451 = vperm.xlu0 %1450, %v1448
  %v1452 = vpop.permute.xlu0 %1451
  %vm1454 = vcmask 588800
  %v1456 = vsel %vm1454, %v1447, 0
  %1458 = vmatprep.subr.mxu0 %v190
  %1459 = vmatpush1.msra.mxu0 %v189
  %1460 = vmatprep.subr.mxu0 %v346
  %1461 = vmatpush1.msra.mxu0 %v345
  %1462 = vmatprep.subr.mxu0 %v502
  %1463 = vmatpush1.msra.mxu0 %v501
  %1464 = vmatprep.subr.mxu0 %v658
  %1465 = vmatpush1.msra.mxu0 %v657
  %1466 = vmatprep.subr.mxu0 %v814
  %1467 = vmatpush1.msra.mxu0 %v813
  %1468 = vmatprep.subr.mxu0 %v970
  %1469 = vmatpush1.msra.mxu0 %v969
  %1470 = vmatprep.subr.mxu0 %v1126
  %1471 = vmatpush1.msra.mxu0 %v1125
  %1472 = vmatprep.subr.mxu0 %v1282
  %1473 = vmatpush1.msra.mxu0 %v1281
  %1474 = vmatprep.subr.mxu0 %v1438
  %1475 = vmatpush1.msra.mxu0 %v1437
  %1476 = vmatprep.subr.mxu0 0.0
  %1477 = vmatpush1.msra.mxu0 0.0
  %1478 = vmatprep.subr.mxu0 0.0
  %1479 = vmatpush1.msra.mxu0 0.0
  %1480 = vmatprep.subr.mxu0 0.0
  %1481 = vmatpush1.msra.mxu0 0.0
  %1482 = vmatprep.subr.mxu0 0.0
  %1483 = vmatpush1.msra.mxu0 0.0
  %1484 = vmatprep.subr.mxu0 0.0
  %1485 = vmatpush1.msra.mxu0 0.0
  %1486 = vmatprep.subr.mxu0 0.0
  %1487 = vmatpush1.msra.mxu0 0.0
  %1488 = vmatprep.subr.mxu0 0.0
  %1489 = vmatpush1.msra.mxu0 0.0
  %1490 = vmatprep.subr.mxu0 0.0
  %1491 = vmatpush1.msra.mxu0 0.0
  %1492 = vmatprep.subr.mxu0 0.0
  %1493 = vmatpush1.msra.mxu0 0.0
  %1494 = vmatprep.subr.mxu0 0.0
  %1495 = vmatpush1.msra.mxu0 0.0
  %1496 = vmatprep.subr.mxu0 0.0
  %1497 = vmatpush1.msra.mxu0 0.0
  %1498 = vmatprep.subr.mxu0 0.0
  %1499 = vmatpush1.msra.mxu0 0.0
  %1500 = vmatprep.subr.mxu0 0.0
  %1501 = vmatpush1.msra.mxu0 0.0
  %1502 = vmatprep.subr.mxu0 0.0
  %1503 = vmatpush1.msra.mxu0 0.0
  %1504 = vmatprep.subr.mxu0 0.0
  %1505 = vmatpush1.msra.mxu0 0.0
  %1506 = vmatprep.subr.mxu0 0.0
  %1507 = vmatpush1.msra.mxu0 0.0
  %1508 = vmatprep.subr.mxu0 0.0
  %1509 = vmatpush1.msra.mxu0 0.0
  %1510 = vmatprep.subr.mxu0 0.0
  %1511 = vmatpush1.msra.mxu0 0.0
  %1512 = vmatprep.subr.mxu0 0.0
  %1513 = vmatpush1.msra.mxu0 0.0
  %1514 = vmatprep.subr.mxu0 0.0
  %1515 = vmatpush1.msra.mxu0 0.0
  %1516 = vmatprep.subr.mxu0 0.0
  %1517 = vmatpush1.msra.mxu0 0.0
  %1518 = vmatprep.subr.mxu0 0.0
  %1519 = vmatpush1.msra.mxu0 0.0
  %1520 = vmatprep.subr.mxu0 0.0
  %1521 = vmatpush1.msra.mxu0 0.0
  %1522 = vmatprep.mubr.f32.mxu0 0.0
  %1523 = vmatmul.mubr.f32.gmra.mrb[0].mxu0 %v1456
  %v1524 = vpop.f32.mrb[0].mxu0
  %v1525 = vadd.f32 %v1452, %v1524
  %v1526 = vpop.f32.mrb[0].mxu0
  %v1527 = vadd.f32 %v1452, %v1526
  %1528 = vdwg.mxu0
  %1529 = vmatprep.subr.mxu0 %v192
  %1530 = vmatpush1.msra.mxu0 %v191
  %1531 = vmatprep.subr.mxu0 %v348
  %1532 = vmatpush1.msra.mxu0 %v347
  %1533 = vmatprep.subr.mxu0 %v504
  %1534 = vmatpush1.msra.mxu0 %v503
  %1535 = vmatprep.subr.mxu0 %v660
  %1536 = vmatpush1.msra.mxu0 %v659
  %1537 = vmatprep.subr.mxu0 %v816
  %1538 = vmatpush1.msra.mxu0 %v815
  %1539 = vmatprep.subr.mxu0 %v972
  %1540 = vmatpush1.msra.mxu0 %v971
  %1541 = vmatprep.subr.mxu0 %v1128
  %1542 = vmatpush1.msra.mxu0 %v1127
  %1543 = vmatprep.subr.mxu0 %v1284
  %1544 = vmatpush1.msra.mxu0 %v1283
  %1545 = vmatprep.subr.mxu0 %v1440
  %1546 = vmatpush1.msra.mxu0 %v1439
  %1547 = vmatprep.subr.mxu0 0.0
  %1548 = vmatpush1.msra.mxu0 0.0
  %1549 = vmatprep.subr.mxu0 0.0
  %1550 = vmatpush1.msra.mxu0 0.0
  %1551 = vmatprep.subr.mxu0 0.0
  %1552 = vmatpush1.msra.mxu0 0.0
  %1553 = vmatprep.subr.mxu0 0.0
  %1554 = vmatpush1.msra.mxu0 0.0
  %1555 = vmatprep.subr.mxu0 0.0
  %1556 = vmatpush1.msra.mxu0 0.0
  %1557 = vmatprep.subr.mxu0 0.0
  %1558 = vmatpush1.msra.mxu0 0.0
  %1559 = vmatprep.subr.mxu0 0.0
  %1560 = vmatpush1.msra.mxu0 0.0
  %1561 = vmatprep.subr.mxu0 0.0
  %1562 = vmatpush1.msra.mxu0 0.0
  %1563 = vmatprep.subr.mxu0 0.0
  %1564 = vmatpush1.msra.mxu0 0.0
  %1565 = vmatprep.subr.mxu0 0.0
  %1566 = vmatpush1.msra.mxu0 0.0
  %1567 = vmatprep.subr.mxu0 0.0
  %1568 = vmatpush1.msra.mxu0 0.0
  %1569 = vmatprep.subr.mxu0 0.0
  %1570 = vmatpush1.msra.mxu0 0.0
  %1571 = vmatprep.subr.mxu0 0.0
  %1572 = vmatpush1.msra.mxu0 0.0
  %1573 = vmatprep.subr.mxu0 0.0
  %1574 = vmatpush1.msra.mxu0 0.0
  %1575 = vmatprep.subr.mxu0 0.0
  %1576 = vmatpush1.msra.mxu0 0.0
  %1577 = vmatprep.subr.mxu0 0.0
  %1578 = vmatpush1.msra.mxu0 0.0
  %1579 = vmatprep.subr.mxu0 0.0
  %1580 = vmatpush1.msra.mxu0 0.0
  %1581 = vmatprep.subr.mxu0 0.0
  %1582 = vmatpush1.msra.mxu0 0.0
  %1583 = vmatprep.subr.mxu0 0.0
  %1584 = vmatpush1.msra.mxu0 0.0
  %1585 = vmatprep.subr.mxu0 0.0
  %1586 = vmatpush1.msra.mxu0 0.0
  %1587 = vmatprep.subr.mxu0 0.0
  %1588 = vmatpush1.msra.mxu0 0.0
  %1589 = vmatprep.subr.mxu0 0.0
  %1590 = vmatpush1.msra.mxu0 0.0
  %1591 = vmatprep.subr.mxu0 0.0
  %1592 = vmatpush1.msra.mxu0 0.0
  %1593 = vmatprep.mubr.f32.mxu0 0.0
  %1594 = vmatmul.mubr.f32.gmra.mrb[0].mxu0 %v1456
  %v1595 = vpop.f32.mrb[0].mxu0
  %v1596 = vadd.f32 %v1452, %v1595
  %v1597 = vpop.f32.mrb[0].mxu0
  %v1598 = vadd.f32 %v1452, %v1597
  %1599 = vdwg.mxu0
  %1600 = vmatprep.subr.mxu0 %v194
  %1601 = vmatpush1.msra.mxu0 %v193
  %1602 = vmatprep.subr.mxu0 %v350
  %1603 = vmatpush1.msra.mxu0 %v349
  %1604 = vmatprep.subr.mxu0 %v506
  %1605 = vmatpush1.msra.mxu0 %v505
  %1606 = vmatprep.subr.mxu0 %v662
  %1607 = vmatpush1.msra.mxu0 %v661
  %1608 = vmatprep.subr.mxu0 %v818
  %1609 = vmatpush1.msra.mxu0 %v817
  %1610 = vmatprep.subr.mxu0 %v974
  %1611 = vmatpush1.msra.mxu0 %v973
  %1612 = vmatprep.subr.mxu0 %v1130
  %1613 = vmatpush1.msra.mxu0 %v1129
  %1614 = vmatprep.subr.mxu0 %v1286
  %1615 = vmatpush1.msra.mxu0 %v1285
  %1616 = vmatprep.subr.mxu0 %v1442
  %1617 = vmatpush1.msra.mxu0 %v1441
  %1618 = vmatprep.subr.mxu0 0.0
  %1619 = vmatpush1.msra.mxu0 0.0
  %1620 = vmatprep.subr.mxu0 0.0
  %1621 = vmatpush1.msra.mxu0 0.0
  %1622 = vmatprep.subr.mxu0 0.0
  %1623 = vmatpush1.msra.mxu0 0.0
  %1624 = vmatprep.subr.mxu0 0.0
  %1625 = vmatpush1.msra.mxu0 0.0
  %1626 = vmatprep.subr.mxu0 0.0
  %1627 = vmatpush1.msra.mxu0 0.0
  %1628 = vmatprep.subr.mxu0 0.0
  %1629 = vmatpush1.msra.mxu0 0.0
  %1630 = vmatprep.subr.mxu0 0.0
  %1631 = vmatpush1.msra.mxu0 0.0
  %1632 = vmatprep.subr.mxu0 0.0
  %1633 = vmatpush1.msra.mxu0 0.0
  %1634 = vmatprep.subr.mxu0 0.0
  %1635 = vmatpush1.msra.mxu0 0.0
  %1636 = vmatprep.subr.mxu0 0.0
  %1637 = vmatpush1.msra.mxu0 0.0
  %1638 = vmatprep.subr.mxu0 0.0
  %1639 = vmatpush1.msra.mxu0 0.0
  %1640 = vmatprep.subr.mxu0 0.0
  %1641 = vmatpush1.msra.mxu0 0.0
  %1642 = vmatprep.subr.mxu0 0.0
  %1643 = vmatpush1.msra.mxu0 0.0
  %1644 = vmatprep.subr.mxu0 0.0
  %1645 = vmatpush1.msra.mxu0 0.0
  %1646 = vmatprep.subr.mxu0 0.0
  %1647 = vmatpush1.msra.mxu0 0.0
  %1648 = vmatprep.subr.mxu0 0.0
  %1649 = vmatpush1.msra.mxu0 0.0
  %1650 = vmatprep.subr.mxu0 0.0
  %1651 = vmatpush1.msra.mxu0 0.0
  %1652 = vmatprep.subr.mxu0 0.0
  %1653 = vmatpush1.msra.mxu0 0.0
  %1654 = vmatprep.subr.mxu0 0.0
  %1655 = vmatpush1.msra.mxu0 0.0
  %1656 = vmatprep.subr.mxu0 0.0
  %1657 = vmatpush1.msra.mxu0 0.0
  %1658 = vmatprep.subr.mxu0 0.0
  %1659 = vmatpush1.msra.mxu0 0.0
  %1660 = vmatprep.subr.mxu0 0.0
  %1661 = vmatpush1.msra.mxu0 0.0
  %1662 = vmatprep.subr.mxu0 0.0
  %1663 = vmatpush1.msra.mxu0 0.0
  %1664 = vmatprep.mubr.f32.mxu0 0.0
  %1665 = vmatmul.mubr.f32.gmra.mrb[0].mxu0 %v1456
  %v1666 = vpop.f32.mrb[0].mxu0
  %v1667 = vadd.f32 %v1452, %v1666
  %v1668 = vpop.f32.mrb[0].mxu0
  %v1669 = vadd.f32 %v1452, %v1668
  %1670 = vdwg.mxu0
  %1671 = vmatprep.subr.mxu0 %v196
  %1672 = vmatpush1.msra.mxu0 %v195
  %1673 = vmatprep.subr.mxu0 %v352
  %1674 = vmatpush1.msra.mxu0 %v351
  %1675 = vmatprep.subr.mxu0 %v508
  %1676 = vmatpush1.msra.mxu0 %v507
  %1677 = vmatprep.subr.mxu0 %v664
  %1678 = vmatpush1.msra.mxu0 %v663
  %1679 = vmatprep.subr.mxu0 %v820
  %1680 = vmatpush1.msra.mxu0 %v819
  %1681 = vmatprep.subr.mxu0 %v976
  %1682 = vmatpush1.msra.mxu0 %v975
  %1683 = vmatprep.subr.mxu0 %v1132
  %1684 = vmatpush1.msra.mxu0 %v1131
  %1685 = vmatprep.subr.mxu0 %v1288
  %1686 = vmatpush1.msra.mxu0 %v1287
  %1687 = vmatprep.subr.mxu0 %v1444
  %1688 = vmatpush1.msra.mxu0 %v1443
  %1689 = vmatprep.subr.mxu0 0.0
  %1690 = vmatpush1.msra.mxu0 0.0
  %1691 = vmatprep.subr.mxu0 0.0
  %1692 = vmatpush1.msra.mxu0 0.0
  %1693 = vmatprep.subr.mxu0 0.0
  %1694 = vmatpush1.msra.mxu0 0.0
  %1695 = vmatprep.subr.mxu0 0.0
  %1696 = vmatpush1.msra.mxu0 0.0
  %1697 = vmatprep.subr.mxu0 0.0
  %1698 = vmatpush1.msra.mxu0 0.0
  %1699 = vmatprep.subr.mxu0 0.0
  %1700 = vmatpush1.msra.mxu0 0.0
  %1701 = vmatprep.subr.mxu0 0.0
  %1702 = vmatpush1.msra.mxu0 0.0
  %1703 = vmatprep.subr.mxu0 0.0
  %1704 = vmatpush1.msra.mxu0 0.0
  %1705 = vmatprep.subr.mxu0 0.0
  %1706 = vmatpush1.msra.mxu0 0.0
  %1707 = vmatprep.subr.mxu0 0.0
  %1708 = vmatpush1.msra.mxu0 0.0
  %1709 = vmatprep.subr.mxu0 0.0
  %1710 = vmatpush1.msra.mxu0 0.0
  %1711 = vmatprep.subr.mxu0 0.0
  %1712 = vmatpush1.msra.mxu0 0.0
  %1713 = vmatprep.subr.mxu0 0.0
  %1714 = vmatpush1.msra.mxu0 0.0
  %1715 = vmatprep.subr.mxu0 0.0
  %1716 = vmatpush1.msra.mxu0 0.0
  %1717 = vmatprep.subr.mxu0 0.0
  %1718 = vmatpush1.msra.mxu0 0.0
  %1719 = vmatprep.subr.mxu0 0.0
  %1720 = vmatpush1.msra.mxu0 0.0
  %1721 = vmatprep.subr.mxu0 0.0
  %1722 = vmatpush1.msra.mxu0 0.0
  %1723 = vmatprep.subr.mxu0 0.0
  %1724 = vmatpush1.msra.mxu0 0.0
  %1725 = vmatprep.subr.mxu0 0.0
  %1726 = vmatpush1.msra.mxu0 0.0
  %1727 = vmatprep.subr.mxu0 0.0
  %1728 = vmatpush1.msra.mxu0 0.0
  %1729 = vmatprep.subr.mxu0 0.0
  %1730 = vmatpush1.msra.mxu0 0.0
  %1731 = vmatprep.subr.mxu0 0.0
  %1732 = vmatpush1.msra.mxu0 0.0
  %1733 = vmatprep.subr.mxu0 0.0
  %1734 = vmatpush1.msra.mxu0 0.0
  %1735 = vmatprep.mubr.f32.mxu0 0.0
  %1736 = vmatmul.mubr.f32.gmra.mrb[0].mxu0 %v1456
  %v1737 = vpop.f32.mrb[0].mxu0
  %v1738 = vadd.f32 %v1452, %v1737
  %v1739 = vpop.f32.mrb[0].mxu0
  %v1740 = vadd.f32 %v1452, %v1739
  %1741 = vdwg.mxu0
  %1742 = vmatprep.subr.mxu0 %v198
  %1743 = vmatpush1.msra.mxu0 %v197
  %1744 = vmatprep.subr.mxu0 %v354
  %1745 = vmatpush1.msra.mxu0 %v353
  %1746 = vmatprep.subr.mxu0 %v510
  %1747 = vmatpush1.msra.mxu0 %v509
  %1748 = vmatprep.subr.mxu0 %v666
  %1749 = vmatpush1.msra.mxu0 %v665
  %1750 = vmatprep.subr.mxu0 %v822
  %1751 = vmatpush1.msra.mxu0 %v821
  %1752 = vmatprep.subr.mxu0 %v978
  %1753 = vmatpush1.msra.mxu0 %v977
  %1754 = vmatprep.subr.mxu0 %v1134
  %1755 = vmatpush1.msra.mxu0 %v1133
  %1756 = vmatprep.subr.mxu0 %v1290
  %1757 = vmatpush1.msra.mxu0 %v1289
  %1758 = vmatprep.subr.mxu0 %v1446
  %1759 = vmatpush1.msra.mxu0 %v1445
  %1760 = vmatprep.subr.mxu0 0.0
  %1761 = vmatpush1.msra.mxu0 0.0
  %1762 = vmatprep.subr.mxu0 0.0
  %1763 = vmatpush1.msra.mxu0 0.0
  %1764 = vmatprep.subr.mxu0 0.0
  %1765 = vmatpush1.msra.mxu0 0.0
  %1766 = vmatprep.subr.mxu0 0.0
  %1767 = vmatpush1.msra.mxu0 0.0
  %1768 = vmatprep.subr.mxu0 0.0
  %1769 = vmatpush1.msra.mxu0 0.0
  %1770 = vmatprep.subr.mxu0 0.0
  %1771 = vmatpush1.msra.mxu0 0.0
  %1772 = vmatprep.subr.mxu0 0.0
  %1773 = vmatpush1.msra.mxu0 0.0
  %1774 = vmatprep.subr.mxu0 0.0
  %1775 = vmatpush1.msra.mxu0 0.0
  %1776 = vmatprep.subr.mxu0 0.0
  %1777 = vmatpush1.msra.mxu0 0.0
  %1778 = vmatprep.subr.mxu0 0.0
  %1779 = vmatpush1.msra.mxu0 0.0
  %1780 = vmatprep.subr.mxu0 0.0
  %1781 = vmatpush1.msra.mxu0 0.0
  %1782 = vmatprep.subr.mxu0 0.0
  %1783 = vmatpush1.msra.mxu0 0.0
  %1784 = vmatprep.subr.mxu0 0.0
  %1785 = vmatpush1.msra.mxu0 0.0
  %1786 = vmatprep.subr.mxu0 0.0
  %1787 = vmatpush1.msra.mxu0 0.0
  %1788 = vmatprep.subr.mxu0 0.0
  %1789 = vmatpush1.msra.mxu0 0.0
  %1790 = vmatprep.subr.mxu0 0.0
  %1791 = vmatpush1.msra.mxu0 0.0
  %1792 = vmatprep.subr.mxu0 0.0
  %1793 = vmatpush1.msra.mxu0 0.0
  %1794 = vmatprep.subr.mxu0 0.0
  %1795 = vmatpush1.msra.mxu0 0.0
  %1796 = vmatprep.subr.mxu0 0.0
  %1797 = vmatpush1.msra.mxu0 0.0
  %1798 = vmatprep.subr.mxu0 0.0
  %1799 = vmatpush1.msra.mxu0 0.0
  %1800 = vmatprep.subr.mxu0 0.0
  %1801 = vmatpush1.msra.mxu0 0.0
  %1802 = vmatprep.subr.mxu0 0.0
  %1803 = vmatpush1.msra.mxu0 0.0
  %1804 = vmatprep.subr.mxu0 0.0
  %1805 = vmatpush1.msra.mxu0 0.0
  %1806 = vmatprep.mubr.f32.mxu0 0.0
  %1807 = vmatmul.mubr.f32.gmra.mrb[0].mxu0 %v1456
  %v1808 = vpop.f32.mrb[0].mxu0
  %v1809 = vadd.f32 %v1452, %v1808
  %v1810 = vpop.f32.mrb[0].mxu0
  %v1811 = vadd.f32 %v1452, %v1810
  %1812 = vdwg.mxu0
  %v1813 = vmax.f32 %v1525, 0.0
  %v1814 = vmax.f32 %v1527, 0.0
  %v1815 = vmax.f32 %v1596, 0.0
  %v1816 = vmax.f32 %v1598, 0.0
  %v1817 = vmax.f32 %v1667, 0.0
  %v1818 = vmax.f32 %v1669, 0.0
  %v1819 = vmax.f32 %v1738, 0.0
  %v1820 = vmax.f32 %v1740, 0.0
  %v1821 = vmax.f32 %v1809, 0.0
  %v1822 = vmax.f32 %v1811, 0.0
  %v1823 = vadd.f32 %v1813, %v678
  %v1824 = vadd.f32 %v1814, %v682
  %v1825 = vadd.f32 %v1815, %v686
  %v1826 = vadd.f32 %v1816, %v690
  %v1827 = vadd.f32 %v1817, %v694
  %v1828 = vadd.f32 %v1818, %v698
  %v1829 = vadd.f32 %v1819, %v702
  %v1830 = vadd.f32 %v1820, %v706
  %v1831 = vadd.f32 %v1821, %v710
  %v1832 = vadd.f32 %v1822, %v714
  %v1833 = vld [vmem:[%s6] sm:$0xff]
  %v1834 = vld [vmem:[%s6 + $0x8] sm:$0xff]
  %v1835 = vld [vmem:[%s6 + $0x10] sm:$0xff]
  %v1836 = vld [vmem:[%s6 + $0x18] sm:$0xff]
  %v1837 = vld [vmem:[%s6 + $0x20] sm:$0xff]
  %v1838 = vld [vmem:[%s6 + $0x28] sm:$0xff]
  %v1839 = vld [vmem:[%s6 + $0x30] sm:$0xff]
  %v1840 = vld [vmem:[%s6 + $0x38] sm:$0xff]
  %v1841 = vld [vmem:[%s6 + $0x40] sm:$0xff]
  %v1842 = vld [vmem:[%s6 + $0x48] sm:$0xff]
  %v1843 = vmul.f32 %v1823, %v1833
  %v1844 = vmul.f32 %v1824, %v1834
  %v1845 = vmul.f32 %v1825, %v1835
  %v1846 = vmul.f32 %v1826, %v1836
  %v1847 = vmul.f32 %v1827, %v1837
  %v1848 = vmul.f32 %v1828, %v1838
  %v1849 = vmul.f32 %v1829, %v1839
  %v1850 = vmul.f32 %v1830, %v1840
  %v1851 = vmul.f32 %v1831, %v1841
  %v1852 = vmul.f32 %v1832, %v1842
  %v1853 = vld [vmem:[%s7] sm:$0xff]
  %v1854 = vld [vmem:[%s7 + $0x8] sm:$0xff]
  %v1855 = vld [vmem:[%s7 + $0x10] sm:$0xff]
  %v1856 = vld [vmem:[%s7 + $0x18] sm:$0xff]
  %v1857 = vld [vmem:[%s7 + $0x20] sm:$0xff]
  %v1858 = vld [vmem:[%s7 + $0x28] sm:$0xff]
  %v1859 = vld [vmem:[%s7 + $0x30] sm:$0xff]
  %v1860 = vld [vmem:[%s7 + $0x38] sm:$0xff]
  %v1861 = vld [vmem:[%s7 + $0x40] sm:$0xff]
  %v1862 = vld [vmem:[%s7 + $0x48] sm:$0xff]
  %v1863 = vld [vmem:[%s7 + $0x50] sm:$0xff]
  %v1864 = vld [vmem:[%s7 + $0x58] sm:$0xff]
  %v1865 = vld [vmem:[%s7 + $0x60] sm:$0xff]
  %v1866 = vld [vmem:[%s7 + $0x68] sm:$0xff]
  %v1867 = vld [vmem:[%s7 + $0x70] sm:$0xff]
  %v1868 = vld [vmem:[%s7 + $0x78] sm:$0xff]
  %v1869 = vld [vmem:[%s7 + $0x80] sm:$0xff]
  %v1870 = vld [vmem:[%s7 + $0x88] sm:$0xff]
  %v1871 = vld [vmem:[%s7 + $0x90] sm:$0xff]
  %v1872 = vld [vmem:[%s7 + $0x98] sm:$0xff]
  %v1873 = vld [vmem:[%s7 + $0xa0] sm:$0xff]
  %v1874 = vld [vmem:[%s7 + $0xa8] sm:$0xff]
  %v1875 = vld [vmem:[%s7 + $0xb0] sm:$0xff]
  %v1876 = vld [vmem:[%s7 + $0xb8] sm:$0xff]
  %v1877 = vld [vmem:[%s7 + $0xc0] sm:$0xff]
  %v1878 = vld [vmem:[%s7 + $0xc8] sm:$0xff]
  %v1879 = vld [vmem:[%s7 + $0xd0] sm:$0xff]
  %v1880 = vld [vmem:[%s7 + $0xd8] sm:$0xff]
  %v1881 = vld [vmem:[%s7 + $0xe0] sm:$0xff]
  %v1882 = vld [vmem:[%s7 + $0xe8] sm:$0xff]
  %v1883 = vld [vmem:[%s7 + $0xf0] sm:$0xff]
  %v1884 = vld [vmem:[%s7 + $0xf8] sm:$0xff]
  %v1885 = vld [vmem:[%s7 + $0x100] sm:$0xff]
  %v1886 = vld [vmem:[%s7 + $0x108] sm:$0xff]
  %v1887 = vld [vmem:[%s7 + $0x110] sm:$0xff]
  %v1888 = vld [vmem:[%s7 + $0x118] sm:$0xff]
  %v1889 = vld [vmem:[%s7 + $0x120] sm:$0xff]
  %v1890 = vld [vmem:[%s7 + $0x128] sm:$0xff]
  %v1891 = vld [vmem:[%s7 + $0x130] sm:$0xff]
  %v1892 = vld [vmem:[%s7 + $0x138] sm:$0xff]
  %v1893 = vld [vmem:[%s7 + $0x140] sm:$0xff]
  %v1894 = vld [vmem:[%s7 + $0x148] sm:$0xff]
  %v1895 = vld [vmem:[%s7 + $0x150] sm:$0xff]
  %v1896 = vld [vmem:[%s7 + $0x158] sm:$0xff]
  %v1897 = vld [vmem:[%s7 + $0x160] sm:$0xff]
  %v1898 = vld [vmem:[%s7 + $0x168] sm:$0xff]
  %v1899 = vld [vmem:[%s7 + $0x170] sm:$0xff]
  %v1900 = vld [vmem:[%s7 + $0x178] sm:$0xff]
  %v1901 = vld [vmem:[%s7 + $0x180] sm:$0xff]
  %v1902 = vld [vmem:[%s7 + $0x188] sm:$0xff]
  %v1903 = vld [vmem:[%s7 + $0x190] sm:$0xff]
  %v1904 = vld [vmem:[%s7 + $0x198] sm:$0xff]
  %v1905 = vld [vmem:[%s7 + $0x1a0] sm:$0xff]
  %v1906 = vld [vmem:[%s7 + $0x1a8] sm:$0xff]
  %v1907 = vld [vmem:[%s7 + $0x1b0] sm:$0xff]
  %v1908 = vld [vmem:[%s7 + $0x1b8] sm:$0xff]
  %v1909 = vld [vmem:[%s7 + $0x1c0] sm:$0xff]
  %v1910 = vld [vmem:[%s7 + $0x1c8] sm:$0xff]
  %v1911 = vld [vmem:[%s7 + $0x1d0] sm:$0xff]
  %v1912 = vld [vmem:[%s7 + $0x1d8] sm:$0xff]
  %v1913 = vld [vmem:[%s7 + $0x1e0] sm:$0xff]
  %v1914 = vld [vmem:[%s7 + $0x1e8] sm:$0xff]
  %v1915 = vld [vmem:[%s7 + $0x1f0] sm:$0xff]
  %v1916 = vld [vmem:[%s7 + $0x1f8] sm:$0xff]
  %v1917 = vld [vmem:[%s7 + $0x200] sm:$0xff]
  %v1918 = vld [vmem:[%s7 + $0x208] sm:$0xff]
  %v1919 = vld [vmem:[%s7 + $0x210] sm:$0xff]
  %v1920 = vld [vmem:[%s7 + $0x218] sm:$0xff]
  %v1921 = vld [vmem:[%s7 + $0x220] sm:$0xff]
  %v1922 = vld [vmem:[%s7 + $0x228] sm:$0xff]
  %v1923 = vld [vmem:[%s7 + $0x230] sm:$0xff]
  %v1924 = vld [vmem:[%s7 + $0x238] sm:$0xff]
  %v1925 = vld [vmem:[%s7 + $0x240] sm:$0xff]
  %v1926 = vld [vmem:[%s7 + $0x248] sm:$0xff]
  %v1927 = vld [vmem:[%s7 + $0x250] sm:$0xff]
  %v1928 = vld [vmem:[%s7 + $0x258] sm:$0xff]
  %v1929 = vld [vmem:[%s7 + $0x260] sm:$0xff]
  %v1930 = vld [vmem:[%s7 + $0x268] sm:$0xff]
  %v1931 = vld [vmem:[%s7 + $0x270] sm:$0xff]
  %v1932 = vld [vmem:[%s7 + $0x278] sm:$0xff]
  %v1933 = vld [vmem:[%s7 + $0x280] sm:$0xff]
  %v1934 = vld [vmem:[%s7 + $0x288] sm:$0xff]
  %v1935 = vld [vmem:[%s7 + $0x290] sm:$0xff]
  %v1936 = vld [vmem:[%s7 + $0x298] sm:$0xff]
  %v1937 = vld [vmem:[%s7 + $0x2a0] sm:$0xff]
  %v1938 = vld [vmem:[%s7 + $0x2a8] sm:$0xff]
  %v1939 = vld [vmem:[%s7 + $0x2b0] sm:$0xff]
  %v1940 = vld [vmem:[%s7 + $0x2b8] sm:$0xff]
  %v1941 = vld [vmem:[%s7 + $0x2c0] sm:$0xff]
  %v1942 = vld [vmem:[%s7 + $0x2c8] sm:$0xff]
  %v1943 = vld [vmem:[%s7 + $0x2d0] sm:$0xff]
  %v1944 = vld [vmem:[%s7 + $0x2d8] sm:$0xff]
  %v1945 = vld [vmem:[%s7 + $0x2e0] sm:$0xff]
  %v1946 = vld [vmem:[%s7 + $0x2e8] sm:$0xff]
  %v1947 = vld [vmem:[%s7 + $0x2f0] sm:$0xff]
  %v1948 = vld [vmem:[%s7 + $0x2f8] sm:$0xff]
  %v1949 = vld [vmem:[%s7 + $0x300] sm:$0xff]
  %v1950 = vld [vmem:[%s7 + $0x308] sm:$0xff]
  %v1951 = vld [vmem:[%s7 + $0x310] sm:$0xff]
  %v1952 = vld [vmem:[%s7 + $0x318] sm:$0xff]
  %v1953 = vld [vmem:[%s7 + $0x320] sm:$0xff]
  %v1954 = vld [vmem:[%s7 + $0x328] sm:$0xff]
  %v1955 = vld [vmem:[%s7 + $0x330] sm:$0xff]
  %v1956 = vld [vmem:[%s7 + $0x338] sm:$0xff]
  %v1957 = vld [vmem:[%s7 + $0x340] sm:$0xff]
  %v1958 = vld [vmem:[%s7 + $0x348] sm:$0xff]
  %v1959 = vld [vmem:[%s7 + $0x350] sm:$0xff]
  %v1960 = vld [vmem:[%s7 + $0x358] sm:$0xff]
  %v1961 = vld [vmem:[%s7 + $0x360] sm:$0xff]
  %v1962 = vld [vmem:[%s7 + $0x368] sm:$0xff]
  %v1963 = vld [vmem:[%s7 + $0x370] sm:$0xff]
  %v1964 = vld [vmem:[%s7 + $0x378] sm:$0xff]
  %v1965 = vld [vmem:[%s7 + $0x380] sm:$0xff]
  %v1966 = vld [vmem:[%s7 + $0x388] sm:$0xff]
  %v1967 = vld [vmem:[%s7 + $0x390] sm:$0xff]
  %v1968 = vld [vmem:[%s7 + $0x398] sm:$0xff]
  %v1969 = vld [vmem:[%s7 + $0x3a0] sm:$0xff]
  %v1970 = vld [vmem:[%s7 + $0x3a8] sm:$0xff]
  %v1971 = vld [vmem:[%s7 + $0x3b0] sm:$0xff]
  %v1972 = vld [vmem:[%s7 + $0x3b8] sm:$0xff]
  %v1973 = vld [vmem:[%s7 + $0x3c0] sm:$0xff]
  %v1974 = vld [vmem:[%s7 + $0x3c8] sm:$0xff]
  %v1975 = vld [vmem:[%s7 + $0x3d0] sm:$0xff]
  %v1976 = vld [vmem:[%s7 + $0x3d8] sm:$0xff]
  %v1977 = vld [vmem:[%s7 + $0x3e0] sm:$0xff]
  %v1978 = vld [vmem:[%s7 + $0x3e8] sm:$0xff]
  %v1979 = vld [vmem:[%s7 + $0x3f0] sm:$0xff]
  %v1980 = vld [vmem:[%s7 + $0x3f8] sm:$0xff]
  %v1981 = vld [vmem:[%s7 + $0x400] sm:$0xff]
  %v1982 = vld [vmem:[%s7 + $0x408] sm:$0xff]
  %v1983 = vld [vmem:[%s7 + $0x410] sm:$0xff]
  %v1984 = vld [vmem:[%s7 + $0x418] sm:$0xff]
  %v1985 = vld [vmem:[%s7 + $0x420] sm:$0xff]
  %v1986 = vld [vmem:[%s7 + $0x428] sm:$0xff]
  %v1987 = vld [vmem:[%s7 + $0x430] sm:$0xff]
  %v1988 = vld [vmem:[%s7 + $0x438] sm:$0xff]
  %v1989 = vld [vmem:[%s7 + $0x440] sm:$0xff]
  %v1990 = vld [vmem:[%s7 + $0x448] sm:$0xff]
  %v1991 = vld [vmem:[%s7 + $0x450] sm:$0xff]
  %v1992 = vld [vmem:[%s7 + $0x458] sm:$0xff]
  %v1993 = vld [vmem:[%s7 + $0x460] sm:$0xff]
  %v1994 = vld [vmem:[%s7 + $0x468] sm:$0xff]
  %v1995 = vld [vmem:[%s7 + $0x470] sm:$0xff]
  %v1996 = vld [vmem:[%s7 + $0x478] sm:$0xff]
  %v1997 = vld [vmem:[%s7 + $0x480] sm:$0xff]
  %v1998 = vld [vmem:[%s7 + $0x488] sm:$0xff]
  %v1999 = vld [vmem:[%s7 + $0x490] sm:$0xff]
  %v2000 = vld [vmem:[%s7 + $0x498] sm:$0xff]
  %v2001 = vld [vmem:[%s7 + $0x4a0] sm:$0xff]
  %v2002 = vld [vmem:[%s7 + $0x4a8] sm:$0xff]
  %v2003 = vld [vmem:[%s7 + $0x4b0] sm:$0xff]
  %v2004 = vld [vmem:[%s7 + $0x4b8] sm:$0xff]
  %v2005 = vld [vmem:[%s7 + $0x4c0] sm:$0xff]
  %v2006 = vld [vmem:[%s7 + $0x4c8] sm:$0xff]
  %v2007 = vld [vmem:[%s7 + $0x4d0] sm:$0xff]
  %v2008 = vld [vmem:[%s7 + $0x4d8] sm:$0xff]
  %v2009 = vld [vmem:[%s7 + $0x4e0] sm:$0xff]
  %v2010 = vld [vmem:[%s7 + $0x4e8] sm:$0xff]
  %v2011 = vld [vmem:[%s7 + $0x4f0] sm:$0xff]
  %v2012 = vld [vmem:[%s7 + $0x4f8] sm:$0xff]
  %2013 = vmatprep.subr.mxu0 0.0
  %2014 = vmatpush1.msra.mxu0 %v1853
  %2015 = vmatprep.subr.mxu0 0.0
  %2016 = vmatpush1.msra.mxu0 %v1854
  %2017 = vmatprep.subr.mxu0 0.0
  %2018 = vmatpush1.msra.mxu0 %v1855
  %2019 = vmatprep.subr.mxu0 0.0
  %2020 = vmatpush1.msra.mxu0 %v1856
  %2021 = vmatprep.subr.mxu0 0.0
  %2022 = vmatpush1.msra.mxu0 %v1857
  %2023 = vmatprep.subr.mxu0 0.0
  %2024 = vmatpush1.msra.mxu0 %v1858
  %2025 = vmatprep.subr.mxu0 0.0
  %2026 = vmatpush1.msra.mxu0 %v1859
  %2027 = vmatprep.subr.mxu0 0.0
  %2028 = vmatpush1.msra.mxu0 %v1860
  %2029 = vmatprep.subr.mxu0 0.0
  %2030 = vmatpush1.msra.mxu0 %v1861
  %2031 = vmatprep.subr.mxu0 0.0
  %2032 = vmatpush1.msra.mxu0 %v1862
  %2033 = vmatprep.subr.mxu0 0.0
  %2034 = vmatpush1.msra.mxu0 %v1863
  %2035 = vmatprep.subr.mxu0 0.0
  %2036 = vmatpush1.msra.mxu0 %v1864
  %2037 = vmatprep.subr.mxu0 0.0
  %2038 = vmatpush1.msra.mxu0 %v1865
  %2039 = vmatprep.subr.mxu0 0.0
  %2040 = vmatpush1.msra.mxu0 %v1866
  %2041 = vmatprep.subr.mxu0 0.0
  %2042 = vmatpush1.msra.mxu0 %v1867
  %2043 = vmatprep.subr.mxu0 0.0
  %2044 = vmatpush1.msra.mxu0 %v1868
  %2045 = vmatprep.subr.mxu0 0.0
  %2046 = vmatpush1.msra.mxu0 %v1869
  %2047 = vmatprep.subr.mxu0 0.0
  %2048 = vmatpush1.msra.mxu0 %v1870
  %2049 = vmatprep.subr.mxu0 0.0
  %2050 = vmatpush1.msra.mxu0 %v1871
  %2051 = vmatprep.subr.mxu0 0.0
  %2052 = vmatpush1.msra.mxu0 %v1872
  %2053 = vmatprep.subr.mxu0 0.0
  %2054 = vmatpush1.msra.mxu0 %v1873
  %2055 = vmatprep.subr.mxu0 0.0
  %2056 = vmatpush1.msra.mxu0 %v1874
  %2057 = vmatprep.subr.mxu0 0.0
  %2058 = vmatpush1.msra.mxu0 %v1875
  %2059 = vmatprep.subr.mxu0 0.0
  %2060 = vmatpush1.msra.mxu0 %v1876
  %2061 = vmatprep.subr.mxu0 0.0
  %2062 = vmatpush1.msra.mxu0 %v1877
  %2063 = vmatprep.subr.mxu0 0.0
  %2064 = vmatpush1.msra.mxu0 %v1878
  %2065 = vmatprep.subr.mxu0 0.0
  %2066 = vmatpush1.msra.mxu0 %v1879
  %2067 = vmatprep.subr.mxu0 0.0
  %2068 = vmatpush1.msra.mxu0 %v1880
  %2069 = vmatprep.subr.mxu0 0.0
  %2070 = vmatpush1.msra.mxu0 %v1881
  %2071 = vmatprep.subr.mxu0 0.0
  %2072 = vmatpush1.msra.mxu0 %v1882
  %2073 = vmatprep.subr.mxu0 0.0
  %2074 = vmatpush1.msra.mxu0 %v1883
  %2075 = vmatprep.subr.mxu0 0.0
  %2076 = vmatpush1.msra.mxu0 %v1884
  %2077 = vmatprep.mubr.f32.mxu0 %v1844
  %2078 = vmatmul.mubr.f32.gmra.mrb[0].mxu0 %v1843
  %v2079 = vpop.f32.mrb[0].mxu0
  %v2080 = vadd.f32 0.0, %v2079
  %v2081 = vpop.f32.mrb[0].mxu0
  %2082 = vdwg.mxu0
  %2083 = vmatprep.subr.mxu0 0.0
  %2084 = vmatpush1.msra.mxu0 %v1885
  %2085 = vmatprep.subr.mxu0 0.0
  %2086 = vmatpush1.msra.mxu0 %v1886
  %2087 = vmatprep.subr.mxu0 0.0
  %2088 = vmatpush1.msra.mxu0 %v1887
  %2089 = vmatprep.subr.mxu0 0.0
  %2090 = vmatpush1.msra.mxu0 %v1888
  %2091 = vmatprep.subr.mxu0 0.0
  %2092 = vmatpush1.msra.mxu0 %v1889
  %2093 = vmatprep.subr.mxu0 0.0
  %2094 = vmatpush1.msra.mxu0 %v1890
  %2095 = vmatprep.subr.mxu0 0.0
  %2096 = vmatpush1.msra.mxu0 %v1891
  %2097 = vmatprep.subr.mxu0 0.0
  %2098 = vmatpush1.msra.mxu0 %v1892
  %2099 = vmatprep.subr.mxu0 0.0
  %2100 = vmatpush1.msra.mxu0 %v1893
  %2101 = vmatprep.subr.mxu0 0.0
  %2102 = vmatpush1.msra.mxu0 %v1894
  %2103 = vmatprep.subr.mxu0 0.0
  %2104 = vmatpush1.msra.mxu0 %v1895
  %2105 = vmatprep.subr.mxu0 0.0
  %2106 = vmatpush1.msra.mxu0 %v1896
  %2107 = vmatprep.subr.mxu0 0.0
  %2108 = vmatpush1.msra.mxu0 %v1897
  %2109 = vmatprep.subr.mxu0 0.0
  %2110 = vmatpush1.msra.mxu0 %v1898
  %2111 = vmatprep.subr.mxu0 0.0
  %2112 = vmatpush1.msra.mxu0 %v1899
  %2113 = vmatprep.subr.mxu0 0.0
  %2114 = vmatpush1.msra.mxu0 %v1900
  %2115 = vmatprep.subr.mxu0 0.0
  %2116 = vmatpush1.msra.mxu0 %v1901
  %2117 = vmatprep.subr.mxu0 0.0
  %2118 = vmatpush1.msra.mxu0 %v1902
  %2119 = vmatprep.subr.mxu0 0.0
  %2120 = vmatpush1.msra.mxu0 %v1903
  %2121 = vmatprep.subr.mxu0 0.0
  %2122 = vmatpush1.msra.mxu0 %v1904
  %2123 = vmatprep.subr.mxu0 0.0
  %2124 = vmatpush1.msra.mxu0 %v1905
  %2125 = vmatprep.subr.mxu0 0.0
  %2126 = vmatpush1.msra.mxu0 %v1906
  %2127 = vmatprep.subr.mxu0 0.0
  %2128 = vmatpush1.msra.mxu0 %v1907
  %2129 = vmatprep.subr.mxu0 0.0
  %2130 = vmatpush1.msra.mxu0 %v1908
  %2131 = vmatprep.subr.mxu0 0.0
  %2132 = vmatpush1.msra.mxu0 %v1909
  %2133 = vmatprep.subr.mxu0 0.0
  %2134 = vmatpush1.msra.mxu0 %v1910
  %2135 = vmatprep.subr.mxu0 0.0
  %2136 = vmatpush1.msra.mxu0 %v1911
  %2137 = vmatprep.subr.mxu0 0.0
  %2138 = vmatpush1.msra.mxu0 %v1912
  %2139 = vmatprep.subr.mxu0 0.0
  %2140 = vmatpush1.msra.mxu0 %v1913
  %2141 = vmatprep.subr.mxu0 0.0
  %2142 = vmatpush1.msra.mxu0 %v1914
  %2143 = vmatprep.subr.mxu0 0.0
  %2144 = vmatpush1.msra.mxu0 %v1915
  %2145 = vmatprep.subr.mxu0 0.0
  %2146 = vmatpush1.msra.mxu0 %v1916
  %2147 = vmatprep.mubr.f32.mxu0 %v1846
  %2148 = vmatmul.mubr.f32.gmra.mrb[0].mxu0 %v1845
  %v2149 = vpop.f32.mrb[0].mxu0
  %v2150 = vadd.f32 %v2080, %v2149
  %v2151 = vpop.f32.mrb[0].mxu0
  %2152 = vdwg.mxu0
  %2153 = vmatprep.subr.mxu0 0.0
  %2154 = vmatpush1.msra.mxu0 %v1917
  %2155 = vmatprep.subr.mxu0 0.0
  %2156 = vmatpush1.msra.mxu0 %v1918
  %2157 = vmatprep.subr.mxu0 0.0
  %2158 = vmatpush1.msra.mxu0 %v1919
  %2159 = vmatprep.subr.mxu0 0.0
  %2160 = vmatpush1.msra.mxu0 %v1920
  %2161 = vmatprep.subr.mxu0 0.0
  %2162 = vmatpush1.msra.mxu0 %v1921
  %2163 = vmatprep.subr.mxu0 0.0
  %2164 = vmatpush1.msra.mxu0 %v1922
  %2165 = vmatprep.subr.mxu0 0.0
  %2166 = vmatpush1.msra.mxu0 %v1923
  %2167 = vmatprep.subr.mxu0 0.0
  %2168 = vmatpush1.msra.mxu0 %v1924
  %2169 = vmatprep.subr.mxu0 0.0
  %2170 = vmatpush1.msra.mxu0 %v1925
  %2171 = vmatprep.subr.mxu0 0.0
  %2172 = vmatpush1.msra.mxu0 %v1926
  %2173 = vmatprep.subr.mxu0 0.0
  %2174 = vmatpush1.msra.mxu0 %v1927
  %2175 = vmatprep.subr.mxu0 0.0
  %2176 = vmatpush1.msra.mxu0 %v1928
  %2177 = vmatprep.subr.mxu0 0.0
  %2178 = vmatpush1.msra.mxu0 %v1929
  %2179 = vmatprep.subr.mxu0 0.0
  %2180 = vmatpush1.msra.mxu0 %v1930
  %2181 = vmatprep.subr.mxu0 0.0
  %2182 = vmatpush1.msra.mxu0 %v1931
  %2183 = vmatprep.subr.mxu0 0.0
  %2184 = vmatpush1.msra.mxu0 %v1932
  %2185 = vmatprep.subr.mxu0 0.0
  %2186 = vmatpush1.msra.mxu0 %v1933
  %2187 = vmatprep.subr.mxu0 0.0
  %2188 = vmatpush1.msra.mxu0 %v1934
  %2189 = vmatprep.subr.mxu0 0.0
  %2190 = vmatpush1.msra.mxu0 %v1935
  %2191 = vmatprep.subr.mxu0 0.0
  %2192 = vmatpush1.msra.mxu0 %v1936
  %2193 = vmatprep.subr.mxu0 0.0
  %2194 = vmatpush1.msra.mxu0 %v1937
  %2195 = vmatprep.subr.mxu0 0.0
  %2196 = vmatpush1.msra.mxu0 %v1938
  %2197 = vmatprep.subr.mxu0 0.0
  %2198 = vmatpush1.msra.mxu0 %v1939
  %2199 = vmatprep.subr.mxu0 0.0
  %2200 = vmatpush1.msra.mxu0 %v1940
  %2201 = vmatprep.subr.mxu0 0.0
  %2202 = vmatpush1.msra.mxu0 %v1941
  %2203 = vmatprep.subr.mxu0 0.0
  %2204 = vmatpush1.msra.mxu0 %v1942
  %2205 = vmatprep.subr.mxu0 0.0
  %2206 = vmatpush1.msra.mxu0 %v1943
  %2207 = vmatprep.subr.mxu0 0.0
  %2208 = vmatpush1.msra.mxu0 %v1944
  %2209 = vmatprep.subr.mxu0 0.0
  %2210 = vmatpush1.msra.mxu0 %v1945
  %2211 = vmatprep.subr.mxu0 0.0
  %2212 = vmatpush1.msra.mxu0 %v1946
  %2213 = vmatprep.subr.mxu0 0.0
  %2214 = vmatpush1.msra.mxu0 %v1947
  %2215 = vmatprep.subr.mxu0 0.0
  %2216 = vmatpush1.msra.mxu0 %v1948
  %2217 = vmatprep.mubr.f32.mxu0 %v1848
  %2218 = vmatmul.mubr.f32.gmra.mrb[0].mxu0 %v1847
  %v2219 = vpop.f32.mrb[0].mxu0
  %v2220 = vadd.f32 %v2150, %v2219
  %v2221 = vpop.f32.mrb[0].mxu0
  %2222 = vdwg.mxu0
  %2223 = vmatprep.subr.mxu0 0.0
  %2224 = vmatpush1.msra.mxu0 %v1949
  %2225 = vmatprep.subr.mxu0 0.0
  %2226 = vmatpush1.msra.mxu0 %v1950
  %2227 = vmatprep.subr.mxu0 0.0
  %2228 = vmatpush1.msra.mxu0 %v1951
  %2229 = vmatprep.subr.mxu0 0.0
  %2230 = vmatpush1.msra.mxu0 %v1952
  %2231 = vmatprep.subr.mxu0 0.0
  %2232 = vmatpush1.msra.mxu0 %v1953
  %2233 = vmatprep.subr.mxu0 0.0
  %2234 = vmatpush1.msra.mxu0 %v1954
  %2235 = vmatprep.subr.mxu0 0.0
  %2236 = vmatpush1.msra.mxu0 %v1955
  %2237 = vmatprep.subr.mxu0 0.0
  %2238 = vmatpush1.msra.mxu0 %v1956
  %2239 = vmatprep.subr.mxu0 0.0
  %2240 = vmatpush1.msra.mxu0 %v1957
  %2241 = vmatprep.subr.mxu0 0.0
  %2242 = vmatpush1.msra.mxu0 %v1958
  %2243 = vmatprep.subr.mxu0 0.0
  %2244 = vmatpush1.msra.mxu0 %v1959
  %2245 = vmatprep.subr.mxu0 0.0
  %2246 = vmatpush1.msra.mxu0 %v1960
  %2247 = vmatprep.subr.mxu0 0.0
  %2248 = vmatpush1.msra.mxu0 %v1961
  %2249 = vmatprep.subr.mxu0 0.0
  %2250 = vmatpush1.msra.mxu0 %v1962
  %2251 = vmatprep.subr.mxu0 0.0
  %2252 = vmatpush1.msra.mxu0 %v1963
  %2253 = vmatprep.subr.mxu0 0.0
  %2254 = vmatpush1.msra.mxu0 %v1964
  %2255 = vmatprep.subr.mxu0 0.0
  %2256 = vmatpush1.msra.mxu0 %v1965
  %2257 = vmatprep.subr.mxu0 0.0
  %2258 = vmatpush1.msra.mxu0 %v1966
  %2259 = vmatprep.subr.mxu0 0.0
  %2260 = vmatpush1.msra.mxu0 %v1967
  %2261 = vmatprep.subr.mxu0 0.0
  %2262 = vmatpush1.msra.mxu0 %v1968
  %2263 = vmatprep.subr.mxu0 0.0
  %2264 = vmatpush1.msra.mxu0 %v1969
  %2265 = vmatprep.subr.mxu0 0.0
  %2266 = vmatpush1.msra.mxu0 %v1970
  %2267 = vmatprep.subr.mxu0 0.0
  %2268 = vmatpush1.msra.mxu0 %v1971
  %2269 = vmatprep.subr.mxu0 0.0
  %2270 = vmatpush1.msra.mxu0 %v1972
  %2271 = vmatprep.subr.mxu0 0.0
  %2272 = vmatpush1.msra.mxu0 %v1973
  %2273 = vmatprep.subr.mxu0 0.0
  %2274 = vmatpush1.msra.mxu0 %v1974
  %2275 = vmatprep.subr.mxu0 0.0
  %2276 = vmatpush1.msra.mxu0 %v1975
  %2277 = vmatprep.subr.mxu0 0.0
  %2278 = vmatpush1.msra.mxu0 %v1976
  %2279 = vmatprep.subr.mxu0 0.0
  %2280 = vmatpush1.msra.mxu0 %v1977
  %2281 = vmatprep.subr.mxu0 0.0
  %2282 = vmatpush1.msra.mxu0 %v1978
  %2283 = vmatprep.subr.mxu0 0.0
  %2284 = vmatpush1.msra.mxu0 %v1979
  %2285 = vmatprep.subr.mxu0 0.0
  %2286 = vmatpush1.msra.mxu0 %v1980
  %2287 = vmatprep.mubr.f32.mxu0 %v1850
  %2288 = vmatmul.mubr.f32.gmra.mrb[0].mxu0 %v1849
  %v2289 = vpop.f32.mrb[0].mxu0
  %v2290 = vadd.f32 %v2220, %v2289
  %v2291 = vpop.f32.mrb[0].mxu0
  %2292 = vdwg.mxu0
  %2293 = vmatprep.subr.mxu0 0.0
  %2294 = vmatpush1.msra.mxu0 %v1981
  %2295 = vmatprep.subr.mxu0 0.0
  %2296 = vmatpush1.msra.mxu0 %v1982
  %2297 = vmatprep.subr.mxu0 0.0
  %2298 = vmatpush1.msra.mxu0 %v1983
  %2299 = vmatprep.subr.mxu0 0.0
  %2300 = vmatpush1.msra.mxu0 %v1984
  %2301 = vmatprep.subr.mxu0 0.0
  %2302 = vmatpush1.msra.mxu0 %v1985
  %2303 = vmatprep.subr.mxu0 0.0
  %2304 = vmatpush1.msra.mxu0 %v1986
  %2305 = vmatprep.subr.mxu0 0.0
  %2306 = vmatpush1.msra.mxu0 %v1987
  %2307 = vmatprep.subr.mxu0 0.0
  %2308 = vmatpush1.msra.mxu0 %v1988
  %2309 = vmatprep.subr.mxu0 0.0
  %2310 = vmatpush1.msra.mxu0 %v1989
  %2311 = vmatprep.subr.mxu0 0.0
  %2312 = vmatpush1.msra.mxu0 %v1990
  %2313 = vmatprep.subr.mxu0 0.0
  %2314 = vmatpush1.msra.mxu0 %v1991
  %2315 = vmatprep.subr.mxu0 0.0
  %2316 = vmatpush1.msra.mxu0 %v1992
  %2317 = vmatprep.subr.mxu0 0.0
  %2318 = vmatpush1.msra.mxu0 %v1993
  %2319 = vmatprep.subr.mxu0 0.0
  %2320 = vmatpush1.msra.mxu0 %v1994
  %2321 = vmatprep.subr.mxu0 0.0
  %2322 = vmatpush1.msra.mxu0 %v1995
  %2323 = vmatprep.subr.mxu0 0.0
  %2324 = vmatpush1.msra.mxu0 %v1996
  %2325 = vmatprep.subr.mxu0 0.0
  %2326 = vmatpush1.msra.mxu0 %v1997
  %2327 = vmatprep.subr.mxu0 0.0
  %2328 = vmatpush1.msra.mxu0 %v1998
  %2329 = vmatprep.subr.mxu0 0.0
  %2330 = vmatpush1.msra.mxu0 %v1999
  %2331 = vmatprep.subr.mxu0 0.0
  %2332 = vmatpush1.msra.mxu0 %v2000
  %2333 = vmatprep.subr.mxu0 0.0
  %2334 = vmatpush1.msra.mxu0 %v2001
  %2335 = vmatprep.subr.mxu0 0.0
  %2336 = vmatpush1.msra.mxu0 %v2002
  %2337 = vmatprep.subr.mxu0 0.0
  %2338 = vmatpush1.msra.mxu0 %v2003
  %2339 = vmatprep.subr.mxu0 0.0
  %2340 = vmatpush1.msra.mxu0 %v2004
  %2341 = vmatprep.subr.mxu0 0.0
  %2342 = vmatpush1.msra.mxu0 %v2005
  %2343 = vmatprep.subr.mxu0 0.0
  %2344 = vmatpush1.msra.mxu0 %v2006
  %2345 = vmatprep.subr.mxu0 0.0
  %2346 = vmatpush1.msra.mxu0 %v2007
  %2347 = vmatprep.subr.mxu0 0.0
  %2348 = vmatpush1.msra.mxu0 %v2008
  %2349 = vmatprep.subr.mxu0 0.0
  %2350 = vmatpush1.msra.mxu0 %v2009
  %2351 = vmatprep.subr.mxu0 0.0
  %2352 = vmatpush1.msra.mxu0 %v2010
  %2353 = vmatprep.subr.mxu0 0.0
  %2354 = vmatpush1.msra.mxu0 %v2011
  %2355 = vmatprep.subr.mxu0 0.0
  %2356 = vmatpush1.msra.mxu0 %v2012
  %2357 = vmatprep.mubr.f32.mxu0 %v1852
  %2358 = vmatmul.mubr.f32.gmra.mrb[0].mxu0 %v1851
  %v2359 = vpop.f32.mrb[0].mxu0
  %v2360 = vadd.f32 %v2290, %v2359
  %v2361 = vpop.f32.mrb[0].mxu0
  %2362 = vdwg.mxu0
  %vm2363 = vcmask 64512
  %v2364 = vsel %vm2363, %v2360, 0.0
  %v2365 = vrot.slane %v2364, 4
  %v2366 = vadd.f32 %v2364, %v2365
  %v2367 = vrot.slane %v2366, 2
  %v2368 = vadd.f32 %v2366, %v2367
  %v2369 = vrot.slane %v2368, 1
  %v2370 = vadd.f32 %v2368, %v2369
  %s2371 = sld [smem:[#allocation2]]
  %v2372 = vstv %s2371
  %v2373 = vadd.f32 %v2370, %v2372
  %vm2374 = vcmask 57344
  %2375 = vst.msk [vmem:[%s9] sm:$0x1] %vm2374, %v2373
  // Predicated region
  $region38: #{resnet_forward.1} parent=0 // pred_check
    _
  $region39: #{resnet_forward.1} parent=0 // pred_check_branch
    %2377 = sbr.rel (0) target = $region41
  $region40: #{resnet_forward.1} parent=0 // pred_region
    _
  $region41: #{resnet_forward.1} parent=0 // pred_fallthru
    _
  // Predicated region
  $region42: #{resnet_forward.1} parent=0 // pred_check
    _
  $region43: #{resnet_forward.1} parent=0 // pred_check_branch
    %2379 = sbr.rel (0) target = $region45
  $region44: #{resnet_forward.1} parent=0 // pred_region
    _
  $region45: #{resnet_forward.1} parent=0 // pred_fallthru
    _

</llo_original>
